<compile_context>
chip_gen: v7x
topology: tpu7x:2x2x1
jax: 0.10.0
libtpu: 0.0.40
codegen_flags: <defaults>
</compile_context>

<pallas_src>
import functools
import math

import jax
import jax.numpy as jnp
from jax.experimental import pallas as pl
from jax.experimental.pallas import tpu as pltpu


def _gelu(x):
    # PreSumm gelu (tanh approximation)
    return 0.5 * x * (1.0 + jnp.tanh(
        math.sqrt(2.0 / math.pi) * (x + 0.044715 * x * x * x)))


def _layernorm(x, gamma, beta, eps=1e-6):
    # eps=1e-6 matches the module spec (nn.LayerNorm(d_model, eps=1e-06)).
    mu = jnp.mean(x, axis=-1, keepdims=True)
    var = jnp.mean((x - mu) ** 2, axis=-1, keepdims=True)
    return (x - mu) * jax.lax.rsqrt(var + eps) * gamma + beta


def encoder_layer_kernel(
    x_tile_ref, x_full_ref, mask_ref,
    wq_ref, bq_ref, wkv_ref, bkv_ref, wo_ref, bo_ref,
    ln1_g_ref, ln1_b_ref,
    w1_ref, b1_ref, w2_ref, b2_ref,
    ln2_g_ref, ln2_b_ref,
    out_ref,
    q_scr, kv_scr, ctx_scr,
    *, heads, iter_nonzero,
):
    f32 = jnp.float32
    bf16 = jnp.bfloat16

    x_t = x_tile_ref[0].astype(f32)          # (TQ, D) query rows + residual
    x_f = x_full_ref[0].astype(f32)          # (S, D)  key/value source
    TQ, D = x_t.shape
    S = x_f.shape[0]
    dh = D // heads

    # --- pre-attention layernorm (skipped when iter == 0; static branch) ---
    if iter_nonzero:
        xn_t = _layernorm(x_t, ln1_g_ref[...], ln1_b_ref[...])
        xn_f = _layernorm(x_f, ln1_g_ref[...], ln1_b_ref[...])
    else:
        xn_t = x_t
        xn_f = x_f

    # --- projections (bf16 MXU operands, f32 accumulation) ---
    # 1/sqrt(dh) is already folded into wq/bq host-side; K|V are fused.
    q = jnp.dot(xn_t.astype(bf16), wq_ref[...],
                preferred_element_type=f32) + bq_ref[...]          # (TQ, D)
    kv = jnp.dot(xn_f.astype(bf16), wkv_ref[...],
                 preferred_element_type=f32) + bkv_ref[...]        # (S, 2D)
    q_scr[...] = q.astype(bf16)
    kv_scr[...] = kv.astype(bf16)                                  # [K | V]

    # --- additive key mask, computed once and reused by every head ---
    key_bias = jnp.broadcast_to(
        jnp.where(mask_ref[0] > 0, jnp.float32(-1e18), jnp.float32(0.0)),
        (TQ, S))                                                   # (TQ, S) f32

    trans_b = (((1,), (1,)), ((), ()))  # contract last dims (q @ k^T), no batch

    # --- per-head attention; head slices are static loads from VMEM scratch,
    #     each head's context is stored into its scratch slice (no concat). ---
    # TODO(synk): with dh < 128 the score contraction underfills the MXU depth;
    # packing 2+ heads per MXU pass (block-diagonal) would feed it better.
    for h in range(heads):
        qh = q_scr[:, h * dh:(h + 1) * dh]                # (TQ, dh) bf16
        kh = kv_scr[:, h * dh:(h + 1) * dh]               # (S, dh)  bf16
        vh = kv_scr[:, D + h * dh:D + (h + 1) * dh]       # (S, dh)  bf16

        s = jax.lax.dot_general(qh, kh, trans_b,
                                preferred_element_type=f32)        # (TQ, S) f32
        s = s + key_bias
        m = jnp.max(s, axis=-1, keepdims=True)
        p = jnp.exp(s - m)
        p = p * pl.reciprocal(jnp.sum(p, axis=-1, keepdims=True), approx=True)

        ctx_scr[:, h * dh:(h + 1) * dh] = jnp.dot(
            p.astype(bf16), vh, preferred_element_type=f32).astype(bf16)

    # --- output projection + residual (dropout == identity in eval mode) ---
    attn = jnp.dot(ctx_scr[...], wo_ref[...],
                   preferred_element_type=f32) + bo_ref[...]
    out1 = attn + x_t

    # --- position-wise feed-forward (own pre-LN + residual) ---
    on = _layernorm(out1, ln2_g_ref[...], ln2_b_ref[...])
    inter = _gelu(jnp.dot(on.astype(bf16), w1_ref[...],
                          preferred_element_type=f32) + b1_ref[...])
    ffn = jnp.dot(inter.astype(bf16), w2_ref[...],
                  preferred_element_type=f32) + b2_ref[...]

    out_ref[0] = (ffn + out1).astype(out_ref.dtype)


def transformer_encoder_layer(it, inputs, mask, params, heads, *, tq=None):
    """inputs: [B, S, D] f32; mask: [B, S] (nonzero == masked key position)."""
    B, S, D = inputs.shape
    d_ff = params["w1"].shape[1]
    assert D % heads == 0
    dh = D // heads

    if tq is None:
        tq = S
    assert S % tq == 0 and (tq == S or tq % 8 == 0), "query tile must align"
    n_t = S // tq

    # ---- host-side weight prep: bf16 storage, scale folding, K|V fusion ----
    f32, bf16 = jnp.float32, jnp.bfloat16
    scale = 1.0 / math.sqrt(dh)
    wq = (params["wq"] * scale).astype(bf16)
    bq = (params["bq"] * scale).astype(f32)
    wkv = jnp.concatenate([params["wk"], params["wv"]], axis=1).astype(bf16)
    bkv = jnp.concatenate([params["bk"], params["bv"]], axis=1).astype(f32)
    wo = params["wo"].astype(bf16)
    bo = params["bo"].astype(f32)
    w1 = params["w1"].astype(bf16)
    b1 = params["b1"].astype(f32)
    w2 = params["w2"].astype(bf16)
    b2 = params["b2"].astype(f32)

    mask3 = mask.reshape(B, 1, S).astype(f32)   # == mask.unsqueeze(1)

    rep = lambda shape: pl.BlockSpec(shape, lambda b, t: (0, 0))  # replicated
    in_specs = [
        pl.BlockSpec((1, tq, D), lambda b, t: (b, t, 0)),   # x (query tile)
        pl.BlockSpec((1, S, D), lambda b, t: (b, 0, 0)),    # x (full, K/V src)
        pl.BlockSpec((1, 1, S), lambda b, t: (b, 0, 0)),    # mask
        rep((D, D)), rep((1, D)),                           # Wq (pre-scaled), bq
        rep((D, 2 * D)), rep((1, 2 * D)),                   # [Wk|Wv], [bk|bv]
        rep((D, D)), rep((1, D)),                           # Wo, bo
        rep((1, D)), rep((1, D)),                           # ln1 gamma, beta
        rep((D, d_ff)), rep((1, d_ff)),                     # W1, b1
        rep((d_ff, D)), rep((1, D)),                        # W2, b2
        rep((1, D)), rep((1, D)),                           # ln2 gamma, beta
    ]

    kernel = functools.partial(encoder_layer_kernel, heads=heads,
                               iter_nonzero=(it != 0))

    return pl.pallas_call(
        kernel,
        out_shape=jax.ShapeDtypeStruct((B, S, D), inputs.dtype),
        grid_spec=pltpu.PrefetchScalarGridSpec(
            num_scalar_prefetch=0,
            grid=(B, n_t),
            in_specs=in_specs,
            out_specs=pl.BlockSpec((1, tq, D), lambda b, t: (b, t, 0)),
            scratch_shapes=[
                pltpu.VMEM((tq, D), jnp.bfloat16),        # q (scaled)
                pltpu.VMEM((S, 2 * D), jnp.bfloat16),     # [K | V]
                pltpu.VMEM((tq, D), jnp.bfloat16),        # per-head context
            ],
        ),
        compiler_params=pltpu.CompilerParams(
            dimension_semantics=("parallel", "parallel"),
            vmem_limit_bytes=64 * 1024 * 1024,
        ),
    )(
        inputs, inputs, mask3,
        wq, bq, wkv, bkv, wo, bo,
        params["ln1_g"], params["ln1_b"],
        w1, b1, w2, b2,
        params["ln2_g"], params["ln2_b"],
    )


def reference(it, inputs, mask, params, heads):
    """Pure-JAX f32 reference mirroring the PyTorch forward (eval mode).

    Weights are rounded through bf16 (as the kernel stores them) so the
    comparison only measures activation-precision differences.
    """
    B, S, D = inputs.shape
    dh = D // heads
    r = lambda w: w.astype(jnp.bfloat16).astype(jnp.float32)
    x = inputs
    xn = _layernorm(x, params["ln1_g"], params["ln1_b"]) if it != 0 else x
    q = xn @ r(params["wq"]) + params["bq"]
    k = xn @ r(params["wk"]) + params["bk"]
    v = xn @ r(params["wv"]) + params["bv"]
    q = q.reshape(B, S, heads, dh).transpose(0, 2, 1, 3) / math.sqrt(dh)
    k = k.reshape(B, S, heads, dh).transpose(0, 2, 1, 3)
    v = v.reshape(B, S, heads, dh).transpose(0, 2, 1, 3)
    s = jnp.einsum("bhqd,bhkd->bhqk", q, k)
    s = jnp.where(mask[:, None, None, :] > 0, -1e18, s)
    p = jax.nn.softmax(s, axis=-1)
    ctx = jnp.einsum("bhqk,bhkd->bhqd", p, v)
    ctx = ctx.transpose(0, 2, 1, 3).reshape(B, S, D)
    attn = ctx @ r(params["wo"]) + params["bo"]
    out = attn + x
    on = _layernorm(out, params["ln2_g"], params["ln2_b"])
    inter = _gelu(on @ r(params["w1"]) + params["b1"])
    return inter @ r(params["w2"]) + params["b2"] + out


if __name__ == "__main__":
    B, S, D, H, d_ff = 2, 128, 128, 4, 256
    TQ = 64                                  # 2 query tiles per batch element

    key = jax.random.PRNGKey(0)
    ks = jax.random.split(key, 10)

    def w(k, shape, scale=0.02):
        return (scale * jax.random.normal(k, shape)).astype(jnp.float32)

    params = {
        "wq": w(ks[0], (D, D)), "bq": jnp.zeros((1, D), jnp.float32),
        "wk": w(ks[1], (D, D)), "bk": jnp.zeros((1, D), jnp.float32),
        "wv": w(ks[2], (D, D)), "bv": jnp.zeros((1, D), jnp.float32),
        "wo": w(ks[3], (D, D)), "bo": jnp.zeros((1, D), jnp.float32),
        "ln1_g": jnp.ones((1, D), jnp.float32),
        "ln1_b": jnp.zeros((1, D), jnp.float32),
        "w1": w(ks[4], (D, d_ff)), "b1": jnp.zeros((1, d_ff), jnp.float32),
        "w2": w(ks[5], (d_ff, D)), "b2": jnp.zeros((1, D), jnp.float32),
        "ln2_g": jnp.ones((1, D), jnp.float32),
        "ln2_b": jnp.zeros((1, D), jnp.float32),
    }

    inputs = jax.random.normal(ks[6], (B, S, D), jnp.float32)
    # mask: nonzero == masked key position; batch 1 has its last 16 keys padded.
    mask = jnp.zeros((B, S), jnp.float32).at[1, -16:].set(1.0)

    it = 1  # exercise the pre-attention layer_norm path (iter != 0)

    out = transformer_encoder_layer(it, inputs, mask, params, H, tq=TQ)
    out = jax.block_until_ready(out)

    ref = reference(it, inputs, mask, params, H)
    assert out.shape == (B, S, D)
    assert jnp.allclose(out, ref, rtol=2e-2, atol=2e-2), "mismatch vs reference"

    print("KERNEL_OK")
</pallas_src>

<mosaic_0001>
module attributes {stable_mosaic.version = 11 : i64} {
  func.func @encoder_layer_kernel(%arg0: i32, %arg1: i32, %arg2: memref<1x64x128xf32, #tpu.memory_space<vmem>>, %arg3: memref<1x128x128xf32, #tpu.memory_space<vmem>>, %arg4: memref<1x1x128xf32, #tpu.memory_space<vmem>>, %arg5: memref<128x128xbf16, #tpu.memory_space<vmem>>, %arg6: memref<1x128xf32, #tpu.memory_space<vmem>>, %arg7: memref<128x256xbf16, #tpu.memory_space<vmem>>, %arg8: memref<1x256xf32, #tpu.memory_space<vmem>>, %arg9: memref<128x128xbf16, #tpu.memory_space<vmem>>, %arg10: memref<1x128xf32, #tpu.memory_space<vmem>>, %arg11: memref<1x128xf32, #tpu.memory_space<vmem>>, %arg12: memref<1x128xf32, #tpu.memory_space<vmem>>, %arg13: memref<128x256xbf16, #tpu.memory_space<vmem>>, %arg14: memref<1x256xf32, #tpu.memory_space<vmem>>, %arg15: memref<256x128xbf16, #tpu.memory_space<vmem>>, %arg16: memref<1x128xf32, #tpu.memory_space<vmem>>, %arg17: memref<1x128xf32, #tpu.memory_space<vmem>>, %arg18: memref<1x128xf32, #tpu.memory_space<vmem>>, %arg19: memref<1x64x128xf32, #tpu.memory_space<vmem>>, %arg20: memref<64x128xbf16, #tpu.memory_space<vmem>>, %arg21: memref<128x256xbf16, #tpu.memory_space<vmem>>, %arg22: memref<64x128xbf16, #tpu.memory_space<vmem>>) attributes {dimension_semantics = [#tpu.dimension_semantics<parallel>, #tpu.dimension_semantics<parallel>], iteration_bounds = array<i64: 2, 2>, scalar_prefetch = 0 : i64, scratch_operands = 3 : i64, tpu.core_type = #tpu.core_type<tc>, window_params = [{transform_indices = @transform_0, window_bounds = array<i64: 1, 64, 128>}, {transform_indices = @transform_1, window_bounds = array<i64: 1, 128, 128>}, {transform_indices = @transform_2, window_bounds = array<i64: 1, 1, 128>}, {pipeline_mode = #tpu.pipeline_mode<synchronous>, transform_indices = @transform_3, window_bounds = array<i64: 128, 128>}, {pipeline_mode = #tpu.pipeline_mode<synchronous>, transform_indices = @transform_4, window_bounds = array<i64: 1, 128>}, {pipeline_mode = #tpu.pipeline_mode<synchronous>, transform_indices = @transform_5, window_bounds = array<i64: 128, 256>}, {pipeline_mode = #tpu.pipeline_mode<synchronous>, transform_indices = @transform_6, window_bounds = array<i64: 1, 256>}, {pipeline_mode = #tpu.pipeline_mode<synchronous>, transform_indices = @transform_7, window_bounds = array<i64: 128, 128>}, {pipeline_mode = #tpu.pipeline_mode<synchronous>, transform_indices = @transform_8, window_bounds = array<i64: 1, 128>}, {pipeline_mode = #tpu.pipeline_mode<synchronous>, transform_indices = @transform_9, window_bounds = array<i64: 1, 128>}, {pipeline_mode = #tpu.pipeline_mode<synchronous>, transform_indices = @transform_10, window_bounds = array<i64: 1, 128>}, {pipeline_mode = #tpu.pipeline_mode<synchronous>, transform_indices = @transform_11, window_bounds = array<i64: 128, 256>}, {pipeline_mode = #tpu.pipeline_mode<synchronous>, transform_indices = @transform_12, window_bounds = array<i64: 1, 256>}, {pipeline_mode = #tpu.pipeline_mode<synchronous>, transform_indices = @transform_13, window_bounds = array<i64: 256, 128>}, {pipeline_mode = #tpu.pipeline_mode<synchronous>, transform_indices = @transform_14, window_bounds = array<i64: 1, 128>}, {pipeline_mode = #tpu.pipeline_mode<synchronous>, transform_indices = @transform_15, window_bounds = array<i64: 1, 128>}, {pipeline_mode = #tpu.pipeline_mode<synchronous>, transform_indices = @transform_16, window_bounds = array<i64: 1, 128>}, {transform_indices = @transform_17, window_bounds = array<i64: 1, 64, 128>}]} {
    %c0 = arith.constant 0 : index
    %c0_0 = arith.constant 0 : index
    %c0_1 = arith.constant 0 : index
    %0 = vector.load %arg2[%c0, %c0_0, %c0_1] : memref<1x64x128xf32, #tpu.memory_space<vmem>>, vector<1x64x128xf32>
    %1 = vector.shape_cast %0 : vector<1x64x128xf32> to vector<64x128xf32>
    %c0_2 = arith.constant 0 : index
    %c0_3 = arith.constant 0 : index
    %c0_4 = arith.constant 0 : index
    %2 = vector.load %arg3[%c0_2, %c0_3, %c0_4] : memref<1x128x128xf32, #tpu.memory_space<vmem>>, vector<1x128x128xf32>
    %3 = vector.shape_cast %2 : vector<1x128x128xf32> to vector<128x128xf32>
    %c0_5 = arith.constant 0 : index
    %c0_6 = arith.constant 0 : index
    %4 = vector.load %arg11[%c0_5, %c0_6] : memref<1x128xf32, #tpu.memory_space<vmem>>, vector<1x128xf32>
    %c0_7 = arith.constant 0 : index
    %c0_8 = arith.constant 0 : index
    %5 = vector.load %arg12[%c0_7, %c0_8] : memref<1x128xf32, #tpu.memory_space<vmem>>, vector<1x128xf32>
    %cst = arith.constant dense<0.000000e+00> : vector<64xf32>
    %6 = vector.multi_reduction <add>, %1, %cst [1] : vector<64x128xf32> to vector<64xf32>
    %7 = vector.shape_cast %6 : vector<64xf32> to vector<64x1xf32>
    %cst_9 = arith.constant 1.280000e+02 : f32
    %8 = vector.broadcast %cst_9 : f32 to vector<64x1xf32>
    %9 = arith.divf %7, %8 : vector<64x1xf32>
    %10 = vector.broadcast %9 : vector<64x1xf32> to vector<64x128xf32>
    %11 = arith.subf %1, %10 : vector<64x128xf32>
    %12 = arith.mulf %11, %11 : vector<64x128xf32>
    %cst_10 = arith.constant dense<0.000000e+00> : vector<64xf32>
    %13 = vector.multi_reduction <add>, %12, %cst_10 [1] : vector<64x128xf32> to vector<64xf32>
    %14 = vector.shape_cast %13 : vector<64xf32> to vector<64x1xf32>
    %cst_11 = arith.constant 1.280000e+02 : f32
    %15 = vector.broadcast %cst_11 : f32 to vector<64x1xf32>
    %16 = arith.divf %14, %15 : vector<64x1xf32>
    %17 = vector.broadcast %9 : vector<64x1xf32> to vector<64x128xf32>
    %18 = arith.subf %1, %17 : vector<64x128xf32>
    %cst_12 = arith.constant 9.99999997E-7 : f32
    %19 = vector.broadcast %cst_12 : f32 to vector<64x1xf32>
    %20 = arith.addf %16, %19 : vector<64x1xf32>
    %21 = math.rsqrt %20 : vector<64x1xf32>
    %22 = vector.broadcast %21 : vector<64x1xf32> to vector<64x128xf32>
    %23 = arith.mulf %18, %22 : vector<64x128xf32>
    %24 = vector.broadcast %4 : vector<1x128xf32> to vector<64x128xf32>
    %25 = arith.mulf %23, %24 : vector<64x128xf32>
    %26 = vector.broadcast %5 : vector<1x128xf32> to vector<64x128xf32>
    %27 = arith.addf %25, %26 : vector<64x128xf32>
    %c0_13 = arith.constant 0 : index
    %c0_14 = arith.constant 0 : index
    %28 = vector.load %arg11[%c0_13, %c0_14] : memref<1x128xf32, #tpu.memory_space<vmem>>, vector<1x128xf32>
    %c0_15 = arith.constant 0 : index
    %c0_16 = arith.constant 0 : index
    %29 = vector.load %arg12[%c0_15, %c0_16] : memref<1x128xf32, #tpu.memory_space<vmem>>, vector<1x128xf32>
    %cst_17 = arith.constant dense<0.000000e+00> : vector<128xf32>
    %30 = vector.multi_reduction <add>, %3, %cst_17 [1] : vector<128x128xf32> to vector<128xf32>
    %31 = vector.shape_cast %30 : vector<128xf32> to vector<128x1xf32>
    %cst_18 = arith.constant 1.280000e+02 : f32
    %32 = vector.broadcast %cst_18 : f32 to vector<128x1xf32>
    %33 = arith.divf %31, %32 : vector<128x1xf32>
    %34 = vector.broadcast %33 : vector<128x1xf32> to vector<128x128xf32>
    %35 = arith.subf %3, %34 : vector<128x128xf32>
    %36 = arith.mulf %35, %35 : vector<128x128xf32>
    %cst_19 = arith.constant dense<0.000000e+00> : vector<128xf32>
    %37 = vector.multi_reduction <add>, %36, %cst_19 [1] : vector<128x128xf32> to vector<128xf32>
    %38 = vector.shape_cast %37 : vector<128xf32> to vector<128x1xf32>
    %cst_20 = arith.constant 1.280000e+02 : f32
    %39 = vector.broadcast %cst_20 : f32 to vector<128x1xf32>
    %40 = arith.divf %38, %39 : vector<128x1xf32>
    %41 = vector.broadcast %33 : vector<128x1xf32> to vector<128x128xf32>
    %42 = arith.subf %3, %41 : vector<128x128xf32>
    %cst_21 = arith.constant 9.99999997E-7 : f32
    %43 = vector.broadcast %cst_21 : f32 to vector<128x1xf32>
    %44 = arith.addf %40, %43 : vector<128x1xf32>
    %45 = math.rsqrt %44 : vector<128x1xf32>
    %46 = vector.broadcast %45 : vector<128x1xf32> to vector<128x128xf32>
    %47 = arith.mulf %42, %46 : vector<128x128xf32>
    %48 = vector.broadcast %28 : vector<1x128xf32> to vector<128x128xf32>
    %49 = arith.mulf %47, %48 : vector<128x128xf32>
    %50 = vector.broadcast %29 : vector<1x128xf32> to vector<128x128xf32>
    %51 = arith.addf %49, %50 : vector<128x128xf32>
    %52 = arith.truncf %27 : vector<64x128xf32> to vector<64x128xbf16>
    %c0_22 = arith.constant 0 : index
    %c0_23 = arith.constant 0 : index
    %53 = vector.load %arg5[%c0_22, %c0_23] : memref<128x128xbf16, #tpu.memory_space<vmem>>, vector<128x128xbf16>
    %cst_24 = arith.constant dense<0.000000e+00> : vector<64x128xf32>
    %54 = tpu.matmul %52, %53, %cst_24 {dimension_numbers = #tpu.dot_dimension_numbers<[1], [0], [0], [1], [0, 0, 1, 1], [], []>} : vector<64x128xbf16>, vector<128x128xbf16>, vector<64x128xf32> -> vector<64x128xf32>
    %c0_25 = arith.constant 0 : index
    %c0_26 = arith.constant 0 : index
    %55 = vector.load %arg6[%c0_25, %c0_26] : memref<1x128xf32, #tpu.memory_space<vmem>>, vector<1x128xf32>
    %56 = vector.broadcast %55 : vector<1x128xf32> to vector<64x128xf32>
    %57 = arith.addf %54, %56 : vector<64x128xf32>
    %58 = arith.truncf %51 : vector<128x128xf32> to vector<128x128xbf16>
    %c0_27 = arith.constant 0 : index
    %c0_28 = arith.constant 0 : index
    %59 = vector.load %arg7[%c0_27, %c0_28] : memref<128x256xbf16, #tpu.memory_space<vmem>>, vector<128x256xbf16>
    %cst_29 = arith.constant dense<0.000000e+00> : vector<128x256xf32>
    %60 = tpu.matmul %58, %59, %cst_29 {dimension_numbers = #tpu.dot_dimension_numbers<[1], [0], [0], [1], [0, 0, 1, 1], [], []>} : vector<128x128xbf16>, vector<128x256xbf16>, vector<128x256xf32> -> vector<128x256xf32>
    %c0_30 = arith.constant 0 : index
    %c0_31 = arith.constant 0 : index
    %61 = vector.load %arg8[%c0_30, %c0_31] : memref<1x256xf32, #tpu.memory_space<vmem>>, vector<1x256xf32>
    %62 = vector.broadcast %61 : vector<1x256xf32> to vector<128x256xf32>
    %63 = arith.addf %60, %62 : vector<128x256xf32>
    %64 = arith.truncf %57 : vector<64x128xf32> to vector<64x128xbf16>
    %c0_32 = arith.constant 0 : index
    %c0_33 = arith.constant 0 : index
    %65 = vector.load %arg20[%c0_32, %c0_33] : memref<64x128xbf16, #tpu.memory_space<vmem>>, vector<64x128xbf16>
    tpu.vector_store %arg20[%c0_32, %c0_33], %64 {strides = array<i32>} : memref<64x128xbf16, #tpu.memory_space<vmem>>, vector<64x128xbf16>,
    %66 = arith.truncf %63 : vector<128x256xf32> to vector<128x256xbf16>
    %c0_34 = arith.constant 0 : index
    %c0_35 = arith.constant 0 : index
    %67 = vector.load %arg21[%c0_34, %c0_35] : memref<128x256xbf16, #tpu.memory_space<vmem>>, vector<128x256xbf16>
    tpu.vector_store %arg21[%c0_34, %c0_35], %66 {strides = array<i32>} : memref<128x256xbf16, #tpu.memory_space<vmem>>, vector<128x256xbf16>,
    %c0_36 = arith.constant 0 : index
    %c0_37 = arith.constant 0 : index
    %c0_38 = arith.constant 0 : index
    %68 = vector.load %arg4[%c0_36, %c0_37, %c0_38] : memref<1x1x128xf32, #tpu.memory_space<vmem>>, vector<1x1x128xf32>
    %69 = vector.shape_cast %68 : vector<1x1x128xf32> to vector<1x128xf32>
    %cst_39 = arith.constant 0.000000e+00 : f32
    %70 = vector.broadcast %cst_39 : f32 to vector<1x128xf32>
    %71 = arith.cmpf ogt, %69, %70 : vector<1x128xf32>
    %cst_40 = arith.constant -9.99999984E+17 : f32
    %cst_41 = arith.constant 0.000000e+00 : f32
    %72 = vector.broadcast %cst_40 : f32 to vector<1x128xf32>
    %73 = vector.broadcast %cst_41 : f32 to vector<1x128xf32>
    %74 = arith.select %71, %72, %73 : vector<1x128xi1>, vector<1x128xf32>
    %75 = vector.shape_cast %74 : vector<1x128xf32> to vector<1x128xf32>
    %76 = vector.broadcast %75 : vector<1x128xf32> to vector<64x128xf32>
    %c0_42 = arith.constant 0 : index
    %c0_43 = arith.constant 0 : index
    %77 = vector.load %arg20[%c0_42, %c0_43] : memref<64x128xbf16, #tpu.memory_space<vmem>>, vector<64x32xbf16>
    %c0_44 = arith.constant 0 : index
    %c0_45 = arith.constant 0 : index
    %78 = vector.load %arg21[%c0_44, %c0_45] : memref<128x256xbf16, #tpu.memory_space<vmem>>, vector<128x32xbf16>
    %c0_46 = arith.constant 0 : index
    %c128 = arith.constant 128 : index
    %79 = vector.load %arg21[%c0_46, %c128] : memref<128x256xbf16, #tpu.memory_space<vmem>>, vector<128x32xbf16>
    %cst_47 = arith.constant dense<0.000000e+00> : vector<64x128xf32>
    %80 = tpu.matmul %77, %78, %cst_47 {dimension_numbers = #tpu.dot_dimension_numbers<[1], [1], [0], [0], [0, 0, 1, 0], [], []>} : vector<64x32xbf16>, vector<128x32xbf16>, vector<64x128xf32> -> vector<64x128xf32>
    %81 = arith.addf %80, %76 : vector<64x128xf32>
    %cst_48 = arith.constant dense<0xFF800000> : vector<64xf32>
    %82 = vector.multi_reduction <maximumf>, %81, %cst_48 [1] : vector<64x128xf32> to vector<64xf32>
    %83 = vector.shape_cast %82 : vector<64xf32> to vector<64x1xf32>
    %84 = vector.broadcast %83 : vector<64x1xf32> to vector<64x128xf32>
    %85 = arith.subf %81, %84 : vector<64x128xf32>
    %86 = math.exp %85 : vector<64x128xf32>
    %cst_49 = arith.constant dense<0.000000e+00> : vector<64xf32>
    %87 = vector.multi_reduction <add>, %86, %cst_49 [1] : vector<64x128xf32> to vector<64xf32>
    %88 = vector.shape_cast %87 : vector<64xf32> to vector<64x1xf32>
    %89 = tpu.reciprocal %88 {approx = true} : vector<64x1xf32> -> vector<64x1xf32>
    %90 = vector.broadcast %89 : vector<64x1xf32> to vector<64x128xf32>
    %91 = arith.mulf %86, %90 : vector<64x128xf32>
    %92 = arith.truncf %91 : vector<64x128xf32> to vector<64x128xbf16>
    %cst_50 = arith.constant dense<0.000000e+00> : vector<64x32xf32>
    %93 = tpu.matmul %92, %79, %cst_50 {dimension_numbers = #tpu.dot_dimension_numbers<[1], [0], [0], [1], [0, 0, 1, 1], [], []>} : vector<64x128xbf16>, vector<128x32xbf16>, vector<64x32xf32> -> vector<64x32xf32>
    %94 = arith.truncf %93 : vector<64x32xf32> to vector<64x32xbf16>
    %c0_51 = arith.constant 0 : index
    %c0_52 = arith.constant 0 : index
    %95 = vector.load %arg22[%c0_51, %c0_52] : memref<64x128xbf16, #tpu.memory_space<vmem>>, vector<64x32xbf16>
    tpu.vector_store %arg22[%c0_51, %c0_52], %94 {strides = array<i32>} : memref<64x128xbf16, #tpu.memory_space<vmem>>, vector<64x32xbf16>,
    %c0_53 = arith.constant 0 : index
    %c32 = arith.constant 32 : index
    %96 = vector.load %arg20[%c0_53, %c32] : memref<64x128xbf16, #tpu.memory_space<vmem>>, vector<64x32xbf16>
    %c0_54 = arith.constant 0 : index
    %c32_55 = arith.constant 32 : index
    %97 = vector.load %arg21[%c0_54, %c32_55] : memref<128x256xbf16, #tpu.memory_space<vmem>>, vector<128x32xbf16>
    %c0_56 = arith.constant 0 : index
    %c160 = arith.constant 160 : index
    %98 = vector.load %arg21[%c0_56, %c160] : memref<128x256xbf16, #tpu.memory_space<vmem>>, vector<128x32xbf16>
    %cst_57 = arith.constant dense<0.000000e+00> : vector<64x128xf32>
    %99 = tpu.matmul %96, %97, %cst_57 {dimension_numbers = #tpu.dot_dimension_numbers<[1], [1], [0], [0], [0, 0, 1, 0], [], []>} : vector<64x32xbf16>, vector<128x32xbf16>, vector<64x128xf32> -> vector<64x128xf32>
    %100 = arith.addf %99, %76 : vector<64x128xf32>
    %cst_58 = arith.constant dense<0xFF800000> : vector<64xf32>
    %101 = vector.multi_reduction <maximumf>, %100, %cst_58 [1] : vector<64x128xf32> to vector<64xf32>
    %102 = vector.shape_cast %101 : vector<64xf32> to vector<64x1xf32>
    %103 = vector.broadcast %102 : vector<64x1xf32> to vector<64x128xf32>
    %104 = arith.subf %100, %103 : vector<64x128xf32>
    %105 = math.exp %104 : vector<64x128xf32>
    %cst_59 = arith.constant dense<0.000000e+00> : vector<64xf32>
    %106 = vector.multi_reduction <add>, %105, %cst_59 [1] : vector<64x128xf32> to vector<64xf32>
    %107 = vector.shape_cast %106 : vector<64xf32> to vector<64x1xf32>
    %108 = tpu.reciprocal %107 {approx = true} : vector<64x1xf32> -> vector<64x1xf32>
    %109 = vector.broadcast %108 : vector<64x1xf32> to vector<64x128xf32>
    %110 = arith.mulf %105, %109 : vector<64x128xf32>
    %111 = arith.truncf %110 : vector<64x128xf32> to vector<64x128xbf16>
    %cst_60 = arith.constant dense<0.000000e+00> : vector<64x32xf32>
    %112 = tpu.matmul %111, %98, %cst_60 {dimension_numbers = #tpu.dot_dimension_numbers<[1], [0], [0], [1], [0, 0, 1, 1], [], []>} : vector<64x128xbf16>, vector<128x32xbf16>, vector<64x32xf32> -> vector<64x32xf32>
    %113 = arith.truncf %112 : vector<64x32xf32> to vector<64x32xbf16>
    %c0_61 = arith.constant 0 : index
    %c32_62 = arith.constant 32 : index
    %114 = vector.load %arg22[%c0_61, %c32_62] : memref<64x128xbf16, #tpu.memory_space<vmem>>, vector<64x32xbf16>
    tpu.vector_store %arg22[%c0_61, %c32_62], %113 {strides = array<i32>} : memref<64x128xbf16, #tpu.memory_space<vmem>>, vector<64x32xbf16>,
    %c0_63 = arith.constant 0 : index
    %c64 = arith.constant 64 : index
    %115 = vector.load %arg20[%c0_63, %c64] : memref<64x128xbf16, #tpu.memory_space<vmem>>, vector<64x32xbf16>
    %c0_64 = arith.constant 0 : index
    %c64_65 = arith.constant 64 : index
    %116 = vector.load %arg21[%c0_64, %c64_65] : memref<128x256xbf16, #tpu.memory_space<vmem>>, vector<128x32xbf16>
    %c0_66 = arith.constant 0 : index
    %c192 = arith.constant 192 : index
    %117 = vector.load %arg21[%c0_66, %c192] : memref<128x256xbf16, #tpu.memory_space<vmem>>, vector<128x32xbf16>
    %cst_67 = arith.constant dense<0.000000e+00> : vector<64x128xf32>
    %118 = tpu.matmul %115, %116, %cst_67 {dimension_numbers = #tpu.dot_dimension_numbers<[1], [1], [0], [0], [0, 0, 1, 0], [], []>} : vector<64x32xbf16>, vector<128x32xbf16>, vector<64x128xf32> -> vector<64x128xf32>
    %119 = arith.addf %118, %76 : vector<64x128xf32>
    %cst_68 = arith.constant dense<0xFF800000> : vector<64xf32>
    %120 = vector.multi_reduction <maximumf>, %119, %cst_68 [1] : vector<64x128xf32> to vector<64xf32>
    %121 = vector.shape_cast %120 : vector<64xf32> to vector<64x1xf32>
    %122 = vector.broadcast %121 : vector<64x1xf32> to vector<64x128xf32>
    %123 = arith.subf %119, %122 : vector<64x128xf32>
    %124 = math.exp %123 : vector<64x128xf32>
    %cst_69 = arith.constant dense<0.000000e+00> : vector<64xf32>
    %125 = vector.multi_reduction <add>, %124, %cst_69 [1] : vector<64x128xf32> to vector<64xf32>
    %126 = vector.shape_cast %125 : vector<64xf32> to vector<64x1xf32>
    %127 = tpu.reciprocal %126 {approx = true} : vector<64x1xf32> -> vector<64x1xf32>
    %128 = vector.broadcast %127 : vector<64x1xf32> to vector<64x128xf32>
    %129 = arith.mulf %124, %128 : vector<64x128xf32>
    %130 = arith.truncf %129 : vector<64x128xf32> to vector<64x128xbf16>
    %cst_70 = arith.constant dense<0.000000e+00> : vector<64x32xf32>
    %131 = tpu.matmul %130, %117, %cst_70 {dimension_numbers = #tpu.dot_dimension_numbers<[1], [0], [0], [1], [0, 0, 1, 1], [], []>} : vector<64x128xbf16>, vector<128x32xbf16>, vector<64x32xf32> -> vector<64x32xf32>
    %132 = arith.truncf %131 : vector<64x32xf32> to vector<64x32xbf16>
    %c0_71 = arith.constant 0 : index
    %c64_72 = arith.constant 64 : index
    %133 = vector.load %arg22[%c0_71, %c64_72] : memref<64x128xbf16, #tpu.memory_space<vmem>>, vector<64x32xbf16>
    tpu.vector_store %arg22[%c0_71, %c64_72], %132 {strides = array<i32>} : memref<64x128xbf16, #tpu.memory_space<vmem>>, vector<64x32xbf16>,
    %c0_73 = arith.constant 0 : index
    %c96 = arith.constant 96 : index
    %134 = vector.load %arg20[%c0_73, %c96] : memref<64x128xbf16, #tpu.memory_space<vmem>>, vector<64x32xbf16>
    %c0_74 = arith.constant 0 : index
    %c96_75 = arith.constant 96 : index
    %135 = vector.load %arg21[%c0_74, %c96_75] : memref<128x256xbf16, #tpu.memory_space<vmem>>, vector<128x32xbf16>
    %c0_76 = arith.constant 0 : index
    %c224 = arith.constant 224 : index
    %136 = vector.load %arg21[%c0_76, %c224] : memref<128x256xbf16, #tpu.memory_space<vmem>>, vector<128x32xbf16>
    %cst_77 = arith.constant dense<0.000000e+00> : vector<64x128xf32>
    %137 = tpu.matmul %134, %135, %cst_77 {dimension_numbers = #tpu.dot_dimension_numbers<[1], [1], [0], [0], [0, 0, 1, 0], [], []>} : vector<64x32xbf16>, vector<128x32xbf16>, vector<64x128xf32> -> vector<64x128xf32>
    %138 = arith.addf %137, %76 : vector<64x128xf32>
    %cst_78 = arith.constant dense<0xFF800000> : vector<64xf32>
    %139 = vector.multi_reduction <maximumf>, %138, %cst_78 [1] : vector<64x128xf32> to vector<64xf32>
    %140 = vector.shape_cast %139 : vector<64xf32> to vector<64x1xf32>
    %141 = vector.broadcast %140 : vector<64x1xf32> to vector<64x128xf32>
    %142 = arith.subf %138, %141 : vector<64x128xf32>
    %143 = math.exp %142 : vector<64x128xf32>
    %cst_79 = arith.constant dense<0.000000e+00> : vector<64xf32>
    %144 = vector.multi_reduction <add>, %143, %cst_79 [1] : vector<64x128xf32> to vector<64xf32>
    %145 = vector.shape_cast %144 : vector<64xf32> to vector<64x1xf32>
    %146 = tpu.reciprocal %145 {approx = true} : vector<64x1xf32> -> vector<64x1xf32>
    %147 = vector.broadcast %146 : vector<64x1xf32> to vector<64x128xf32>
    %148 = arith.mulf %143, %147 : vector<64x128xf32>
    %149 = arith.truncf %148 : vector<64x128xf32> to vector<64x128xbf16>
    %cst_80 = arith.constant dense<0.000000e+00> : vector<64x32xf32>
    %150 = tpu.matmul %149, %136, %cst_80 {dimension_numbers = #tpu.dot_dimension_numbers<[1], [0], [0], [1], [0, 0, 1, 1], [], []>} : vector<64x128xbf16>, vector<128x32xbf16>, vector<64x32xf32> -> vector<64x32xf32>
    %151 = arith.truncf %150 : vector<64x32xf32> to vector<64x32xbf16>
    %c0_81 = arith.constant 0 : index
    %c96_82 = arith.constant 96 : index
    %152 = vector.load %arg22[%c0_81, %c96_82] : memref<64x128xbf16, #tpu.memory_space<vmem>>, vector<64x32xbf16>
    tpu.vector_store %arg22[%c0_81, %c96_82], %151 {strides = array<i32>} : memref<64x128xbf16, #tpu.memory_space<vmem>>, vector<64x32xbf16>,
    %c0_83 = arith.constant 0 : index
    %c0_84 = arith.constant 0 : index
    %153 = vector.load %arg22[%c0_83, %c0_84] : memref<64x128xbf16, #tpu.memory_space<vmem>>, vector<64x128xbf16>
    %c0_85 = arith.constant 0 : index
    %c0_86 = arith.constant 0 : index
    %154 = vector.load %arg9[%c0_85, %c0_86] : memref<128x128xbf16, #tpu.memory_space<vmem>>, vector<128x128xbf16>
    %cst_87 = arith.constant dense<0.000000e+00> : vector<64x128xf32>
    %155 = tpu.matmul %153, %154, %cst_87 {dimension_numbers = #tpu.dot_dimension_numbers<[1], [0], [0], [1], [0, 0, 1, 1], [], []>} : vector<64x128xbf16>, vector<128x128xbf16>, vector<64x128xf32> -> vector<64x128xf32>
    %c0_88 = arith.constant 0 : index
    %c0_89 = arith.constant 0 : index
    %156 = vector.load %arg10[%c0_88, %c0_89] : memref<1x128xf32, #tpu.memory_space<vmem>>, vector<1x128xf32>
    %157 = vector.broadcast %156 : vector<1x128xf32> to vector<64x128xf32>
    %158 = arith.addf %155, %157 : vector<64x128xf32>
    %159 = arith.addf %158, %1 : vector<64x128xf32>
    %c0_90 = arith.constant 0 : index
    %c0_91 = arith.constant 0 : index
    %160 = vector.load %arg17[%c0_90, %c0_91] : memref<1x128xf32, #tpu.memory_space<vmem>>, vector<1x128xf32>
    %c0_92 = arith.constant 0 : index
    %c0_93 = arith.constant 0 : index
    %161 = vector.load %arg18[%c0_92, %c0_93] : memref<1x128xf32, #tpu.memory_space<vmem>>, vector<1x128xf32>
    %cst_94 = arith.constant dense<0.000000e+00> : vector<64xf32>
    %162 = vector.multi_reduction <add>, %159, %cst_94 [1] : vector<64x128xf32> to vector<64xf32>
    %163 = vector.shape_cast %162 : vector<64xf32> to vector<64x1xf32>
    %cst_95 = arith.constant 1.280000e+02 : f32
    %164 = vector.broadcast %cst_95 : f32 to vector<64x1xf32>
    %165 = arith.divf %163, %164 : vector<64x1xf32>
    %166 = vector.broadcast %165 : vector<64x1xf32> to vector<64x128xf32>
    %167 = arith.subf %159, %166 : vector<64x128xf32>
    %168 = arith.mulf %167, %167 : vector<64x128xf32>
    %cst_96 = arith.constant dense<0.000000e+00> : vector<64xf32>
    %169 = vector.multi_reduction <add>, %168, %cst_96 [1] : vector<64x128xf32> to vector<64xf32>
    %170 = vector.shape_cast %169 : vector<64xf32> to vector<64x1xf32>
    %cst_97 = arith.constant 1.280000e+02 : f32
    %171 = vector.broadcast %cst_97 : f32 to vector<64x1xf32>
    %172 = arith.divf %170, %171 : vector<64x1xf32>
    %173 = vector.broadcast %165 : vector<64x1xf32> to vector<64x128xf32>
    %174 = arith.subf %159, %173 : vector<64x128xf32>
    %cst_98 = arith.constant 9.99999997E-7 : f32
    %175 = vector.broadcast %cst_98 : f32 to vector<64x1xf32>
    %176 = arith.addf %172, %175 : vector<64x1xf32>
    %177 = math.rsqrt %176 : vector<64x1xf32>
    %178 = vector.broadcast %177 : vector<64x1xf32> to vector<64x128xf32>
    %179 = arith.mulf %174, %178 : vector<64x128xf32>
    %180 = vector.broadcast %160 : vector<1x128xf32> to vector<64x128xf32>
    %181 = arith.mulf %179, %180 : vector<64x128xf32>
    %182 = vector.broadcast %161 : vector<1x128xf32> to vector<64x128xf32>
    %183 = arith.addf %181, %182 : vector<64x128xf32>
    %184 = arith.truncf %183 : vector<64x128xf32> to vector<64x128xbf16>
    %c0_99 = arith.constant 0 : index
    %c0_100 = arith.constant 0 : index
    %185 = vector.load %arg13[%c0_99, %c0_100] : memref<128x256xbf16, #tpu.memory_space<vmem>>, vector<128x256xbf16>
    %cst_101 = arith.constant dense<0.000000e+00> : vector<64x256xf32>
    %186 = tpu.matmul %184, %185, %cst_101 {dimension_numbers = #tpu.dot_dimension_numbers<[1], [0], [0], [1], [0, 0, 1, 1], [], []>} : vector<64x128xbf16>, vector<128x256xbf16>, vector<64x256xf32> -> vector<64x256xf32>
    %c0_102 = arith.constant 0 : index
    %c0_103 = arith.constant 0 : index
    %187 = vector.load %arg14[%c0_102, %c0_103] : memref<1x256xf32, #tpu.memory_space<vmem>>, vector<1x256xf32>
    %188 = vector.broadcast %187 : vector<1x256xf32> to vector<64x256xf32>
    %189 = arith.addf %186, %188 : vector<64x256xf32>
    %cst_104 = arith.constant 5.000000e-01 : f32
    %190 = vector.broadcast %cst_104 : f32 to vector<64x256xf32>
    %191 = arith.mulf %190, %189 : vector<64x256xf32>
    %cst_105 = arith.constant 4.471500e-02 : f32
    %192 = vector.broadcast %cst_105 : f32 to vector<64x256xf32>
    %193 = arith.mulf %192, %189 : vector<64x256xf32>
    %194 = arith.mulf %193, %189 : vector<64x256xf32>
    %195 = arith.mulf %194, %189 : vector<64x256xf32>
    %196 = arith.addf %189, %195 : vector<64x256xf32>
    %cst_106 = arith.constant 0.797884583 : f32
    %197 = vector.broadcast %cst_106 : f32 to vector<64x256xf32>
    %198 = arith.mulf %197, %196 : vector<64x256xf32>
    %199 = math.tanh %198 : vector<64x256xf32>
    %cst_107 = arith.constant 1.000000e+00 : f32
    %200 = vector.broadcast %cst_107 : f32 to vector<64x256xf32>
    %201 = arith.addf %200, %199 : vector<64x256xf32>
    %202 = arith.mulf %191, %201 : vector<64x256xf32>
    %203 = arith.truncf %202 : vector<64x256xf32> to vector<64x256xbf16>
    %c0_108 = arith.constant 0 : index
    %c0_109 = arith.constant 0 : index
    %204 = vector.load %arg15[%c0_108, %c0_109] : memref<256x128xbf16, #tpu.memory_space<vmem>>, vector<256x128xbf16>
    %cst_110 = arith.constant dense<0.000000e+00> : vector<64x128xf32>
    %205 = tpu.matmul %203, %204, %cst_110 {dimension_numbers = #tpu.dot_dimension_numbers<[1], [0], [0], [1], [0, 0, 1, 1], [], []>} : vector<64x256xbf16>, vector<256x128xbf16>, vector<64x128xf32> -> vector<64x128xf32>
    %c0_111 = arith.constant 0 : index
    %c0_112 = arith.constant 0 : index
    %206 = vector.load %arg16[%c0_111, %c0_112] : memref<1x128xf32, #tpu.memory_space<vmem>>, vector<1x128xf32>
    %207 = vector.broadcast %206 : vector<1x128xf32> to vector<64x128xf32>
    %208 = arith.addf %205, %207 : vector<64x128xf32>
    %209 = arith.addf %208, %159 : vector<64x128xf32>
    %c0_113 = arith.constant 0 : index
    %c0_114 = arith.constant 0 : index
    %c0_115 = arith.constant 0 : index
    %210 = vector.load %arg19[%c0_113, %c0_114, %c0_115] : memref<1x64x128xf32, #tpu.memory_space<vmem>>, vector<1x64x128xf32>
    %211 = vector.shape_cast %210 : vector<1x64x128xf32> to vector<64x128xf32>
    %212 = vector.shape_cast %209 : vector<64x128xf32> to vector<1x64x128xf32>
    tpu.vector_store %arg19[%c0_113, %c0_114, %c0_115], %212 {strides = array<i32>} : memref<1x64x128xf32, #tpu.memory_space<vmem>>, vector<1x64x128xf32>,
    return
  }
  func.func @transform_0(%arg0: i32, %arg1: i32) -> (i32, i32, i32) {
    %c0_i32 = arith.constant 0 : i32
    %c0_i32_0 = arith.constant 0 : i32
    return %arg0, %arg1, %c0_i32 : i32, i32, i32
  }
  func.func @transform_1(%arg0: i32, %arg1: i32) -> (i32, i32, i32) {
    %c0_i32 = arith.constant 0 : i32
    %c0_i32_0 = arith.constant 0 : i32
    %c0_i32_1 = arith.constant 0 : i32
    return %arg0, %c0_i32, %c0_i32_0 : i32, i32, i32
  }
  func.func @transform_2(%arg0: i32, %arg1: i32) -> (i32, i32, i32) {
    %c0_i32 = arith.constant 0 : i32
    %c0_i32_0 = arith.constant 0 : i32
    %c0_i32_1 = arith.constant 0 : i32
    return %arg0, %c0_i32, %c0_i32_0 : i32, i32, i32
  }
  func.func @transform_3(%arg0: i32, %arg1: i32) -> (i32, i32) {
    %c0_i32 = arith.constant 0 : i32
    %c0_i32_0 = arith.constant 0 : i32
    %c0_i32_1 = arith.constant 0 : i32
    return %c0_i32, %c0_i32_0 : i32, i32
  }
  func.func @transform_4(%arg0: i32, %arg1: i32) -> (i32, i32) {
    %c0_i32 = arith.constant 0 : i32
    %c0_i32_0 = arith.constant 0 : i32
    %c0_i32_1 = arith.constant 0 : i32
    return %c0_i32, %c0_i32_0 : i32, i32
  }
  func.func @transform_5(%arg0: i32, %arg1: i32) -> (i32, i32) {
    %c0_i32 = arith.constant 0 : i32
    %c0_i32_0 = arith.constant 0 : i32
    %c0_i32_1 = arith.constant 0 : i32
    return %c0_i32, %c0_i32_0 : i32, i32
  }
  func.func @transform_6(%arg0: i32, %arg1: i32) -> (i32, i32) {
    %c0_i32 = arith.constant 0 : i32
    %c0_i32_0 = arith.constant 0 : i32
    %c0_i32_1 = arith.constant 0 : i32
    return %c0_i32, %c0_i32_0 : i32, i32
  }
  func.func @transform_7(%arg0: i32, %arg1: i32) -> (i32, i32) {
    %c0_i32 = arith.constant 0 : i32
    %c0_i32_0 = arith.constant 0 : i32
    %c0_i32_1 = arith.constant 0 : i32
    return %c0_i32, %c0_i32_0 : i32, i32
  }
  func.func @transform_8(%arg0: i32, %arg1: i32) -> (i32, i32) {
    %c0_i32 = arith.constant 0 : i32
    %c0_i32_0 = arith.constant 0 : i32
    %c0_i32_1 = arith.constant 0 : i32
    return %c0_i32, %c0_i32_0 : i32, i32
  }
  func.func @transform_9(%arg0: i32, %arg1: i32) -> (i32, i32) {
    %c0_i32 = arith.constant 0 : i32
    %c0_i32_0 = arith.constant 0 : i32
    %c0_i32_1 = arith.constant 0 : i32
    return %c0_i32, %c0_i32_0 : i32, i32
  }
  func.func @transform_10(%arg0: i32, %arg1: i32) -> (i32, i32) {
    %c0_i32 = arith.constant 0 : i32
    %c0_i32_0 = arith.constant 0 : i32
    %c0_i32_1 = arith.constant 0 : i32
    return %c0_i32, %c0_i32_0 : i32, i32
  }
  func.func @transform_11(%arg0: i32, %arg1: i32) -> (i32, i32) {
    %c0_i32 = arith.constant 0 : i32
    %c0_i32_0 = arith.constant 0 : i32
    %c0_i32_1 = arith.constant 0 : i32
    return %c0_i32, %c0_i32_0 : i32, i32
  }
  func.func @transform_12(%arg0: i32, %arg1: i32) -> (i32, i32) {
    %c0_i32 = arith.constant 0 : i32
    %c0_i32_0 = arith.constant 0 : i32
    %c0_i32_1 = arith.constant 0 : i32
    return %c0_i32, %c0_i32_0 : i32, i32
  }
  func.func @transform_13(%arg0: i32, %arg1: i32) -> (i32, i32) {
    %c0_i32 = arith.constant 0 : i32
    %c0_i32_0 = arith.constant 0 : i32
    %c0_i32_1 = arith.constant 0 : i32
    return %c0_i32, %c0_i32_0 : i32, i32
  }
  func.func @transform_14(%arg0: i32, %arg1: i32) -> (i32, i32) {
    %c0_i32 = arith.constant 0 : i32
    %c0_i32_0 = arith.constant 0 : i32
    %c0_i32_1 = arith.constant 0 : i32
    return %c0_i32, %c0_i32_0 : i32, i32
  }
  func.func @transform_15(%arg0: i32, %arg1: i32) -> (i32, i32) {
    %c0_i32 = arith.constant 0 : i32
    %c0_i32_0 = arith.constant 0 : i32
    %c0_i32_1 = arith.constant 0 : i32
    return %c0_i32, %c0_i32_0 : i32, i32
  }
  func.func @transform_16(%arg0: i32, %arg1: i32) -> (i32, i32) {
    %c0_i32 = arith.constant 0 : i32
    %c0_i32_0 = arith.constant 0 : i32
    %c0_i32_1 = arith.constant 0 : i32
    return %c0_i32, %c0_i32_0 : i32, i32
  }
  func.func @transform_17(%arg0: i32, %arg1: i32) -> (i32, i32, i32) {
    %c0_i32 = arith.constant 0 : i32
    %c0_i32_0 = arith.constant 0 : i32
    return %arg0, %arg1, %c0_i32 : i32, i32, i32
  }
}

</mosaic_0001>

<llo_original>
// kernel: tpu_custom_call.1
$region0: #{tpu_custom_call.1}
  #allocation0 [shape = 'u32[]', space=smem, size = 0x4, offset = 0x4, fixed_abs, tag = 'smem constant byte address 0x4 - core index']
  #allocation1 [shape = 'u32[144,128]{1,0:T(1,128)}', space=vmem, size = 0x12000, scoped, tag = 'internal scratch']
  #allocation2 [shape = 'bf16[64,128]{1,0:T(16,128)(2,1)}', space=vmem, size = 0x4000, scoped, tag = 'scratch operand']
  #allocation3 [shape = 'bf16[128,256]{1,0:T(16,128)(2,1)}', space=vmem, size = 0x10000, scoped, tag = 'scratch operand']
  #allocation4 [shape = 'bf16[64,128]{1,0:T(16,128)(2,1)}', space=vmem, size = 0x4000, scoped, tag = 'scratch operand']
  %s0 = inlined_call_operand.hbm [shape: f32[2,128,128], index: 0, kind: input, shape index: {}]
  %s1 = inlined_call_operand.hbm [shape: f32[2,128,128], index: 1, kind: input, shape index: {}]
  %s2 = inlined_call_operand.hbm [shape: f32[2,1,128], index: 2, kind: input, shape index: {}]
  %s3 = inlined_call_operand.hbm [shape: bf16[128,128], index: 3, kind: input, shape index: {}]
  %s4 = inlined_call_operand.hbm [shape: f32[1,128], index: 4, kind: input, shape index: {}]
  %s5 = inlined_call_operand.hbm [shape: bf16[128,256], index: 5, kind: input, shape index: {}]
  %s6 = inlined_call_operand.hbm [shape: f32[1,256], index: 6, kind: input, shape index: {}]
  %s7 = inlined_call_operand.hbm [shape: bf16[128,128], index: 7, kind: input, shape index: {}]
  %s8 = inlined_call_operand.hbm [shape: f32[1,128], index: 8, kind: input, shape index: {}]
  %s9 = inlined_call_operand.hbm [shape: f32[1,128], index: 9, kind: input, shape index: {}]
  %s10 = inlined_call_operand.hbm [shape: f32[1,128], index: 10, kind: input, shape index: {}]
  %s11 = inlined_call_operand.hbm [shape: bf16[128,256], index: 11, kind: input, shape index: {}]
  %s12 = inlined_call_operand.hbm [shape: f32[1,256], index: 12, kind: input, shape index: {}]
  %s13 = inlined_call_operand.hbm [shape: bf16[256,128], index: 13, kind: input, shape index: {}]
  %s14 = inlined_call_operand.hbm [shape: f32[1,128], index: 14, kind: input, shape index: {}]
  %s15 = inlined_call_operand.hbm [shape: f32[1,128], index: 15, kind: input, shape index: {}]
  %s16 = inlined_call_operand.hbm [shape: f32[1,128], index: 16, kind: input, shape index: {}]
  %s17 = inlined_call_operand.hbm [shape: f32[2,128,128], index: 17, kind: output, shape index: {}]
  %s18 = sld [smem:[#allocation0]]
  $region169: #{tpu_custom_call.1} parent=0
    _
  %s20 = ssub.s32 1, %s18
  %s21 = scalar_select 0, %s20, %s18
  $region1: #{tpu_custom_call.1} parent=0
    #allocation5 [shape = 'u8[65536]{0}', space=vmem, size = 0x10000, scoped, tag = 'input window, operand 0']
    #allocation6 [shape = 's32[2]{0}', space=sflag, size = 0x8, scoped, tag = 'scoped memory for tpu_custom_call.1']
    #allocation7 [shape = 's32[2]{0}', space=sflag, size = 0x8, scoped, tag = 'scoped memory for tpu_custom_call.1']
    #allocation8 [shape = 'u8[131072]{0}', space=vmem, size = 0x20000, scoped, tag = 'input window, operand 1']
    #allocation9 [shape = 's32[2]{0}', space=sflag, size = 0x8, scoped, tag = 'scoped memory for tpu_custom_call.1']
    #allocation10 [shape = 'u8[1024]{0}', space=vmem, size = 0x400, scoped, tag = 'input window, operand 2']
    #allocation11 [shape = 'u8[32768]{0}', space=vmem, size = 0x8000, scoped, tag = 'input window, operand 3, single buffered']
    #allocation12 [shape = 's32[1]{0}', space=sflag, size = 0x4, scoped, tag = 'scoped memory for tpu_custom_call.1']
    #allocation13 [shape = 'u8[512]{0}', space=vmem, size = 0x400, scoped, tag = 'input window, operand 4, single buffered']
    #allocation14 [shape = 'u8[65536]{0}', space=vmem, size = 0x10000, scoped, tag = 'input window, operand 5, single buffered']
    #allocation15 [shape = 's32[1]{0}', space=sflag, size = 0x4, scoped, tag = 'scoped memory for tpu_custom_call.1']
    #allocation16 [shape = 'u8[1024]{0}', space=vmem, size = 0x400, scoped, tag = 'input window, operand 6, single buffered']
    #allocation17 [shape = 'u8[32768]{0}', space=vmem, size = 0x8000, scoped, tag = 'input window, operand 7, single buffered']
    #allocation18 [shape = 's32[1]{0}', space=sflag, size = 0x4, scoped, tag = 'scoped memory for tpu_custom_call.1']
    #allocation19 [shape = 'u8[512]{0}', space=vmem, size = 0x400, scoped, tag = 'input window, operand 8, single buffered']
    #allocation20 [shape = 'u8[512]{0}', space=vmem, size = 0x400, scoped, tag = 'input window, operand 9, single buffered']
    #allocation21 [shape = 's32[1]{0}', space=sflag, size = 0x4, scoped, tag = 'scoped memory for tpu_custom_call.1']
    #allocation22 [shape = 'u8[512]{0}', space=vmem, size = 0x400, scoped, tag = 'input window, operand 10, single buffered']
    #allocation23 [shape = 'u8[65536]{0}', space=vmem, size = 0x10000, scoped, tag = 'input window, operand 11, single buffered']
    #allocation24 [shape = 's32[1]{0}', space=sflag, size = 0x4, scoped, tag = 'scoped memory for tpu_custom_call.1']
    #allocation25 [shape = 'u8[1024]{0}', space=vmem, size = 0x400, scoped, tag = 'input window, operand 12, single buffered']
    #allocation26 [shape = 'u8[65536]{0}', space=vmem, size = 0x10000, scoped, tag = 'input window, operand 13, single buffered']
    #allocation27 [shape = 's32[1]{0}', space=sflag, size = 0x4, scoped, tag = 'scoped memory for tpu_custom_call.1']
    #allocation28 [shape = 'u8[512]{0}', space=vmem, size = 0x400, scoped, tag = 'input window, operand 14, single buffered']
    #allocation29 [shape = 'u8[512]{0}', space=vmem, size = 0x400, scoped, tag = 'input window, operand 15, single buffered']
    #allocation30 [shape = 's32[1]{0}', space=sflag, size = 0x4, scoped, tag = 'scoped memory for tpu_custom_call.1']
    #allocation31 [shape = 'u8[512]{0}', space=vmem, size = 0x400, scoped, tag = 'input window, operand 16, single buffered']
    #allocation32 [shape = 'u8[65536]{0}', space=vmem, size = 0x10000, scoped, tag = 'output window, operand 0']
    %22 = vsyncpa [#allocation6], 0
    %s23 = scalar_lea.sflag [#allocation6], 1
    %24 = vsyncpa %s23, 0
    %25 = vsyncpa [#allocation9], 0
    %s26 = scalar_lea.sflag [#allocation9], 1
    %27 = vsyncpa %s26, 0
    %28 = vsyncpa [#allocation12], 0
    %29 = vsyncpa [#allocation15], 0
    %30 = vsyncpa [#allocation18], 0
    %31 = vsyncpa [#allocation21], 0
    %32 = vsyncpa [#allocation24], 0
    %33 = vsyncpa [#allocation27], 0
    %34 = vsyncpa [#allocation30], 0
    %35 = vsyncpa [#allocation7], 0
    %s36 = scalar_lea.sflag [#allocation7], 1
    %37 = vsyncpa %s36, 0
    loop: start=0, step=1, limit=6
    $region2: #{tpu_custom_call.1} parent=1 // loop_pre_header
      _
    $region3: #{tpu_custom_call.1} parent=1 // loop_header
      %s39 = sphi 0, %s43
      %p40 = scmp.ge.s32.totalorder %s39, 6
      %s46 = sphi 0, %s58
      %s47 = sphi 0, %s54
      %s48 = sphi 0, %s46
      %s49 = sphi 0, %s47
      %s50 = sphi 0, %s48
      %s51 = sphi 0, %s49
      %s63 = sphi 0, %s65
      %s66 = sphi 0, %s63
      %s67 = sphi 0, %s66
      %s83 = sphi 0, %s67
      %s89 = sphi 0, %s91
      %s92 = sphi 0, %s89
      %s93 = sphi 0, %s92
      %s109 = sphi 0, %s93
      %s115 = sphi 0, %s117
      %s118 = sphi 0, %s115
      %s119 = sphi 0, %s118
      %s135 = sphi 0, %s119
      %s139 = sphi 0, %s139
      %s141 = sphi 0, %s139
      %s142 = sphi 0, %s141
      %s156 = sphi 0, %s142
      %s160 = sphi 0, %s160
      %s162 = sphi 0, %s160
      %s163 = sphi 0, %s162
      %s177 = sphi 0, %s163
      %s181 = sphi 0, %s181
      %s183 = sphi 0, %s181
      %s184 = sphi 0, %s183
      %s198 = sphi 0, %s184
      %s202 = sphi 0, %s202
      %s204 = sphi 0, %s202
      %s205 = sphi 0, %s204
      %s219 = sphi 0, %s205
      %s223 = sphi 0, %s223
      %s225 = sphi 0, %s223
      %s226 = sphi 0, %s225
      %s240 = sphi 0, %s226
      %s244 = sphi 0, %s244
      %s246 = sphi 0, %s244
      %s247 = sphi 0, %s246
      %s261 = sphi 0, %s247
      %s265 = sphi 0, %s265
      %s267 = sphi 0, %s265
      %s268 = sphi 0, %s267
      %s282 = sphi 0, %s268
      %s286 = sphi 0, %s286
      %s288 = sphi 0, %s286
      %s289 = sphi 0, %s288
      %s303 = sphi 0, %s289
      %s307 = sphi 0, %s307
      %s309 = sphi 0, %s307
      %s310 = sphi 0, %s309
      %s324 = sphi 0, %s310
      %s328 = sphi 0, %s328
      %s330 = sphi 0, %s328
      %s331 = sphi 0, %s330
      %s345 = sphi 0, %s331
      %s349 = sphi 0, %s349
      %s351 = sphi 0, %s349
      %s352 = sphi 0, %s351
      %s366 = sphi 0, %s352
      %s370 = sphi 0, %s370
      %s372 = sphi 0, %s370
      %s373 = sphi 0, %s372
      %s387 = sphi 0, %s373
      %s391 = sphi 0, %s391
      %s393 = sphi 0, %s391
      %s394 = sphi 0, %s393
      %s408 = sphi 0, %s394
      %s412 = sphi 0, %s412
      %s414 = sphi 0, %s412
      %s415 = sphi 0, %s414
      %s429 = sphi 0, %s415
      %s437 = sphi 0, %s439
      %s440 = sphi 0, %s437
      %s441 = sphi 0, %s440
      %s457 = sphi 0, %s441
    $region4: #{tpu_custom_call.1} parent=1 // loop_header_branch
      %42 = sbr.rel (%p40) target = $region8
    $region5: #{tpu_custom_call.1} parent=1 // loop_body
      %s44 = ssub.s32 %s39, 1
      %s45 = ssub.s32 %s39, 2
      %s52 = sadd.s32 1, %s47
      %p53 = scmp.ge.s32.totalorder %s52, 2
      %s54 = scalar_select %p53, 0, %s52
      %s55 = sadd.s32 1, %s46
      %s56 = scalar_select %p53, %s55, %s46
      %p57 = scmp.ge.s32.totalorder %s56, 2
      %s58 = scalar_select %p57, 0, %s56
      %s59 = ssub.s32 %s46, %s58
      %s60 = ssub.s32 %s47, %s54
      %s61 = sor.u32 %s59, %s60
      %p62 = scmp.eq.s32.totalorder %s61, 0
      %s64 = sadd.s32 %s63, 1
      %s65 = scalar_select %p62, %s63, %s64
      %p68 = pneg %p62
      %p69 = scmp.eq.s32.totalorder %s39, 3
      %p70 = por %p68, %p69
      %p71 = scmp.ne.s32.totalorder %s63, %s66
      %p72 = scmp.eq.s32.totalorder %s39, 0
      %p73 = por %p71, %p72
      %p74 = scmp.ne.s32.totalorder %s63, %s66
      %p75 = scmp.eq.s32.totalorder %s44, 3
      %p76 = por %p74, %p75
      %p77 = scmp.ne.s32.totalorder %s66, %s67
      %p78 = scmp.eq.s32.totalorder %s44, 0
      %p79 = por %p77, %p78
      %p80 = scmp.ne.s32.totalorder %s66, %s67
      %p81 = scmp.eq.s32.totalorder %s45, 3
      %p82 = por %p80, %p81
      %p84 = scmp.ne.s32.totalorder %s67, %s83
      %p85 = scmp.eq.s32.totalorder %s45, 0
      %p86 = por %p84, %p85
      %s87 = ssub.s32 %s46, %s58
      %p88 = scmp.eq.s32.totalorder %s87, 0
      %s90 = sadd.s32 %s89, 1
      %s91 = scalar_select %p88, %s89, %s90
      %p94 = pneg %p88
      %p95 = scmp.eq.s32.totalorder %s39, 3
      %p96 = por %p94, %p95
      %p97 = scmp.ne.s32.totalorder %s89, %s92
      %p98 = scmp.eq.s32.totalorder %s39, 0
      %p99 = por %p97, %p98
      %p100 = scmp.ne.s32.totalorder %s89, %s92
      %p101 = scmp.eq.s32.totalorder %s44, 3
      %p102 = por %p100, %p101
      %p103 = scmp.ne.s32.totalorder %s92, %s93
      %p104 = scmp.eq.s32.totalorder %s44, 0
      %p105 = por %p103, %p104
      %p106 = scmp.ne.s32.totalorder %s92, %s93
      %p107 = scmp.eq.s32.totalorder %s45, 3
      %p108 = por %p106, %p107
      %p110 = scmp.ne.s32.totalorder %s93, %s109
      %p111 = scmp.eq.s32.totalorder %s45, 0
      %p112 = por %p110, %p111
      %s113 = ssub.s32 %s46, %s58
      %p114 = scmp.eq.s32.totalorder %s113, 0
      %s116 = sadd.s32 %s115, 1
      %s117 = scalar_select %p114, %s115, %s116
      %p120 = pneg %p114
      %p121 = scmp.eq.s32.totalorder %s39, 3
      %p122 = por %p120, %p121
      %p123 = scmp.ne.s32.totalorder %s115, %s118
      %p124 = scmp.eq.s32.totalorder %s39, 0
      %p125 = por %p123, %p124
      %p126 = scmp.ne.s32.totalorder %s115, %s118
      %p127 = scmp.eq.s32.totalorder %s44, 3
      %p128 = por %p126, %p127
      %p129 = scmp.ne.s32.totalorder %s118, %s119
      %p130 = scmp.eq.s32.totalorder %s44, 0
      %p131 = por %p129, %p130
      %p132 = scmp.ne.s32.totalorder %s118, %s119
      %p133 = scmp.eq.s32.totalorder %s45, 3
      %p134 = por %p132, %p133
      %p136 = scmp.ne.s32.totalorder %s119, %s135
      %p137 = scmp.eq.s32.totalorder %s45, 0
      %p138 = por %p136, %p137
      %s140 = sadd.s32 %s139, 1
      %p143 = scmp.eq.s32.totalorder %s39, 3
      %p144 = scmp.ne.s32.totalorder %s139, %s141
      %p145 = scmp.eq.s32.totalorder %s39, 0
      %p146 = por %p144, %p145
      %p147 = scmp.ne.s32.totalorder %s139, %s141
      %p148 = scmp.eq.s32.totalorder %s44, 3
      %p149 = por %p147, %p148
      %p150 = scmp.ne.s32.totalorder %s141, %s142
      %p151 = scmp.eq.s32.totalorder %s44, 0
      %p152 = por %p150, %p151
      %p153 = scmp.ne.s32.totalorder %s141, %s142
      %p154 = scmp.eq.s32.totalorder %s45, 3
      %p155 = por %p153, %p154
      %p157 = scmp.ne.s32.totalorder %s142, %s156
      %p158 = scmp.eq.s32.totalorder %s45, 0
      %p159 = por %p157, %p158
      %s161 = sadd.s32 %s160, 1
      %p164 = scmp.eq.s32.totalorder %s39, 3
      %p165 = scmp.ne.s32.totalorder %s160, %s162
      %p166 = scmp.eq.s32.totalorder %s39, 0
      %p167 = por %p165, %p166
      %p168 = scmp.ne.s32.totalorder %s160, %s162
      %p169 = scmp.eq.s32.totalorder %s44, 3
      %p170 = por %p168, %p169
      %p171 = scmp.ne.s32.totalorder %s162, %s163
      %p172 = scmp.eq.s32.totalorder %s44, 0
      %p173 = por %p171, %p172
      %p174 = scmp.ne.s32.totalorder %s162, %s163
      %p175 = scmp.eq.s32.totalorder %s45, 3
      %p176 = por %p174, %p175
      %p178 = scmp.ne.s32.totalorder %s163, %s177
      %p179 = scmp.eq.s32.totalorder %s45, 0
      %p180 = por %p178, %p179
      %s182 = sadd.s32 %s181, 1
      %p185 = scmp.eq.s32.totalorder %s39, 3
      %p186 = scmp.ne.s32.totalorder %s181, %s183
      %p187 = scmp.eq.s32.totalorder %s39, 0
      %p188 = por %p186, %p187
      %p189 = scmp.ne.s32.totalorder %s181, %s183
      %p190 = scmp.eq.s32.totalorder %s44, 3
      %p191 = por %p189, %p190
      %p192 = scmp.ne.s32.totalorder %s183, %s184
      %p193 = scmp.eq.s32.totalorder %s44, 0
      %p194 = por %p192, %p193
      %p195 = scmp.ne.s32.totalorder %s183, %s184
      %p196 = scmp.eq.s32.totalorder %s45, 3
      %p197 = por %p195, %p196
      %p199 = scmp.ne.s32.totalorder %s184, %s198
      %p200 = scmp.eq.s32.totalorder %s45, 0
      %p201 = por %p199, %p200
      %s203 = sadd.s32 %s202, 1
      %p206 = scmp.eq.s32.totalorder %s39, 3
      %p207 = scmp.ne.s32.totalorder %s202, %s204
      %p208 = scmp.eq.s32.totalorder %s39, 0
      %p209 = por %p207, %p208
      %p210 = scmp.ne.s32.totalorder %s202, %s204
      %p211 = scmp.eq.s32.totalorder %s44, 3
      %p212 = por %p210, %p211
      %p213 = scmp.ne.s32.totalorder %s204, %s205
      %p214 = scmp.eq.s32.totalorder %s44, 0
      %p215 = por %p213, %p214
      %p216 = scmp.ne.s32.totalorder %s204, %s205
      %p217 = scmp.eq.s32.totalorder %s45, 3
      %p218 = por %p216, %p217
      %p220 = scmp.ne.s32.totalorder %s205, %s219
      %p221 = scmp.eq.s32.totalorder %s45, 0
      %p222 = por %p220, %p221
      %s224 = sadd.s32 %s223, 1
      %p227 = scmp.eq.s32.totalorder %s39, 3
      %p228 = scmp.ne.s32.totalorder %s223, %s225
      %p229 = scmp.eq.s32.totalorder %s39, 0
      %p230 = por %p228, %p229
      %p231 = scmp.ne.s32.totalorder %s223, %s225
      %p232 = scmp.eq.s32.totalorder %s44, 3
      %p233 = por %p231, %p232
      %p234 = scmp.ne.s32.totalorder %s225, %s226
      %p235 = scmp.eq.s32.totalorder %s44, 0
      %p236 = por %p234, %p235
      %p237 = scmp.ne.s32.totalorder %s225, %s226
      %p238 = scmp.eq.s32.totalorder %s45, 3
      %p239 = por %p237, %p238
      %p241 = scmp.ne.s32.totalorder %s226, %s240
      %p242 = scmp.eq.s32.totalorder %s45, 0
      %p243 = por %p241, %p242
      %s245 = sadd.s32 %s244, 1
      %p248 = scmp.eq.s32.totalorder %s39, 3
      %p249 = scmp.ne.s32.totalorder %s244, %s246
      %p250 = scmp.eq.s32.totalorder %s39, 0
      %p251 = por %p249, %p250
      %p252 = scmp.ne.s32.totalorder %s244, %s246
      %p253 = scmp.eq.s32.totalorder %s44, 3
      %p254 = por %p252, %p253
      %p255 = scmp.ne.s32.totalorder %s246, %s247
      %p256 = scmp.eq.s32.totalorder %s44, 0
      %p257 = por %p255, %p256
      %p258 = scmp.ne.s32.totalorder %s246, %s247
      %p259 = scmp.eq.s32.totalorder %s45, 3
      %p260 = por %p258, %p259
      %p262 = scmp.ne.s32.totalorder %s247, %s261
      %p263 = scmp.eq.s32.totalorder %s45, 0
      %p264 = por %p262, %p263
      %s266 = sadd.s32 %s265, 1
      %p269 = scmp.eq.s32.totalorder %s39, 3
      %p270 = scmp.ne.s32.totalorder %s265, %s267
      %p271 = scmp.eq.s32.totalorder %s39, 0
      %p272 = por %p270, %p271
      %p273 = scmp.ne.s32.totalorder %s265, %s267
      %p274 = scmp.eq.s32.totalorder %s44, 3
      %p275 = por %p273, %p274
      %p276 = scmp.ne.s32.totalorder %s267, %s268
      %p277 = scmp.eq.s32.totalorder %s44, 0
      %p278 = por %p276, %p277
      %p279 = scmp.ne.s32.totalorder %s267, %s268
      %p280 = scmp.eq.s32.totalorder %s45, 3
      %p281 = por %p279, %p280
      %p283 = scmp.ne.s32.totalorder %s268, %s282
      %p284 = scmp.eq.s32.totalorder %s45, 0
      %p285 = por %p283, %p284
      %s287 = sadd.s32 %s286, 1
      %p290 = scmp.eq.s32.totalorder %s39, 3
      %p291 = scmp.ne.s32.totalorder %s286, %s288
      %p292 = scmp.eq.s32.totalorder %s39, 0
      %p293 = por %p291, %p292
      %p294 = scmp.ne.s32.totalorder %s286, %s288
      %p295 = scmp.eq.s32.totalorder %s44, 3
      %p296 = por %p294, %p295
      %p297 = scmp.ne.s32.totalorder %s288, %s289
      %p298 = scmp.eq.s32.totalorder %s44, 0
      %p299 = por %p297, %p298
      %p300 = scmp.ne.s32.totalorder %s288, %s289
      %p301 = scmp.eq.s32.totalorder %s45, 3
      %p302 = por %p300, %p301
      %p304 = scmp.ne.s32.totalorder %s289, %s303
      %p305 = scmp.eq.s32.totalorder %s45, 0
      %p306 = por %p304, %p305
      %s308 = sadd.s32 %s307, 1
      %p311 = scmp.eq.s32.totalorder %s39, 3
      %p312 = scmp.ne.s32.totalorder %s307, %s309
      %p313 = scmp.eq.s32.totalorder %s39, 0
      %p314 = por %p312, %p313
      %p315 = scmp.ne.s32.totalorder %s307, %s309
      %p316 = scmp.eq.s32.totalorder %s44, 3
      %p317 = por %p315, %p316
      %p318 = scmp.ne.s32.totalorder %s309, %s310
      %p319 = scmp.eq.s32.totalorder %s44, 0
      %p320 = por %p318, %p319
      %p321 = scmp.ne.s32.totalorder %s309, %s310
      %p322 = scmp.eq.s32.totalorder %s45, 3
      %p323 = por %p321, %p322
      %p325 = scmp.ne.s32.totalorder %s310, %s324
      %p326 = scmp.eq.s32.totalorder %s45, 0
      %p327 = por %p325, %p326
      %s329 = sadd.s32 %s328, 1
      %p332 = scmp.eq.s32.totalorder %s39, 3
      %p333 = scmp.ne.s32.totalorder %s328, %s330
      %p334 = scmp.eq.s32.totalorder %s39, 0
      %p335 = por %p333, %p334
      %p336 = scmp.ne.s32.totalorder %s328, %s330
      %p337 = scmp.eq.s32.totalorder %s44, 3
      %p338 = por %p336, %p337
      %p339 = scmp.ne.s32.totalorder %s330, %s331
      %p340 = scmp.eq.s32.totalorder %s44, 0
      %p341 = por %p339, %p340
      %p342 = scmp.ne.s32.totalorder %s330, %s331
      %p343 = scmp.eq.s32.totalorder %s45, 3
      %p344 = por %p342, %p343
      %p346 = scmp.ne.s32.totalorder %s331, %s345
      %p347 = scmp.eq.s32.totalorder %s45, 0
      %p348 = por %p346, %p347
      %s350 = sadd.s32 %s349, 1
      %p353 = scmp.eq.s32.totalorder %s39, 3
      %p354 = scmp.ne.s32.totalorder %s349, %s351
      %p355 = scmp.eq.s32.totalorder %s39, 0
      %p356 = por %p354, %p355
      %p357 = scmp.ne.s32.totalorder %s349, %s351
      %p358 = scmp.eq.s32.totalorder %s44, 3
      %p359 = por %p357, %p358
      %p360 = scmp.ne.s32.totalorder %s351, %s352
      %p361 = scmp.eq.s32.totalorder %s44, 0
      %p362 = por %p360, %p361
      %p363 = scmp.ne.s32.totalorder %s351, %s352
      %p364 = scmp.eq.s32.totalorder %s45, 3
      %p365 = por %p363, %p364
      %p367 = scmp.ne.s32.totalorder %s352, %s366
      %p368 = scmp.eq.s32.totalorder %s45, 0
      %p369 = por %p367, %p368
      %s371 = sadd.s32 %s370, 1
      %p374 = scmp.eq.s32.totalorder %s39, 3
      %p375 = scmp.ne.s32.totalorder %s370, %s372
      %p376 = scmp.eq.s32.totalorder %s39, 0
      %p377 = por %p375, %p376
      %p378 = scmp.ne.s32.totalorder %s370, %s372
      %p379 = scmp.eq.s32.totalorder %s44, 3
      %p380 = por %p378, %p379
      %p381 = scmp.ne.s32.totalorder %s372, %s373
      %p382 = scmp.eq.s32.totalorder %s44, 0
      %p383 = por %p381, %p382
      %p384 = scmp.ne.s32.totalorder %s372, %s373
      %p385 = scmp.eq.s32.totalorder %s45, 3
      %p386 = por %p384, %p385
      %p388 = scmp.ne.s32.totalorder %s373, %s387
      %p389 = scmp.eq.s32.totalorder %s45, 0
      %p390 = por %p388, %p389
      %s392 = sadd.s32 %s391, 1
      %p395 = scmp.eq.s32.totalorder %s39, 3
      %p396 = scmp.ne.s32.totalorder %s391, %s393
      %p397 = scmp.eq.s32.totalorder %s39, 0
      %p398 = por %p396, %p397
      %p399 = scmp.ne.s32.totalorder %s391, %s393
      %p400 = scmp.eq.s32.totalorder %s44, 3
      %p401 = por %p399, %p400
      %p402 = scmp.ne.s32.totalorder %s393, %s394
      %p403 = scmp.eq.s32.totalorder %s44, 0
      %p404 = por %p402, %p403
      %p405 = scmp.ne.s32.totalorder %s393, %s394
      %p406 = scmp.eq.s32.totalorder %s45, 3
      %p407 = por %p405, %p406
      %p409 = scmp.ne.s32.totalorder %s394, %s408
      %p410 = scmp.eq.s32.totalorder %s45, 0
      %p411 = por %p409, %p410
      %s413 = sadd.s32 %s412, 1
      %p416 = scmp.eq.s32.totalorder %s39, 3
      %p417 = scmp.ne.s32.totalorder %s412, %s414
      %p418 = scmp.eq.s32.totalorder %s39, 0
      %p419 = por %p417, %p418
      %p420 = scmp.ne.s32.totalorder %s412, %s414
      %p421 = scmp.eq.s32.totalorder %s44, 3
      %p422 = por %p420, %p421
      %p423 = scmp.ne.s32.totalorder %s414, %s415
      %p424 = scmp.eq.s32.totalorder %s44, 0
      %p425 = por %p423, %p424
      %p426 = scmp.ne.s32.totalorder %s414, %s415
      %p427 = scmp.eq.s32.totalorder %s45, 3
      %p428 = por %p426, %p427
      %p430 = scmp.ne.s32.totalorder %s415, %s429
      %p431 = scmp.eq.s32.totalorder %s45, 0
      %p432 = por %p430, %p431
      %s433 = ssub.s32 %s46, %s58
      %s434 = ssub.s32 %s47, %s54
      %s435 = sor.u32 %s433, %s434
      %p436 = scmp.eq.s32.totalorder %s435, 0
      %s438 = sadd.s32 %s437, 1
      %s439 = scalar_select %p436, %s437, %s438
      %p442 = pneg %p436
      %p443 = scmp.eq.s32.totalorder %s39, 3
      %p444 = por %p442, %p443
      %p445 = scmp.ne.s32.totalorder %s437, %s440
      %p446 = scmp.eq.s32.totalorder %s39, 0
      %p447 = por %p445, %p446
      %p448 = scmp.ne.s32.totalorder %s437, %s440
      %p449 = scmp.eq.s32.totalorder %s44, 3
      %p450 = por %p448, %p449
      %p451 = scmp.ne.s32.totalorder %s440, %s441
      %p452 = scmp.eq.s32.totalorder %s44, 0
      %p453 = por %p451, %p452
      %p454 = scmp.ne.s32.totalorder %s440, %s441
      %p455 = scmp.eq.s32.totalorder %s45, 3
      %p456 = por %p454, %p455
      %p458 = scmp.ne.s32.totalorder %s441, %s457
      %p459 = scmp.eq.s32.totalorder %s45, 0
      %p460 = por %p458, %p459
      %p461 = scmp.le.s32.totalorder 1, %s39
      %p462 = scmp.lt.s32.totalorder %s39, 5
      %p463 = pnand %p461, %p462
      %p464 = pneg %p463
      // Predicated region
      $region9: #{tpu_custom_call.1} parent=5 // pred_check
        _
      $region10: #{tpu_custom_call.1} parent=5 // pred_check_branch
        %466 = sbr.rel (%p463) target = $region12
      $region11: #{tpu_custom_call.1} parent=5 // pred_region
        %s467 = ssub.s32 %s39, 1
        // Predicated region
        $region13: #{tpu_custom_call.1} parent=11 // pred_check
          %p468 = pneg %p152
        $region14: #{tpu_custom_call.1} parent=11 // pred_check_branch
          %470 = sbr.rel (%p468) target = $region16
        $region15: #{tpu_custom_call.1} parent=11 // pred_region
          %s472 = ssub.s32 1024, 1024
          %473 = vsyncadd [#allocation12], %s472
          %s474 = sshll.u32 [#allocation11], 4
          %s475 = int_to_ptr.vmem [resolvable:$true] %s474
          %480 = dma.hbm_to_vmem [thread:$0]  %s3, 1024, %s475, [#allocation12], 64, 64, 4
        $region16: #{tpu_custom_call.1} parent=11 // pred_fallthru
          _
        // Predicated region
        $region17: #{tpu_custom_call.1} parent=11 // pred_check
          %p481 = pneg %p173
        $region18: #{tpu_custom_call.1} parent=11 // pred_check_branch
          %483 = sbr.rel (%p481) target = $region20
        $region19: #{tpu_custom_call.1} parent=11 // pred_region
          %s485 = ssub.s32 16, 16
          %486 = vsyncadd [#allocation12], %s485
          %s488 = sshll.u32 [#allocation13], 4
          %s489 = int_to_ptr.vmem [resolvable:$true] %s488
          %491 = dma.hbm_to_vmem [thread:$0]  %s4, 16, %s489, [#allocation12]
        $region20: #{tpu_custom_call.1} parent=11 // pred_fallthru
          _
        // Predicated region
        $region21: #{tpu_custom_call.1} parent=11 // pred_check
          %p492 = pneg %p194
        $region22: #{tpu_custom_call.1} parent=11 // pred_check_branch
          %494 = sbr.rel (%p492) target = $region24
        $region23: #{tpu_custom_call.1} parent=11 // pred_region
          %s496 = ssub.s32 2048, 2048
          %497 = vsyncadd [#allocation15], %s496
          %s498 = sshll.u32 [#allocation14], 4
          %s499 = int_to_ptr.vmem [resolvable:$true] %s498
          %504 = dma.hbm_to_vmem [thread:$0]  %s5, 2048, %s499, [#allocation15], 128, 128, 8
        $region24: #{tpu_custom_call.1} parent=11 // pred_fallthru
          _
        // Predicated region
        $region25: #{tpu_custom_call.1} parent=11 // pred_check
          %p505 = pneg %p215
        $region26: #{tpu_custom_call.1} parent=11 // pred_check_branch
          %507 = sbr.rel (%p505) target = $region28
        $region27: #{tpu_custom_call.1} parent=11 // pred_region
          %s509 = ssub.s32 32, 32
          %510 = vsyncadd [#allocation15], %s509
          %s512 = sshll.u32 [#allocation16], 4
          %s513 = int_to_ptr.vmem [resolvable:$true] %s512
          %515 = dma.hbm_to_vmem [thread:$0]  %s6, 32, %s513, [#allocation15]
        $region28: #{tpu_custom_call.1} parent=11 // pred_fallthru
          _
        // Predicated region
        $region29: #{tpu_custom_call.1} parent=11 // pred_check
          %p516 = pneg %p236
        $region30: #{tpu_custom_call.1} parent=11 // pred_check_branch
          %518 = sbr.rel (%p516) target = $region32
        $region31: #{tpu_custom_call.1} parent=11 // pred_region
          %s520 = ssub.s32 1024, 1024
          %521 = vsyncadd [#allocation18], %s520
          %s522 = sshll.u32 [#allocation17], 4
          %s523 = int_to_ptr.vmem [resolvable:$true] %s522
          %528 = dma.hbm_to_vmem [thread:$0]  %s7, 1024, %s523, [#allocation18], 64, 64, 4
        $region32: #{tpu_custom_call.1} parent=11 // pred_fallthru
          _
        // Predicated region
        $region33: #{tpu_custom_call.1} parent=11 // pred_check
          %p529 = pneg %p257
        $region34: #{tpu_custom_call.1} parent=11 // pred_check_branch
          %531 = sbr.rel (%p529) target = $region36
        $region35: #{tpu_custom_call.1} parent=11 // pred_region
          %s533 = ssub.s32 16, 16
          %534 = vsyncadd [#allocation18], %s533
          %s536 = sshll.u32 [#allocation19], 4
          %s537 = int_to_ptr.vmem [resolvable:$true] %s536
          %539 = dma.hbm_to_vmem [thread:$0]  %s8, 16, %s537, [#allocation18]
        $region36: #{tpu_custom_call.1} parent=11 // pred_fallthru
          _
        // Predicated region
        $region37: #{tpu_custom_call.1} parent=11 // pred_check
          %p540 = pneg %p278
        $region38: #{tpu_custom_call.1} parent=11 // pred_check_branch
          %542 = sbr.rel (%p540) target = $region40
        $region39: #{tpu_custom_call.1} parent=11 // pred_region
          %s544 = ssub.s32 16, 16
          %545 = vsyncadd [#allocation21], %s544
          %s547 = sshll.u32 [#allocation20], 4
          %s548 = int_to_ptr.vmem [resolvable:$true] %s547
          %550 = dma.hbm_to_vmem [thread:$0]  %s9, 16, %s548, [#allocation21]
        $region40: #{tpu_custom_call.1} parent=11 // pred_fallthru
          _
        // Predicated region
        $region41: #{tpu_custom_call.1} parent=11 // pred_check
          %p551 = pneg %p299
        $region42: #{tpu_custom_call.1} parent=11 // pred_check_branch
          %553 = sbr.rel (%p551) target = $region44
        $region43: #{tpu_custom_call.1} parent=11 // pred_region
          %s555 = ssub.s32 16, 16
          %556 = vsyncadd [#allocation21], %s555
          %s558 = sshll.u32 [#allocation22], 4
          %s559 = int_to_ptr.vmem [resolvable:$true] %s558
          %561 = dma.hbm_to_vmem [thread:$0]  %s10, 16, %s559, [#allocation21]
        $region44: #{tpu_custom_call.1} parent=11 // pred_fallthru
          _
        // Predicated region
        $region45: #{tpu_custom_call.1} parent=11 // pred_check
          %p562 = pneg %p320
        $region46: #{tpu_custom_call.1} parent=11 // pred_check_branch
          %564 = sbr.rel (%p562) target = $region48
        $region47: #{tpu_custom_call.1} parent=11 // pred_region
          %s566 = ssub.s32 2048, 2048
          %567 = vsyncadd [#allocation24], %s566
          %s568 = sshll.u32 [#allocation23], 4
          %s569 = int_to_ptr.vmem [resolvable:$true] %s568
          %574 = dma.hbm_to_vmem [thread:$0]  %s11, 2048, %s569, [#allocation24], 128, 128, 8
        $region48: #{tpu_custom_call.1} parent=11 // pred_fallthru
          _
        // Predicated region
        $region49: #{tpu_custom_call.1} parent=11 // pred_check
          %p575 = pneg %p341
        $region50: #{tpu_custom_call.1} parent=11 // pred_check_branch
          %577 = sbr.rel (%p575) target = $region52
        $region51: #{tpu_custom_call.1} parent=11 // pred_region
          %s579 = ssub.s32 32, 32
          %580 = vsyncadd [#allocation24], %s579
          %s582 = sshll.u32 [#allocation25], 4
          %s583 = int_to_ptr.vmem [resolvable:$true] %s582
          %585 = dma.hbm_to_vmem [thread:$0]  %s12, 32, %s583, [#allocation24]
        $region52: #{tpu_custom_call.1} parent=11 // pred_fallthru
          _
        // Predicated region
        $region53: #{tpu_custom_call.1} parent=11 // pred_check
          %p586 = pneg %p362
        $region54: #{tpu_custom_call.1} parent=11 // pred_check_branch
          %588 = sbr.rel (%p586) target = $region56
        $region55: #{tpu_custom_call.1} parent=11 // pred_region
          %s590 = ssub.s32 2048, 2048
          %591 = vsyncadd [#allocation27], %s590
          %s592 = sshll.u32 [#allocation26], 4
          %s593 = int_to_ptr.vmem [resolvable:$true] %s592
          %598 = dma.hbm_to_vmem [thread:$0]  %s13, 2048, %s593, [#allocation27], 64, 64, 4
        $region56: #{tpu_custom_call.1} parent=11 // pred_fallthru
          _
        // Predicated region
        $region57: #{tpu_custom_call.1} parent=11 // pred_check
          %p599 = pneg %p383
        $region58: #{tpu_custom_call.1} parent=11 // pred_check_branch
          %601 = sbr.rel (%p599) target = $region60
        $region59: #{tpu_custom_call.1} parent=11 // pred_region
          %s603 = ssub.s32 16, 16
          %604 = vsyncadd [#allocation27], %s603
          %s606 = sshll.u32 [#allocation28], 4
          %s607 = int_to_ptr.vmem [resolvable:$true] %s606
          %609 = dma.hbm_to_vmem [thread:$0]  %s14, 16, %s607, [#allocation27]
        $region60: #{tpu_custom_call.1} parent=11 // pred_fallthru
          _
        // Predicated region
        $region61: #{tpu_custom_call.1} parent=11 // pred_check
          %p610 = pneg %p404
        $region62: #{tpu_custom_call.1} parent=11 // pred_check_branch
          %612 = sbr.rel (%p610) target = $region64
        $region63: #{tpu_custom_call.1} parent=11 // pred_region
          %s614 = ssub.s32 16, 16
          %615 = vsyncadd [#allocation30], %s614
          %s617 = sshll.u32 [#allocation29], 4
          %s618 = int_to_ptr.vmem [resolvable:$true] %s617
          %620 = dma.hbm_to_vmem [thread:$0]  %s15, 16, %s618, [#allocation30]
        $region64: #{tpu_custom_call.1} parent=11 // pred_fallthru
          _
        // Predicated region
        $region65: #{tpu_custom_call.1} parent=11 // pred_check
          %p621 = pneg %p425
        $region66: #{tpu_custom_call.1} parent=11 // pred_check_branch
          %623 = sbr.rel (%p621) target = $region68
        $region67: #{tpu_custom_call.1} parent=11 // pred_region
          %s625 = ssub.s32 16, 16
          %626 = vsyncadd [#allocation30], %s625
          %s628 = sshll.u32 [#allocation31], 4
          %s629 = int_to_ptr.vmem [resolvable:$true] %s628
          %631 = dma.hbm_to_vmem [thread:$0]  %s16, 16, %s629, [#allocation30]
        $region68: #{tpu_custom_call.1} parent=11 // pred_fallthru
          _
      $region12: #{tpu_custom_call.1} parent=5 // pred_fallthru
        _
      %p632 = scmp.lt.s32.totalorder %s39, 4
      // Predicated region
      $region69: #{tpu_custom_call.1} parent=5 // pred_check
        %p633 = pneg %p632
      $region70: #{tpu_custom_call.1} parent=5 // pred_check_branch
        %635 = sbr.rel (%p633) target = $region72
      $region71: #{tpu_custom_call.1} parent=5 // pred_region
        // Predicated region
        $region73: #{tpu_custom_call.1} parent=71 // pred_check
          %p636 = pneg %p73
        $region74: #{tpu_custom_call.1} parent=71 // pred_check_branch
          %638 = sbr.rel (%p636) target = $region76
        $region75: #{tpu_custom_call.1} parent=71 // pred_region
          %s639 = sand.u32 %s63, 1
          %s640 = scalar_lea.sflag [#allocation6], %s639
          %s641 = sand.u32 %s63, 1
          %s642 = smul.addr %s641, 64
          %s643 = scalar_lea.vmem [#allocation5], %s642
          %s644 = smul.u32 8, %s47
          %s646 = ssub.s32 1024, 1024
          %647 = vsyncadd %s640, %s646
          %s648 = smul.addr %s46, 16
          %s649 = sadd.s32 %s644, %s648
          %s650 = smul.addr %s649, 128
          %s651 = scalar_lea.hbm %s0, %s650
          %s652 = sshll.u32 %s643, 4
          %s653 = int_to_ptr.vmem [resolvable:$true] %s652
          %658 = dma.hbm_to_vmem [thread:$0]  %s651, 1024, %s653, %s640, 128, 128, 8
        $region76: #{tpu_custom_call.1} parent=71 // pred_fallthru
          _
        // Predicated region
        $region77: #{tpu_custom_call.1} parent=71 // pred_check
          %p659 = pneg %p99
        $region78: #{tpu_custom_call.1} parent=71 // pred_check_branch
          %661 = sbr.rel (%p659) target = $region80
        $region79: #{tpu_custom_call.1} parent=71 // pred_region
          %s662 = sand.u32 %s39, 1
          %s663 = scalar_lea.sflag [#allocation9], %s662
          %s664 = sand.u32 %s89, 1
          %s665 = smul.addr %s664, 128
          %s666 = scalar_lea.vmem [#allocation8], %s665
          %s668 = ssub.s32 2048, 2048
          %669 = vsyncadd %s663, %s668
          %s670 = smul.addr %s46, 16
          %s671 = smul.addr %s670, 128
          %s672 = scalar_lea.hbm %s1, %s671
          %s673 = sshll.u32 %s666, 4
          %s674 = int_to_ptr.vmem [resolvable:$true] %s673
          %679 = dma.hbm_to_vmem [thread:$0]  %s672, 2048, %s674, %s663, 128, 128, 8
        $region80: #{tpu_custom_call.1} parent=71 // pred_fallthru
          _
        // Predicated region
        $region81: #{tpu_custom_call.1} parent=71 // pred_check
          %p680 = pneg %p125
        $region82: #{tpu_custom_call.1} parent=71 // pred_check_branch
          %682 = sbr.rel (%p680) target = $region84
        $region83: #{tpu_custom_call.1} parent=71 // pred_region
          %s683 = sand.u32 %s39, 1
          %s684 = scalar_lea.sflag [#allocation9], %s683
          %s685 = sand.u32 %s115, 1
          %s686 = scalar_lea.vmem [#allocation10], %s685
          %s688 = ssub.s32 16, 16
          %689 = vsyncadd %s684, %s688
          %s690 = smul.addr %s46, 16
          %s691 = scalar_lea.hbm %s2, %s690
          %s693 = sshll.u32 %s686, 4
          %s694 = int_to_ptr.vmem [resolvable:$true] %s693
          %696 = dma.hbm_to_vmem [thread:$0]  %s691, 16, %s694, %s684
        $region84: #{tpu_custom_call.1} parent=71 // pred_fallthru
          _
      $region72: #{tpu_custom_call.1} parent=5 // pred_fallthru
        _
      %p697 = scmp.le.s32.totalorder 1, %s39
      %p698 = scmp.lt.s32.totalorder %s39, 5
      %p699 = pnand %p697, %p698
      %p700 = pneg %p699
      // Predicated region
      $region85: #{tpu_custom_call.1} parent=5 // pred_check
        _
      $region86: #{tpu_custom_call.1} parent=5 // pred_check_branch
        %702 = sbr.rel (%p699) target = $region88
      $region87: #{tpu_custom_call.1} parent=5 // pred_region
        %s703 = ssub.s32 %s39, 1
        %s704 = sand.u32 %s66, 1
        %s705 = scalar_lea.sflag [#allocation6], %s704
        %s706 = sand.u32 %s66, 1
        %s707 = smul.addr %s706, 64
        %s708 = scalar_lea.vmem [#allocation5], %s707
        // Predicated region
        $region89: #{tpu_custom_call.1} parent=87 // pred_check
          %p709 = pneg %p79
        $region90: #{tpu_custom_call.1} parent=87 // pred_check_branch
          %711 = sbr.rel (%p709) target = $region92
        $region91: #{tpu_custom_call.1} parent=87 // pred_region
          %712 = dma.done %s705, 1024
        $region92: #{tpu_custom_call.1} parent=87 // pred_fallthru
          _
        %s713 = sand.u32 %s44, 1
        %s714 = scalar_lea.sflag [#allocation9], %s713
        %s715 = sand.u32 %s92, 1
        %s716 = smul.addr %s715, 128
        %s717 = scalar_lea.vmem [#allocation8], %s716
        // Predicated region
        $region93: #{tpu_custom_call.1} parent=87 // pred_check
          %p718 = pneg %p105
        $region94: #{tpu_custom_call.1} parent=87 // pred_check_branch
          %720 = sbr.rel (%p718) target = $region96
        $region95: #{tpu_custom_call.1} parent=87 // pred_region
          %721 = dma.done %s714, 2048
        $region96: #{tpu_custom_call.1} parent=87 // pred_fallthru
          _
        %s722 = sand.u32 %s44, 1
        %s723 = scalar_lea.sflag [#allocation9], %s722
        %s724 = sand.u32 %s118, 1
        %s725 = scalar_lea.vmem [#allocation10], %s724
        // Predicated region
        $region97: #{tpu_custom_call.1} parent=87 // pred_check
          %p726 = pneg %p131
        $region98: #{tpu_custom_call.1} parent=87 // pred_check_branch
          %728 = sbr.rel (%p726) target = $region100
        $region99: #{tpu_custom_call.1} parent=87 // pred_region
          %729 = dma.done %s723, 16
        $region100: #{tpu_custom_call.1} parent=87 // pred_fallthru
          _
        // Predicated region
        $region101: #{tpu_custom_call.1} parent=87 // pred_check
          %p730 = pneg %p152
        $region102: #{tpu_custom_call.1} parent=87 // pred_check_branch
          %732 = sbr.rel (%p730) target = $region104
        $region103: #{tpu_custom_call.1} parent=87 // pred_region
          %733 = dma.done [#allocation12], 1024
        $region104: #{tpu_custom_call.1} parent=87 // pred_fallthru
          _
        // Predicated region
        $region105: #{tpu_custom_call.1} parent=87 // pred_check
          %p734 = pneg %p173
        $region106: #{tpu_custom_call.1} parent=87 // pred_check_branch
          %736 = sbr.rel (%p734) target = $region108
        $region107: #{tpu_custom_call.1} parent=87 // pred_region
          %737 = dma.done [#allocation12], 16
        $region108: #{tpu_custom_call.1} parent=87 // pred_fallthru
          _
        // Predicated region
        $region109: #{tpu_custom_call.1} parent=87 // pred_check
          %p738 = pneg %p194
        $region110: #{tpu_custom_call.1} parent=87 // pred_check_branch
          %740 = sbr.rel (%p738) target = $region112
        $region111: #{tpu_custom_call.1} parent=87 // pred_region
          %741 = dma.done [#allocation15], 2048
        $region112: #{tpu_custom_call.1} parent=87 // pred_fallthru
          _
        // Predicated region
        $region113: #{tpu_custom_call.1} parent=87 // pred_check
          %p742 = pneg %p215
        $region114: #{tpu_custom_call.1} parent=87 // pred_check_branch
          %744 = sbr.rel (%p742) target = $region116
        $region115: #{tpu_custom_call.1} parent=87 // pred_region
          %745 = dma.done [#allocation15], 32
        $region116: #{tpu_custom_call.1} parent=87 // pred_fallthru
          _
        // Predicated region
        $region117: #{tpu_custom_call.1} parent=87 // pred_check
          %p746 = pneg %p236
        $region118: #{tpu_custom_call.1} parent=87 // pred_check_branch
          %748 = sbr.rel (%p746) target = $region120
        $region119: #{tpu_custom_call.1} parent=87 // pred_region
          %749 = dma.done [#allocation18], 1024
        $region120: #{tpu_custom_call.1} parent=87 // pred_fallthru
          _
        // Predicated region
        $region121: #{tpu_custom_call.1} parent=87 // pred_check
          %p750 = pneg %p257
        $region122: #{tpu_custom_call.1} parent=87 // pred_check_branch
          %752 = sbr.rel (%p750) target = $region124
        $region123: #{tpu_custom_call.1} parent=87 // pred_region
          %753 = dma.done [#allocation18], 16
        $region124: #{tpu_custom_call.1} parent=87 // pred_fallthru
          _
        // Predicated region
        $region125: #{tpu_custom_call.1} parent=87 // pred_check
          %p754 = pneg %p278
        $region126: #{tpu_custom_call.1} parent=87 // pred_check_branch
          %756 = sbr.rel (%p754) target = $region128
        $region127: #{tpu_custom_call.1} parent=87 // pred_region
          %757 = dma.done [#allocation21], 16
        $region128: #{tpu_custom_call.1} parent=87 // pred_fallthru
          _
        // Predicated region
        $region129: #{tpu_custom_call.1} parent=87 // pred_check
          %p758 = pneg %p299
        $region130: #{tpu_custom_call.1} parent=87 // pred_check_branch
          %760 = sbr.rel (%p758) target = $region132
        $region131: #{tpu_custom_call.1} parent=87 // pred_region
          %761 = dma.done [#allocation21], 16
        $region132: #{tpu_custom_call.1} parent=87 // pred_fallthru
          _
        // Predicated region
        $region133: #{tpu_custom_call.1} parent=87 // pred_check
          %p762 = pneg %p320
        $region134: #{tpu_custom_call.1} parent=87 // pred_check_branch
          %764 = sbr.rel (%p762) target = $region136
        $region135: #{tpu_custom_call.1} parent=87 // pred_region
          %765 = dma.done [#allocation24], 2048
        $region136: #{tpu_custom_call.1} parent=87 // pred_fallthru
          _
        // Predicated region
        $region137: #{tpu_custom_call.1} parent=87 // pred_check
          %p766 = pneg %p341
        $region138: #{tpu_custom_call.1} parent=87 // pred_check_branch
          %768 = sbr.rel (%p766) target = $region140
        $region139: #{tpu_custom_call.1} parent=87 // pred_region
          %769 = dma.done [#allocation24], 32
        $region140: #{tpu_custom_call.1} parent=87 // pred_fallthru
          _
        // Predicated region
        $region141: #{tpu_custom_call.1} parent=87 // pred_check
          %p770 = pneg %p362
        $region142: #{tpu_custom_call.1} parent=87 // pred_check_branch
          %772 = sbr.rel (%p770) target = $region144
        $region143: #{tpu_custom_call.1} parent=87 // pred_region
          %773 = dma.done [#allocation27], 2048
        $region144: #{tpu_custom_call.1} parent=87 // pred_fallthru
          _
        // Predicated region
        $region145: #{tpu_custom_call.1} parent=87 // pred_check
          %p774 = pneg %p383
        $region146: #{tpu_custom_call.1} parent=87 // pred_check_branch
          %776 = sbr.rel (%p774) target = $region148
        $region147: #{tpu_custom_call.1} parent=87 // pred_region
          %777 = dma.done [#allocation27], 16
        $region148: #{tpu_custom_call.1} parent=87 // pred_fallthru
          _
        // Predicated region
        $region149: #{tpu_custom_call.1} parent=87 // pred_check
          %p778 = pneg %p404
        $region150: #{tpu_custom_call.1} parent=87 // pred_check_branch
          %780 = sbr.rel (%p778) target = $region152
        $region151: #{tpu_custom_call.1} parent=87 // pred_region
          %781 = dma.done [#allocation30], 16
        $region152: #{tpu_custom_call.1} parent=87 // pred_fallthru
          _
        // Predicated region
        $region153: #{tpu_custom_call.1} parent=87 // pred_check
          %p782 = pneg %p425
        $region154: #{tpu_custom_call.1} parent=87 // pred_check_branch
          %784 = sbr.rel (%p782) target = $region156
        $region155: #{tpu_custom_call.1} parent=87 // pred_region
          %785 = dma.done [#allocation30], 16
        $region156: #{tpu_custom_call.1} parent=87 // pred_fallthru
          _
        %s786 = sand.u32 %s66, 1
        %s787 = scalar_lea.sflag [#allocation6], %s786
        %s788 = sand.u32 %s66, 1
        %s789 = smul.addr %s788, 64
        %s790 = scalar_lea.vmem [#allocation5], %s789
        %p791 = pneg %p79
        %p792 = pneg %p76
        %s793 = sand.u32 %s44, 1
        %s794 = scalar_lea.sflag [#allocation9], %s793
        %s795 = sand.u32 %s92, 1
        %s796 = smul.addr %s795, 128
        %s797 = scalar_lea.vmem [#allocation8], %s796
        %p798 = pneg %p105
        %p799 = pneg %p102
        %s800 = sand.u32 %s44, 1
        %s801 = scalar_lea.sflag [#allocation9], %s800
        %s802 = sand.u32 %s118, 1
        %s803 = scalar_lea.vmem [#allocation10], %s802
        %p804 = pneg %p131
        %p805 = pneg %p128
        %p806 = pneg %p152
        %p807 = pneg %p149
        %p808 = pneg %p173
        %p809 = pneg %p170
        %p810 = pneg %p194
        %p811 = pneg %p191
        %p812 = pneg %p215
        %p813 = pneg %p212
        %p814 = pneg %p236
        %p815 = pneg %p233
        %p816 = pneg %p257
        %p817 = pneg %p254
        %p818 = pneg %p278
        %p819 = pneg %p275
        %p820 = pneg %p299
        %p821 = pneg %p296
        %p822 = pneg %p320
        %p823 = pneg %p317
        %p824 = pneg %p341
        %p825 = pneg %p338
        %p826 = pneg %p362
        %p827 = pneg %p359
        %p828 = pneg %p383
        %p829 = pneg %p380
        %p830 = pneg %p404
        %p831 = pneg %p401
        %p832 = pneg %p425
        %p833 = pneg %p422
        %p834 = pneg %p453
        %p835 = pneg %p450
        %s836 = sand.u32 %s440, 1
        %s837 = scalar_lea.sflag [#allocation7], %s836
        %s838 = sand.u32 %s440, 1
        %s839 = smul.addr %s838, 64
        %s840 = scalar_lea.vmem [#allocation32], %s839
        %s841 = smul.u32 8, %s49
        %s842 = smul.u32 8, %s49
        %v844 = vld [vmem:[%s708] sm:$0xff]
        %v845 = vld [vmem:[%s708 + $0x8] sm:$0xff]
        %v846 = vld [vmem:[%s708 + $0x10] sm:$0xff]
        %v847 = vld [vmem:[%s708 + $0x18] sm:$0xff]
        %v848 = vld [vmem:[%s708 + $0x20] sm:$0xff]
        %v849 = vld [vmem:[%s708 + $0x28] sm:$0xff]
        %v850 = vld [vmem:[%s708 + $0x30] sm:$0xff]
        %v851 = vld [vmem:[%s708 + $0x38] sm:$0xff]
        %v852 = vld [vmem:[%s717] sm:$0xff]
        %v853 = vld [vmem:[%s717 + $0x8] sm:$0xff]
        %v854 = vld [vmem:[%s717 + $0x10] sm:$0xff]
        %v855 = vld [vmem:[%s717 + $0x18] sm:$0xff]
        %v856 = vld [vmem:[%s717 + $0x20] sm:$0xff]
        %v857 = vld [vmem:[%s717 + $0x28] sm:$0xff]
        %v858 = vld [vmem:[%s717 + $0x30] sm:$0xff]
        %v859 = vld [vmem:[%s717 + $0x38] sm:$0xff]
        %v860 = vld [vmem:[%s717 + $0x40] sm:$0xff]
        %v861 = vld [vmem:[%s717 + $0x48] sm:$0xff]
        %v862 = vld [vmem:[%s717 + $0x50] sm:$0xff]
        %v863 = vld [vmem:[%s717 + $0x58] sm:$0xff]
        %v864 = vld [vmem:[%s717 + $0x60] sm:$0xff]
        %v865 = vld [vmem:[%s717 + $0x68] sm:$0xff]
        %v866 = vld [vmem:[%s717 + $0x70] sm:$0xff]
        %v867 = vld [vmem:[%s717 + $0x78] sm:$0xff]
        %v868 = vld [vmem:[#allocation20] sm:$0x1]
        %v869 = vld [vmem:[#allocation22] sm:$0x1]
        %870 = vadd.xlane.f32.xlu0 %v844
        %v871 = vpop.xlane.xlu0 %870
        %872 = vadd.xlane.f32.xlu0 %v845
        %v873 = vpop.xlane.xlu0 %872
        %874 = vadd.xlane.f32.xlu0 %v846
        %v875 = vpop.xlane.xlu0 %874
        %876 = vadd.xlane.f32.xlu0 %v847
        %v877 = vpop.xlane.xlu0 %876
        %878 = vadd.xlane.f32.xlu0 %v848
        %v879 = vpop.xlane.xlu0 %878
        %880 = vadd.xlane.f32.xlu0 %v849
        %v881 = vpop.xlane.xlu0 %880
        %882 = vadd.xlane.f32.xlu0 %v850
        %v883 = vpop.xlane.xlu0 %882
        %884 = vadd.xlane.f32.xlu0 %v851
        %v885 = vpop.xlane.xlu0 %884
        %v886 = vrcp.pop 128.0
        %v887 = vmul.f32 %v871, %v886
        %v888 = vmul.f32 %v873, %v886
        %v889 = vmul.f32 %v875, %v886
        %v890 = vmul.f32 %v877, %v886
        %v891 = vmul.f32 %v879, %v886
        %v892 = vmul.f32 %v881, %v886
        %v893 = vmul.f32 %v883, %v886
        %v894 = vmul.f32 %v885, %v886
        %v895 = vsub.f32 %v844, %v887
        %v896 = vsub.f32 %v845, %v888
        %v897 = vsub.f32 %v846, %v889
        %v898 = vsub.f32 %v847, %v890
        %v899 = vsub.f32 %v848, %v891
        %v900 = vsub.f32 %v849, %v892
        %v901 = vsub.f32 %v850, %v893
        %v902 = vsub.f32 %v851, %v894
        %v903 = vmul.f32 %v895, %v895
        %v904 = vmul.f32 %v896, %v896
        %v905 = vmul.f32 %v897, %v897
        %v906 = vmul.f32 %v898, %v898
        %v907 = vmul.f32 %v899, %v899
        %v908 = vmul.f32 %v900, %v900
        %v909 = vmul.f32 %v901, %v901
        %v910 = vmul.f32 %v902, %v902
        %911 = vadd.xlane.f32.xlu0 %v903
        %v912 = vpop.xlane.xlu0 %911
        %913 = vadd.xlane.f32.xlu0 %v904
        %v914 = vpop.xlane.xlu0 %913
        %915 = vadd.xlane.f32.xlu0 %v905
        %v916 = vpop.xlane.xlu0 %915
        %917 = vadd.xlane.f32.xlu0 %v906
        %v918 = vpop.xlane.xlu0 %917
        %919 = vadd.xlane.f32.xlu0 %v907
        %v920 = vpop.xlane.xlu0 %919
        %921 = vadd.xlane.f32.xlu0 %v908
        %v922 = vpop.xlane.xlu0 %921
        %923 = vadd.xlane.f32.xlu0 %v909
        %v924 = vpop.xlane.xlu0 %923
        %925 = vadd.xlane.f32.xlu0 %v910
        %v926 = vpop.xlane.xlu0 %925
        %v927 = vmul.f32 %v912, %v886
        %v928 = vmul.f32 %v914, %v886
        %v929 = vmul.f32 %v916, %v886
        %v930 = vmul.f32 %v918, %v886
        %v931 = vmul.f32 %v920, %v886
        %v932 = vmul.f32 %v922, %v886
        %v933 = vmul.f32 %v924, %v886
        %v934 = vmul.f32 %v926, %v886
        %v935 = vadd.f32 %v927, 1e-06
        %v936 = vadd.f32 %v928, 1e-06
        %v937 = vadd.f32 %v929, 1e-06
        %v938 = vadd.f32 %v930, 1e-06
        %v939 = vadd.f32 %v931, 1e-06
        %v940 = vadd.f32 %v932, 1e-06
        %v941 = vadd.f32 %v933, 1e-06
        %v942 = vadd.f32 %v934, 1e-06
        %v943 = vrsqrt.pop %v935
        %v944 = vrsqrt.pop %v936
        %v945 = vrsqrt.pop %v937
        %v946 = vrsqrt.pop %v938
        %v947 = vrsqrt.pop %v939
        %v948 = vrsqrt.pop %v940
        %v949 = vrsqrt.pop %v941
        %v950 = vrsqrt.pop %v942
        %v951 = vmul.f32 %v895, %v943
        %v952 = vmul.f32 %v896, %v944
        %v953 = vmul.f32 %v897, %v945
        %v954 = vmul.f32 %v898, %v946
        %v955 = vmul.f32 %v899, %v947
        %v956 = vmul.f32 %v900, %v948
        %v957 = vmul.f32 %v901, %v949
        %v958 = vmul.f32 %v902, %v950
        %v960 = vlaneseq
        %v961 = vshrl.u32 %v960, 7
        %v962 = vsub.s32 0, %v961
        %v963 = vrot.slane %v868, %v962
        %v965 = vmul.f32 %v951, %v963
        %v966 = vmul.f32 %v952, %v963
        %v967 = vmul.f32 %v953, %v963
        %v968 = vmul.f32 %v954, %v963
        %v969 = vmul.f32 %v955, %v963
        %v970 = vmul.f32 %v956, %v963
        %v971 = vmul.f32 %v957, %v963
        %v972 = vmul.f32 %v958, %v963
        %v974 = vlaneseq
        %v975 = vshrl.u32 %v974, 7
        %v976 = vsub.s32 0, %v975
        %v977 = vrot.slane %v869, %v976
        %v979 = vadd.f32 %v965, %v977
        %v980 = vadd.f32 %v966, %v977
        %v981 = vadd.f32 %v967, %v977
        %v982 = vadd.f32 %v968, %v977
        %v983 = vadd.f32 %v969, %v977
        %v984 = vadd.f32 %v970, %v977
        %v985 = vadd.f32 %v971, %v977
        %v986 = vadd.f32 %v972, %v977
        %987 = vadd.xlane.f32.xlu0 %v852
        %v988 = vpop.xlane.xlu0 %987
        %989 = vadd.xlane.f32.xlu0 %v853
        %v990 = vpop.xlane.xlu0 %989
        %991 = vadd.xlane.f32.xlu0 %v854
        %v992 = vpop.xlane.xlu0 %991
        %993 = vadd.xlane.f32.xlu0 %v855
        %v994 = vpop.xlane.xlu0 %993
        %995 = vadd.xlane.f32.xlu0 %v856
        %v996 = vpop.xlane.xlu0 %995
        %997 = vadd.xlane.f32.xlu0 %v857
        %v998 = vpop.xlane.xlu0 %997
        %999 = vadd.xlane.f32.xlu0 %v858
        %v1000 = vpop.xlane.xlu0 %999
        %1001 = vadd.xlane.f32.xlu0 %v859
        %v1002 = vpop.xlane.xlu0 %1001
        %1003 = vadd.xlane.f32.xlu0 %v860
        %v1004 = vpop.xlane.xlu0 %1003
        %1005 = vadd.xlane.f32.xlu0 %v861
        %v1006 = vpop.xlane.xlu0 %1005
        %1007 = vadd.xlane.f32.xlu0 %v862
        %v1008 = vpop.xlane.xlu0 %1007
        %1009 = vadd.xlane.f32.xlu0 %v863
        %v1010 = vpop.xlane.xlu0 %1009
        %1011 = vadd.xlane.f32.xlu0 %v864
        %v1012 = vpop.xlane.xlu0 %1011
        %1013 = vadd.xlane.f32.xlu0 %v865
        %v1014 = vpop.xlane.xlu0 %1013
        %1015 = vadd.xlane.f32.xlu0 %v866
        %v1016 = vpop.xlane.xlu0 %1015
        %1017 = vadd.xlane.f32.xlu0 %v867
        %v1018 = vpop.xlane.xlu0 %1017
        %v1019 = vmul.f32 %v988, %v886
        %v1020 = vmul.f32 %v990, %v886
        %v1021 = vmul.f32 %v992, %v886
        %v1022 = vmul.f32 %v994, %v886
        %v1023 = vmul.f32 %v996, %v886
        %v1024 = vmul.f32 %v998, %v886
        %v1025 = vmul.f32 %v1000, %v886
        %v1026 = vmul.f32 %v1002, %v886
        %v1027 = vmul.f32 %v1004, %v886
        %v1028 = vmul.f32 %v1006, %v886
        %v1029 = vmul.f32 %v1008, %v886
        %v1030 = vmul.f32 %v1010, %v886
        %v1031 = vmul.f32 %v1012, %v886
        %v1032 = vmul.f32 %v1014, %v886
        %v1033 = vmul.f32 %v1016, %v886
        %v1034 = vmul.f32 %v1018, %v886
        %v1035 = vsub.f32 %v852, %v1019
        %v1036 = vsub.f32 %v853, %v1020
        %v1037 = vsub.f32 %v854, %v1021
        %v1038 = vsub.f32 %v855, %v1022
        %v1039 = vsub.f32 %v856, %v1023
        %v1040 = vsub.f32 %v857, %v1024
        %v1041 = vsub.f32 %v858, %v1025
        %v1042 = vsub.f32 %v859, %v1026
        %v1043 = vsub.f32 %v860, %v1027
        %v1044 = vsub.f32 %v861, %v1028
        %v1045 = vsub.f32 %v862, %v1029
        %v1046 = vsub.f32 %v863, %v1030
        %v1047 = vsub.f32 %v864, %v1031
        %v1048 = vsub.f32 %v865, %v1032
        %v1049 = vsub.f32 %v866, %v1033
        %v1050 = vsub.f32 %v867, %v1034
        %v1051 = vmul.f32 %v1035, %v1035
        %v1052 = vmul.f32 %v1036, %v1036
        %v1053 = vmul.f32 %v1037, %v1037
        %v1054 = vmul.f32 %v1038, %v1038
        %v1055 = vmul.f32 %v1039, %v1039
        %v1056 = vmul.f32 %v1040, %v1040
        %v1057 = vmul.f32 %v1041, %v1041
        %v1058 = vmul.f32 %v1042, %v1042
        %v1059 = vmul.f32 %v1043, %v1043
        %v1060 = vmul.f32 %v1044, %v1044
        %v1061 = vmul.f32 %v1045, %v1045
        %v1062 = vmul.f32 %v1046, %v1046
        %v1063 = vmul.f32 %v1047, %v1047
        %v1064 = vmul.f32 %v1048, %v1048
        %v1065 = vmul.f32 %v1049, %v1049
        %v1066 = vmul.f32 %v1050, %v1050
        %1067 = vadd.xlane.f32.xlu0 %v1051
        %v1068 = vpop.xlane.xlu0 %1067
        %1069 = vadd.xlane.f32.xlu0 %v1052
        %v1070 = vpop.xlane.xlu0 %1069
        %1071 = vadd.xlane.f32.xlu0 %v1053
        %v1072 = vpop.xlane.xlu0 %1071
        %1073 = vadd.xlane.f32.xlu0 %v1054
        %v1074 = vpop.xlane.xlu0 %1073
        %1075 = vadd.xlane.f32.xlu0 %v1055
        %v1076 = vpop.xlane.xlu0 %1075
        %1077 = vadd.xlane.f32.xlu0 %v1056
        %v1078 = vpop.xlane.xlu0 %1077
        %1079 = vadd.xlane.f32.xlu0 %v1057
        %v1080 = vpop.xlane.xlu0 %1079
        %1081 = vadd.xlane.f32.xlu0 %v1058
        %v1082 = vpop.xlane.xlu0 %1081
        %1083 = vadd.xlane.f32.xlu0 %v1059
        %v1084 = vpop.xlane.xlu0 %1083
        %1085 = vadd.xlane.f32.xlu0 %v1060
        %v1086 = vpop.xlane.xlu0 %1085
        %1087 = vadd.xlane.f32.xlu0 %v1061
        %v1088 = vpop.xlane.xlu0 %1087
        %1089 = vadd.xlane.f32.xlu0 %v1062
        %v1090 = vpop.xlane.xlu0 %1089
        %1091 = vadd.xlane.f32.xlu0 %v1063
        %v1092 = vpop.xlane.xlu0 %1091
        %1093 = vadd.xlane.f32.xlu0 %v1064
        %v1094 = vpop.xlane.xlu0 %1093
        %1095 = vadd.xlane.f32.xlu0 %v1065
        %v1096 = vpop.xlane.xlu0 %1095
        %1097 = vadd.xlane.f32.xlu0 %v1066
        %v1098 = vpop.xlane.xlu0 %1097
        %v1099 = vmul.f32 %v1068, %v886
        %v1100 = vmul.f32 %v1070, %v886
        %v1101 = vmul.f32 %v1072, %v886
        %v1102 = vmul.f32 %v1074, %v886
        %v1103 = vmul.f32 %v1076, %v886
        %v1104 = vmul.f32 %v1078, %v886
        %v1105 = vmul.f32 %v1080, %v886
        %v1106 = vmul.f32 %v1082, %v886
        %v1107 = vmul.f32 %v1084, %v886
        %v1108 = vmul.f32 %v1086, %v886
        %v1109 = vmul.f32 %v1088, %v886
        %v1110 = vmul.f32 %v1090, %v886
        %v1111 = vmul.f32 %v1092, %v886
        %v1112 = vmul.f32 %v1094, %v886
        %v1113 = vmul.f32 %v1096, %v886
        %v1114 = vmul.f32 %v1098, %v886
        %v1115 = vadd.f32 %v1099, 1e-06
        %v1116 = vadd.f32 %v1100, 1e-06
        %v1117 = vadd.f32 %v1101, 1e-06
        %v1118 = vadd.f32 %v1102, 1e-06
        %v1119 = vadd.f32 %v1103, 1e-06
        %v1120 = vadd.f32 %v1104, 1e-06
        %v1121 = vadd.f32 %v1105, 1e-06
        %v1122 = vadd.f32 %v1106, 1e-06
        %v1123 = vadd.f32 %v1107, 1e-06
        %v1124 = vadd.f32 %v1108, 1e-06
        %v1125 = vadd.f32 %v1109, 1e-06
        %v1126 = vadd.f32 %v1110, 1e-06
        %v1127 = vadd.f32 %v1111, 1e-06
        %v1128 = vadd.f32 %v1112, 1e-06
        %v1129 = vadd.f32 %v1113, 1e-06
        %v1130 = vadd.f32 %v1114, 1e-06
        %v1131 = vrsqrt.pop %v1115
        %v1132 = vrsqrt.pop %v1116
        %v1133 = vrsqrt.pop %v1117
        %v1134 = vrsqrt.pop %v1118
        %v1135 = vrsqrt.pop %v1119
        %v1136 = vrsqrt.pop %v1120
        %v1137 = vrsqrt.pop %v1121
        %v1138 = vrsqrt.pop %v1122
        %v1139 = vrsqrt.pop %v1123
        %v1140 = vrsqrt.pop %v1124
        %v1141 = vrsqrt.pop %v1125
        %v1142 = vrsqrt.pop %v1126
        %v1143 = vrsqrt.pop %v1127
        %v1144 = vrsqrt.pop %v1128
        %v1145 = vrsqrt.pop %v1129
        %v1146 = vrsqrt.pop %v1130
        %v1147 = vmul.f32 %v1035, %v1131
        %v1148 = vmul.f32 %v1036, %v1132
        %v1149 = vmul.f32 %v1037, %v1133
        %v1150 = vmul.f32 %v1038, %v1134
        %v1151 = vmul.f32 %v1039, %v1135
        %v1152 = vmul.f32 %v1040, %v1136
        %v1153 = vmul.f32 %v1041, %v1137
        %v1154 = vmul.f32 %v1042, %v1138
        %v1155 = vmul.f32 %v1043, %v1139
        %v1156 = vmul.f32 %v1044, %v1140
        %v1157 = vmul.f32 %v1045, %v1141
        %v1158 = vmul.f32 %v1046, %v1142
        %v1159 = vmul.f32 %v1047, %v1143
        %v1160 = vmul.f32 %v1048, %v1144
        %v1161 = vmul.f32 %v1049, %v1145
        %v1162 = vmul.f32 %v1050, %v1146
        %v1163 = vmul.f32 %v1147, %v963
        %v1164 = vmul.f32 %v1148, %v963
        %v1165 = vmul.f32 %v1149, %v963
        %v1166 = vmul.f32 %v1150, %v963
        %v1167 = vmul.f32 %v1151, %v963
        %v1168 = vmul.f32 %v1152, %v963
        %v1169 = vmul.f32 %v1153, %v963
        %v1170 = vmul.f32 %v1154, %v963
        %v1171 = vmul.f32 %v1155, %v963
        %v1172 = vmul.f32 %v1156, %v963
        %v1173 = vmul.f32 %v1157, %v963
        %v1174 = vmul.f32 %v1158, %v963
        %v1175 = vmul.f32 %v1159, %v963
        %v1176 = vmul.f32 %v1160, %v963
        %v1177 = vmul.f32 %v1161, %v963
        %v1178 = vmul.f32 %v1162, %v963
        %v1179 = vadd.f32 %v1163, %v977
        %v1180 = vadd.f32 %v1164, %v977
        %v1181 = vadd.f32 %v1165, %v977
        %v1182 = vadd.f32 %v1166, %v977
        %v1183 = vadd.f32 %v1167, %v977
        %v1184 = vadd.f32 %v1168, %v977
        %v1185 = vadd.f32 %v1169, %v977
        %v1186 = vadd.f32 %v1170, %v977
        %v1187 = vadd.f32 %v1171, %v977
        %v1188 = vadd.f32 %v1172, %v977
        %v1189 = vadd.f32 %v1173, %v977
        %v1190 = vadd.f32 %v1174, %v977
        %v1191 = vadd.f32 %v1175, %v977
        %v1192 = vadd.f32 %v1176, %v977
        %v1193 = vadd.f32 %v1177, %v977
        %v1194 = vadd.f32 %v1178, %v977
        %v1195 = vpack.c.bf16 %v980, %v979
        %v1196 = vpack.c.bf16 %v982, %v981
        %v1197 = vpack.c.bf16 %v984, %v983
        %v1198 = vpack.c.bf16 %v986, %v985
        %v1199 = vld [vmem:[#allocation11] sm:$0xf]
        %v1200 = vld [vmem:[#allocation11 + $0x4] sm:$0xf]
        %v1201 = vld [vmem:[#allocation11 + $0x8] sm:$0xf]
        %v1202 = vld [vmem:[#allocation11 + $0xc] sm:$0xf]
        %v1203 = vld [vmem:[#allocation11 + $0x10] sm:$0xf]
        %v1204 = vld [vmem:[#allocation11 + $0x14] sm:$0xf]
        %v1205 = vld [vmem:[#allocation11 + $0x18] sm:$0xf]
        %v1206 = vld [vmem:[#allocation11 + $0x1c] sm:$0xf]
        %v1207 = vld [vmem:[#allocation11 + $0x20] sm:$0xf]
        %v1208 = vld [vmem:[#allocation11 + $0x24] sm:$0xf]
        %v1209 = vld [vmem:[#allocation11 + $0x28] sm:$0xf]
        %v1210 = vld [vmem:[#allocation11 + $0x2c] sm:$0xf]
        %v1211 = vld [vmem:[#allocation11 + $0x30] sm:$0xf]
        %v1212 = vld [vmem:[#allocation11 + $0x34] sm:$0xf]
        %v1213 = vld [vmem:[#allocation11 + $0x38] sm:$0xf]
        %v1214 = vld [vmem:[#allocation11 + $0x3c] sm:$0xf]
        %v1215 = vld [vmem:[#allocation13] sm:$0x1]
        %v1217 = vlaneseq
        %v1218 = vshrl.u32 %v1217, 7
        %v1219 = vsub.s32 0, %v1218
        %v1220 = vrot.slane %v1215, %v1219
        %v1238 = vunpack.c.l.b16 %v1199
        %v1239 = vunpack.c.l.b16 %v1200
        %v1240 = vunpack.c.l.b16 %v1201
        %v1241 = vunpack.c.l.b16 %v1202
        %v1242 = vunpack.c.l.b16 %v1203
        %v1243 = vunpack.c.l.b16 %v1204
        %v1244 = vunpack.c.l.b16 %v1205
        %v1245 = vunpack.c.l.b16 %v1206
        %v1246 = vunpack.c.l.b16 %v1207
        %v1247 = vunpack.c.l.b16 %v1208
        %v1248 = vunpack.c.l.b16 %v1209
        %v1249 = vunpack.c.l.b16 %v1210
        %v1250 = vunpack.c.l.b16 %v1211
        %v1251 = vunpack.c.l.b16 %v1212
        %v1252 = vunpack.c.l.b16 %v1213
        %v1253 = vunpack.c.l.b16 %v1214
        %v1254 = vpack.c.b16 %v1239, %v1238
        %v1255 = vpack.c.b16 %v1241, %v1240
        %v1256 = vpack.c.b16 %v1243, %v1242
        %v1257 = vpack.c.b16 %v1245, %v1244
        %v1258 = vpack.c.b16 %v1247, %v1246
        %v1259 = vpack.c.b16 %v1249, %v1248
        %v1260 = vpack.c.b16 %v1251, %v1250
        %v1261 = vpack.c.b16 %v1253, %v1252
        %1270 = vmatprep.subr.bf16.mxu0 0
        %1271 = vmatpush1.bf16.msra.mxu0 %v1254
        %1272 = vmatprep.subr.bf16.mxu0 0
        %1273 = vmatpush1.bf16.msra.mxu0 %v1255
        %1274 = vmatprep.subr.bf16.mxu0 0
        %1275 = vmatpush1.bf16.msra.mxu0 %v1256
        %1276 = vmatprep.subr.bf16.mxu0 0
        %1277 = vmatpush1.bf16.msra.mxu0 %v1257
        %1278 = vmatprep.subr.bf16.mxu0 0
        %1279 = vmatpush1.bf16.msra.mxu0 %v1258
        %1280 = vmatprep.subr.bf16.mxu0 0
        %1281 = vmatpush1.bf16.msra.mxu0 %v1259
        %1282 = vmatprep.subr.bf16.mxu0 0
        %1283 = vmatpush1.bf16.msra.mxu0 %v1260
        %1284 = vmatprep.subr.bf16.mxu0 0
        %1285 = vmatpush1.bf16.msra.mxu0 %v1261
        %1286 = vmatprep.subr.bf16.mxu0 0
        %1287 = vmatpush1.bf16.msra.mxu0 0
        %1288 = vmatprep.subr.bf16.mxu0 0
        %1289 = vmatpush1.bf16.msra.mxu0 0
        %1290 = vmatprep.subr.bf16.mxu0 0
        %1291 = vmatpush1.bf16.msra.mxu0 0
        %1292 = vmatprep.subr.bf16.mxu0 0
        %1293 = vmatpush1.bf16.msra.mxu0 0
        %1294 = vmatprep.subr.bf16.mxu0 0
        %1295 = vmatpush1.bf16.msra.mxu0 0
        %1296 = vmatprep.subr.bf16.mxu0 0
        %1297 = vmatpush1.bf16.msra.mxu0 0
        %1298 = vmatprep.subr.bf16.mxu0 0
        %1299 = vmatpush1.bf16.msra.mxu0 0
        %1300 = vmatprep.subr.bf16.mxu0 0
        %1301 = vmatpush1.bf16.msra.mxu0 0
        %1302 = vmatprep.mubr.bf16.mxu0 0
        %1303 = vmatmul.mubr.bf16.gmra.mrb[0].mxu0 %v1195
        %v1304 = vpop.f32.mrb[0].mxu0
        %v1305 = vadd.f32 %v1220, %v1304
        %v1306 = vpop.f32.mrb[0].mxu0
        %v1307 = vpop.f32.mrb[0].mxu0
        %v1308 = vadd.f32 %v1220, %v1307
        %v1309 = vpop.f32.mrb[0].mxu0
        %1310 = vmatprep.mubr.bf16.mxu0 0
        %1311 = vmatmul.mubr.bf16.gmra.mrb[0].mxu0 %v1196
        %v1312 = vpop.f32.mrb[0].mxu0
        %v1313 = vadd.f32 %v1220, %v1312
        %v1314 = vpop.f32.mrb[0].mxu0
        %v1315 = vpop.f32.mrb[0].mxu0
        %v1316 = vadd.f32 %v1220, %v1315
        %v1317 = vpop.f32.mrb[0].mxu0
        %1318 = vmatprep.mubr.bf16.mxu0 0
        %1319 = vmatmul.mubr.bf16.gmra.mrb[0].mxu0 %v1197
        %v1320 = vpop.f32.mrb[0].mxu0
        %v1321 = vadd.f32 %v1220, %v1320
        %v1322 = vpop.f32.mrb[0].mxu0
        %v1323 = vpop.f32.mrb[0].mxu0
        %v1324 = vadd.f32 %v1220, %v1323
        %v1325 = vpop.f32.mrb[0].mxu0
        %1326 = vmatprep.mubr.bf16.mxu0 0
        %1327 = vmatmul.mubr.bf16.gmra.mrb[0].mxu0 %v1198
        %v1328 = vpop.f32.mrb[0].mxu0
        %v1329 = vadd.f32 %v1220, %v1328
        %v1330 = vpop.f32.mrb[0].mxu0
        %v1331 = vpop.f32.mrb[0].mxu0
        %v1332 = vadd.f32 %v1220, %v1331
        %v1333 = vpop.f32.mrb[0].mxu0
        %1334 = vdwg.mxu0
        %v1335 = vpack.c.bf16 %v1180, %v1179
        %v1336 = vpack.c.bf16 %v1182, %v1181
        %v1337 = vpack.c.bf16 %v1184, %v1183
        %v1338 = vpack.c.bf16 %v1186, %v1185
        %v1339 = vpack.c.bf16 %v1188, %v1187
        %v1340 = vpack.c.bf16 %v1190, %v1189
        %v1341 = vpack.c.bf16 %v1192, %v1191
        %v1342 = vpack.c.bf16 %v1194, %v1193
        %v1343 = vld [vmem:[#allocation14] sm:$0xff]
        %v1344 = vld [vmem:[#allocation14 + $0x8] sm:$0xff]
        %v1345 = vld [vmem:[#allocation14 + $0x10] sm:$0xff]
        %v1346 = vld [vmem:[#allocation14 + $0x18] sm:$0xff]
        %v1347 = vld [vmem:[#allocation14 + $0x20] sm:$0xff]
        %v1348 = vld [vmem:[#allocation14 + $0x28] sm:$0xff]
        %v1349 = vld [vmem:[#allocation14 + $0x30] sm:$0xff]
        %v1350 = vld [vmem:[#allocation14 + $0x38] sm:$0xff]
        %v1351 = vld [vmem:[#allocation14 + $0x40] sm:$0xff]
        %v1352 = vld [vmem:[#allocation14 + $0x48] sm:$0xff]
        %v1353 = vld [vmem:[#allocation14 + $0x50] sm:$0xff]
        %v1354 = vld [vmem:[#allocation14 + $0x58] sm:$0xff]
        %v1355 = vld [vmem:[#allocation14 + $0x60] sm:$0xff]
        %v1356 = vld [vmem:[#allocation14 + $0x68] sm:$0xff]
        %v1357 = vld [vmem:[#allocation14 + $0x70] sm:$0xff]
        %v1358 = vld [vmem:[#allocation14 + $0x78] sm:$0xff]
        %v1359 = vld [vmem:[#allocation16] sm:$0x3]
        %v1361 = vlaneseq
        %v1362 = vshrl.u32 %v1361, 7
        %v1363 = vsub.s32 0, %v1362
        %v1364 = vrot.slane %v1359, %v1363
        %v1365 = vlaneseq
        %v1366 = vshrl.u32 %v1365, 7
        %v1367 = vsub.s32 1, %v1366
        %v1368 = vrot.slane %v1359, %v1367
        %v1387 = vunpack.c.l.b16 %v1343
        %v1388 = vunpack.c.h.b16 %v1343
        %v1389 = vunpack.c.l.b16 %v1344
        %v1390 = vunpack.c.h.b16 %v1344
        %v1391 = vunpack.c.l.b16 %v1345
        %v1392 = vunpack.c.h.b16 %v1345
        %v1393 = vunpack.c.l.b16 %v1346
        %v1394 = vunpack.c.h.b16 %v1346
        %v1395 = vunpack.c.l.b16 %v1347
        %v1396 = vunpack.c.h.b16 %v1347
        %v1397 = vunpack.c.l.b16 %v1348
        %v1398 = vunpack.c.h.b16 %v1348
        %v1399 = vunpack.c.l.b16 %v1349
        %v1400 = vunpack.c.h.b16 %v1349
        %v1401 = vunpack.c.l.b16 %v1350
        %v1402 = vunpack.c.h.b16 %v1350
        %v1403 = vunpack.c.l.b16 %v1351
        %v1404 = vunpack.c.h.b16 %v1351
        %v1405 = vunpack.c.l.b16 %v1352
        %v1406 = vunpack.c.h.b16 %v1352
        %v1407 = vunpack.c.l.b16 %v1353
        %v1408 = vunpack.c.h.b16 %v1353
        %v1409 = vunpack.c.l.b16 %v1354
        %v1410 = vunpack.c.h.b16 %v1354
        %v1411 = vunpack.c.l.b16 %v1355
        %v1412 = vunpack.c.h.b16 %v1355
        %v1413 = vunpack.c.l.b16 %v1356
        %v1414 = vunpack.c.h.b16 %v1356
        %v1415 = vunpack.c.l.b16 %v1357
        %v1416 = vunpack.c.h.b16 %v1357
        %v1417 = vunpack.c.l.b16 %v1358
        %v1418 = vunpack.c.h.b16 %v1358
        %v1419 = vpack.c.b16 %v1389, %v1387
        %v1420 = vpack.c.b16 %v1390, %v1388
        %v1421 = vpack.c.b16 %v1393, %v1391
        %v1422 = vpack.c.b16 %v1394, %v1392
        %v1423 = vpack.c.b16 %v1397, %v1395
        %v1424 = vpack.c.b16 %v1398, %v1396
        %v1425 = vpack.c.b16 %v1401, %v1399
        %v1426 = vpack.c.b16 %v1402, %v1400
        %v1427 = vpack.c.b16 %v1405, %v1403
        %v1428 = vpack.c.b16 %v1406, %v1404
        %v1429 = vpack.c.b16 %v1409, %v1407
        %v1430 = vpack.c.b16 %v1410, %v1408
        %v1431 = vpack.c.b16 %v1413, %v1411
        %v1432 = vpack.c.b16 %v1414, %v1412
        %v1433 = vpack.c.b16 %v1417, %v1415
        %v1434 = vpack.c.b16 %v1418, %v1416
        %1451 = vmatprep.subr.bf16.mxu0 %v1420
        %1452 = vmatpush1.bf16.msra.mxu0 %v1419
        %1453 = vmatprep.subr.bf16.mxu0 %v1422
        %1454 = vmatpush1.bf16.msra.mxu0 %v1421
        %1455 = vmatprep.subr.bf16.mxu0 %v1424
        %1456 = vmatpush1.bf16.msra.mxu0 %v1423
        %1457 = vmatprep.subr.bf16.mxu0 %v1426
        %1458 = vmatpush1.bf16.msra.mxu0 %v1425
        %1459 = vmatprep.subr.bf16.mxu0 %v1428
        %1460 = vmatpush1.bf16.msra.mxu0 %v1427
        %1461 = vmatprep.subr.bf16.mxu0 %v1430
        %1462 = vmatpush1.bf16.msra.mxu0 %v1429
        %1463 = vmatprep.subr.bf16.mxu0 %v1432
        %1464 = vmatpush1.bf16.msra.mxu0 %v1431
        %1465 = vmatprep.subr.bf16.mxu0 %v1434
        %1466 = vmatpush1.bf16.msra.mxu0 %v1433
        %1467 = vmatprep.subr.bf16.mxu0 0
        %1468 = vmatpush1.bf16.msra.mxu0 0
        %1469 = vmatprep.subr.bf16.mxu0 0
        %1470 = vmatpush1.bf16.msra.mxu0 0
        %1471 = vmatprep.subr.bf16.mxu0 0
        %1472 = vmatpush1.bf16.msra.mxu0 0
        %1473 = vmatprep.subr.bf16.mxu0 0
        %1474 = vmatpush1.bf16.msra.mxu0 0
        %1475 = vmatprep.subr.bf16.mxu0 0
        %1476 = vmatpush1.bf16.msra.mxu0 0
        %1477 = vmatprep.subr.bf16.mxu0 0
        %1478 = vmatpush1.bf16.msra.mxu0 0
        %1479 = vmatprep.subr.bf16.mxu0 0
        %1480 = vmatpush1.bf16.msra.mxu0 0
        %1481 = vmatprep.subr.bf16.mxu0 0
        %1482 = vmatpush1.bf16.msra.mxu0 0
        %1483 = vmatprep.mubr.bf16.mxu0 0
        %1484 = vmatmul.mubr.bf16.gmra.mrb[0].mxu0 %v1335
        %v1485 = vpop.f32.mrb[0].mxu0
        %v1486 = vadd.f32 %v1364, %v1485
        %v1487 = vpop.f32.mrb[0].mxu0
        %v1488 = vadd.f32 %v1368, %v1487
        %v1489 = vpop.f32.mrb[0].mxu0
        %v1490 = vadd.f32 %v1364, %v1489
        %v1491 = vpop.f32.mrb[0].mxu0
        %v1492 = vadd.f32 %v1368, %v1491
        %1493 = vmatprep.mubr.bf16.mxu0 0
        %1494 = vmatmul.mubr.bf16.gmra.mrb[0].mxu0 %v1336
        %v1495 = vpop.f32.mrb[0].mxu0
        %v1496 = vadd.f32 %v1364, %v1495
        %v1497 = vpop.f32.mrb[0].mxu0
        %v1498 = vadd.f32 %v1368, %v1497
        %v1499 = vpop.f32.mrb[0].mxu0
        %v1500 = vadd.f32 %v1364, %v1499
        %v1501 = vpop.f32.mrb[0].mxu0
        %v1502 = vadd.f32 %v1368, %v1501
        %1503 = vmatprep.mubr.bf16.mxu0 0
        %1504 = vmatmul.mubr.bf16.gmra.mrb[0].mxu0 %v1337
        %v1505 = vpop.f32.mrb[0].mxu0
        %v1506 = vadd.f32 %v1364, %v1505
        %v1507 = vpop.f32.mrb[0].mxu0
        %v1508 = vadd.f32 %v1368, %v1507
        %v1509 = vpop.f32.mrb[0].mxu0
        %v1510 = vadd.f32 %v1364, %v1509
        %v1511 = vpop.f32.mrb[0].mxu0
        %v1512 = vadd.f32 %v1368, %v1511
        %1513 = vmatprep.mubr.bf16.mxu0 0
        %1514 = vmatmul.mubr.bf16.gmra.mrb[0].mxu0 %v1338
        %v1515 = vpop.f32.mrb[0].mxu0
        %v1516 = vadd.f32 %v1364, %v1515
        %v1517 = vpop.f32.mrb[0].mxu0
        %v1518 = vadd.f32 %v1368, %v1517
        %v1519 = vpop.f32.mrb[0].mxu0
        %v1520 = vadd.f32 %v1364, %v1519
        %v1521 = vpop.f32.mrb[0].mxu0
        %v1522 = vadd.f32 %v1368, %v1521
        %1523 = vmatprep.mubr.bf16.mxu0 0
        %1524 = vmatmul.mubr.bf16.gmra.mrb[0].mxu0 %v1339
        %v1525 = vpop.f32.mrb[0].mxu0
        %v1526 = vadd.f32 %v1364, %v1525
        %v1527 = vpop.f32.mrb[0].mxu0
        %v1528 = vadd.f32 %v1368, %v1527
        %v1529 = vpop.f32.mrb[0].mxu0
        %v1530 = vadd.f32 %v1364, %v1529
        %v1531 = vpop.f32.mrb[0].mxu0
        %v1532 = vadd.f32 %v1368, %v1531
        %1533 = vmatprep.mubr.bf16.mxu0 0
        %1534 = vmatmul.mubr.bf16.gmra.mrb[0].mxu0 %v1340
        %v1535 = vpop.f32.mrb[0].mxu0
        %v1536 = vadd.f32 %v1364, %v1535
        %v1537 = vpop.f32.mrb[0].mxu0
        %v1538 = vadd.f32 %v1368, %v1537
        %v1539 = vpop.f32.mrb[0].mxu0
        %v1540 = vadd.f32 %v1364, %v1539
        %v1541 = vpop.f32.mrb[0].mxu0
        %v1542 = vadd.f32 %v1368, %v1541
        %1543 = vmatprep.mubr.bf16.mxu0 0
        %1544 = vmatmul.mubr.bf16.gmra.mrb[0].mxu0 %v1341
        %v1545 = vpop.f32.mrb[0].mxu0
        %v1546 = vadd.f32 %v1364, %v1545
        %v1547 = vpop.f32.mrb[0].mxu0
        %v1548 = vadd.f32 %v1368, %v1547
        %v1549 = vpop.f32.mrb[0].mxu0
        %v1550 = vadd.f32 %v1364, %v1549
        %v1551 = vpop.f32.mrb[0].mxu0
        %v1552 = vadd.f32 %v1368, %v1551
        %1553 = vmatprep.mubr.bf16.mxu0 0
        %1554 = vmatmul.mubr.bf16.gmra.mrb[0].mxu0 %v1342
        %v1555 = vpop.f32.mrb[0].mxu0
        %v1556 = vadd.f32 %v1364, %v1555
        %v1557 = vpop.f32.mrb[0].mxu0
        %v1558 = vadd.f32 %v1368, %v1557
        %v1559 = vpop.f32.mrb[0].mxu0
        %v1560 = vadd.f32 %v1364, %v1559
        %v1561 = vpop.f32.mrb[0].mxu0
        %v1562 = vadd.f32 %v1368, %v1561
        %1563 = vdwg.mxu0
        %v1564 = vpack.c.bf16 %v1308, %v1305
        %v1565 = vpack.c.bf16 %v1316, %v1313
        %v1566 = vpack.c.bf16 %v1324, %v1321
        %v1567 = vpack.c.bf16 %v1332, %v1329
        %1568 = vst [vmem:[#allocation2] sm:$0xff] %v1564
        %1569 = vst [vmem:[#allocation2 + $0x8] sm:$0xff] %v1565
        %1570 = vst [vmem:[#allocation2 + $0x10] sm:$0xff] %v1566
        %1571 = vst [vmem:[#allocation2 + $0x18] sm:$0xff] %v1567
        %v1572 = vpack.c.bf16 %v1490, %v1486
        %v1573 = vpack.c.bf16 %v1492, %v1488
        %v1574 = vpack.c.bf16 %v1500, %v1496
        %v1575 = vpack.c.bf16 %v1502, %v1498
        %v1576 = vpack.c.bf16 %v1510, %v1506
        %v1577 = vpack.c.bf16 %v1512, %v1508
        %v1578 = vpack.c.bf16 %v1520, %v1516
        %v1579 = vpack.c.bf16 %v1522, %v1518
        %v1580 = vpack.c.bf16 %v1530, %v1526
        %v1581 = vpack.c.bf16 %v1532, %v1528
        %v1582 = vpack.c.bf16 %v1540, %v1536
        %v1583 = vpack.c.bf16 %v1542, %v1538
        %v1584 = vpack.c.bf16 %v1550, %v1546
        %v1585 = vpack.c.bf16 %v1552, %v1548
        %v1586 = vpack.c.bf16 %v1560, %v1556
        %v1587 = vpack.c.bf16 %v1562, %v1558
        %1588 = vst [vmem:[#allocation3] sm:$0xff] %v1572
        %1589 = vst [vmem:[#allocation3 + $0x8] sm:$0xff] %v1573
        %1590 = vst [vmem:[#allocation3 + $0x10] sm:$0xff] %v1574
        %1591 = vst [vmem:[#allocation3 + $0x18] sm:$0xff] %v1575
        %1592 = vst [vmem:[#allocation3 + $0x20] sm:$0xff] %v1576
        %1593 = vst [vmem:[#allocation3 + $0x28] sm:$0xff] %v1577
        %1594 = vst [vmem:[#allocation3 + $0x30] sm:$0xff] %v1578
        %1595 = vst [vmem:[#allocation3 + $0x38] sm:$0xff] %v1579
        %1596 = vst [vmem:[#allocation3 + $0x40] sm:$0xff] %v1580
        %1597 = vst [vmem:[#allocation3 + $0x48] sm:$0xff] %v1581
        %1598 = vst [vmem:[#allocation3 + $0x50] sm:$0xff] %v1582
        %1599 = vst [vmem:[#allocation3 + $0x58] sm:$0xff] %v1583
        %1600 = vst [vmem:[#allocation3 + $0x60] sm:$0xff] %v1584
        %1601 = vst [vmem:[#allocation3 + $0x68] sm:$0xff] %v1585
        %1602 = vst [vmem:[#allocation3 + $0x70] sm:$0xff] %v1586
        %1603 = vst [vmem:[#allocation3 + $0x78] sm:$0xff] %v1587
        %v1604 = vld [vmem:[%s725] sm:$0x1]
        %vm1605 = vcmp.gt.f32.partialorder %v1604, 0.0
        %v1606 = vsel %vm1605, -1e+18, 0.0
        %v1608 = vlaneseq
        %v1609 = vshrl.u32 %v1608, 7
        %v1610 = vsub.s32 0, %v1609
        %v1611 = vrot.slane %v1606, %v1610
        %v1613 = vld [vmem:[#allocation2] sm:$0xff]
        %v1614 = vld [vmem:[#allocation2 + $0x8] sm:$0xff]
        %v1615 = vld [vmem:[#allocation2 + $0x10] sm:$0xff]
        %v1616 = vld [vmem:[#allocation2 + $0x18] sm:$0xff]
        %v1617 = vld [vmem:[#allocation3] sm:$0xff]
        %v1618 = vld [vmem:[#allocation3 + $0x10] sm:$0xff]
        %v1619 = vld [vmem:[#allocation3 + $0x20] sm:$0xff]
        %v1620 = vld [vmem:[#allocation3 + $0x30] sm:$0xff]
        %v1621 = vld [vmem:[#allocation3 + $0x40] sm:$0xff]
        %v1622 = vld [vmem:[#allocation3 + $0x50] sm:$0xff]
        %v1623 = vld [vmem:[#allocation3 + $0x60] sm:$0xff]
        %v1624 = vld [vmem:[#allocation3 + $0x70] sm:$0xff]
        %v1625 = vld [vmem:[#allocation3 + $0x8] sm:$0xff]
        %v1626 = vld [vmem:[#allocation3 + $0x18] sm:$0xff]
        %v1627 = vld [vmem:[#allocation3 + $0x28] sm:$0xff]
        %v1628 = vld [vmem:[#allocation3 + $0x38] sm:$0xff]
        %v1629 = vld [vmem:[#allocation3 + $0x48] sm:$0xff]
        %v1630 = vld [vmem:[#allocation3 + $0x58] sm:$0xff]
        %v1631 = vld [vmem:[#allocation3 + $0x68] sm:$0xff]
        %v1632 = vld [vmem:[#allocation3 + $0x78] sm:$0xff]
        %vm1633 = vcmask 261120
        %v1635 = vsel %vm1633, %v1613, 0
        %v1638 = vsel %vm1633, %v1614, 0
        %v1641 = vsel %vm1633, %v1615, 0
        %v1644 = vsel %vm1633, %v1616, 0
        %v1647 = vsel %vm1633, %v1617, 0
        %v1650 = vsel %vm1633, %v1618, 0
        %v1653 = vsel %vm1633, %v1619, 0
        %v1656 = vsel %vm1633, %v1620, 0
        %v1659 = vsel %vm1633, %v1621, 0
        %v1662 = vsel %vm1633, %v1622, 0
        %v1665 = vsel %vm1633, %v1623, 0
        %v1668 = vsel %vm1633, %v1624, 0
        %1670 = vmatprep.subr.bf16.mxu0 0
        %1671 = vmatpush1.bf16.xpose.msra.mxu0 %v1647
        %1672 = vmatprep.subr.bf16.mxu0 0
        %1673 = vmatpush1.bf16.xpose.msra.mxu0 %v1650
        %1674 = vmatprep.subr.bf16.mxu0 0
        %1675 = vmatpush1.bf16.xpose.msra.mxu0 %v1653
        %1676 = vmatprep.subr.bf16.mxu0 0
        %1677 = vmatpush1.bf16.xpose.msra.mxu0 %v1656
        %1678 = vmatprep.subr.bf16.mxu0 0
        %1679 = vmatpush1.bf16.xpose.msra.mxu0 %v1659
        %1680 = vmatprep.subr.bf16.mxu0 0
        %1681 = vmatpush1.bf16.xpose.msra.mxu0 %v1662
        %1682 = vmatprep.subr.bf16.mxu0 0
        %1683 = vmatpush1.bf16.xpose.msra.mxu0 %v1665
        %1684 = vmatprep.subr.bf16.mxu0 0
        %1685 = vmatpush1.bf16.xpose.msra.mxu0 %v1668
        %1686 = vmatprep.subr.bf16.mxu0 0
        %1687 = vmatpush1.bf16.xpose.msra.mxu0 0
        %1688 = vmatprep.subr.bf16.mxu0 0
        %1689 = vmatpush1.bf16.xpose.msra.mxu0 0
        %1690 = vmatprep.subr.bf16.mxu0 0
        %1691 = vmatpush1.bf16.xpose.msra.mxu0 0
        %1692 = vmatprep.subr.bf16.mxu0 0
        %1693 = vmatpush1.bf16.xpose.msra.mxu0 0
        %1694 = vmatprep.subr.bf16.mxu0 0
        %1695 = vmatpush1.bf16.xpose.msra.mxu0 0
        %1696 = vmatprep.subr.bf16.mxu0 0
        %1697 = vmatpush1.bf16.xpose.msra.mxu0 0
        %1698 = vmatprep.subr.bf16.mxu0 0
        %1699 = vmatpush1.bf16.xpose.msra.mxu0 0
        %1700 = vmatprep.subr.bf16.mxu0 0
        %1701 = vmatpush1.bf16.xpose.msra.mxu0 0
        %1702 = vmatprep.mubr.bf16.mxu0 0
        %1703 = vmatmul.mubr.bf16.gmra.mrb[0].mxu0 %v1635
        %v1704 = vpop.f32.mrb[0].mxu0
        %v1705 = vadd.f32 %v1611, %v1704
        %v1706 = vpop.f32.mrb[0].mxu0
        %v1707 = vpop.f32.mrb[0].mxu0
        %v1708 = vadd.f32 %v1611, %v1707
        %v1709 = vpop.f32.mrb[0].mxu0
        %1710 = vmatprep.mubr.bf16.mxu0 0
        %1711 = vmatmul.mubr.bf16.gmra.mrb[0].mxu0 %v1638
        %v1712 = vpop.f32.mrb[0].mxu0
        %v1713 = vadd.f32 %v1611, %v1712
        %v1714 = vpop.f32.mrb[0].mxu0
        %v1715 = vpop.f32.mrb[0].mxu0
        %v1716 = vadd.f32 %v1611, %v1715
        %v1717 = vpop.f32.mrb[0].mxu0
        %1718 = vmatprep.mubr.bf16.mxu0 0
        %1719 = vmatmul.mubr.bf16.gmra.mrb[0].mxu0 %v1641
        %v1720 = vpop.f32.mrb[0].mxu0
        %v1721 = vadd.f32 %v1611, %v1720
        %v1722 = vpop.f32.mrb[0].mxu0
        %v1723 = vpop.f32.mrb[0].mxu0
        %v1724 = vadd.f32 %v1611, %v1723
        %v1725 = vpop.f32.mrb[0].mxu0
        %1726 = vmatprep.mubr.bf16.mxu0 0
        %1727 = vmatmul.mubr.bf16.gmra.mrb[0].mxu0 %v1644
        %v1728 = vpop.f32.mrb[0].mxu0
        %v1729 = vadd.f32 %v1611, %v1728
        %v1730 = vpop.f32.mrb[0].mxu0
        %v1731 = vpop.f32.mrb[0].mxu0
        %v1732 = vadd.f32 %v1611, %v1731
        %v1733 = vpop.f32.mrb[0].mxu0
        %1734 = vdwg.mxu0
        %1735 = vmax.xlane.f32.xlu0 %v1705
        %v1736 = vpop.xlane.xlu0 %1735
        %1737 = vmax.xlane.f32.xlu0 %v1708
        %v1738 = vpop.xlane.xlu0 %1737
        %1739 = vmax.xlane.f32.xlu0 %v1713
        %v1740 = vpop.xlane.xlu0 %1739
        %1741 = vmax.xlane.f32.xlu0 %v1716
        %v1742 = vpop.xlane.xlu0 %1741
        %1743 = vmax.xlane.f32.xlu0 %v1721
        %v1744 = vpop.xlane.xlu0 %1743
        %1745 = vmax.xlane.f32.xlu0 %v1724
        %v1746 = vpop.xlane.xlu0 %1745
        %1747 = vmax.xlane.f32.xlu0 %v1729
        %v1748 = vpop.xlane.xlu0 %1747
        %1749 = vmax.xlane.f32.xlu0 %v1732
        %v1750 = vpop.xlane.xlu0 %1749
        %v1751 = vsub.f32 %v1705, %v1736
        %v1752 = vsub.f32 %v1708, %v1738
        %v1753 = vsub.f32 %v1713, %v1740
        %v1754 = vsub.f32 %v1716, %v1742
        %v1755 = vsub.f32 %v1721, %v1744
        %v1756 = vsub.f32 %v1724, %v1746
        %v1757 = vsub.f32 %v1729, %v1748
        %v1758 = vsub.f32 %v1732, %v1750
        %v1759 = vmul.f32 %v1751, 1.442695
        %v1760 = vpow.pop %v1759
        %v1761 = vmul.f32 %v1752, 1.442695
        %v1762 = vpow.pop %v1761
        %v1763 = vmul.f32 %v1753, 1.442695
        %v1764 = vpow.pop %v1763
        %v1765 = vmul.f32 %v1754, 1.442695
        %v1766 = vpow.pop %v1765
        %v1767 = vmul.f32 %v1755, 1.442695
        %v1768 = vpow.pop %v1767
        %v1769 = vmul.f32 %v1756, 1.442695
        %v1770 = vpow.pop %v1769
        %v1771 = vmul.f32 %v1757, 1.442695
        %v1772 = vpow.pop %v1771
        %v1773 = vmul.f32 %v1758, 1.442695
        %v1774 = vpow.pop %v1773
        %1775 = vadd.xlane.f32.xlu0 %v1760
        %v1776 = vpop.xlane.xlu0 %1775
        %1777 = vadd.xlane.f32.xlu0 %v1762
        %v1778 = vpop.xlane.xlu0 %1777
        %1779 = vadd.xlane.f32.xlu0 %v1764
        %v1780 = vpop.xlane.xlu0 %1779
        %1781 = vadd.xlane.f32.xlu0 %v1766
        %v1782 = vpop.xlane.xlu0 %1781
        %1783 = vadd.xlane.f32.xlu0 %v1768
        %v1784 = vpop.xlane.xlu0 %1783
        %1785 = vadd.xlane.f32.xlu0 %v1770
        %v1786 = vpop.xlane.xlu0 %1785
        %1787 = vadd.xlane.f32.xlu0 %v1772
        %v1788 = vpop.xlane.xlu0 %1787
        %1789 = vadd.xlane.f32.xlu0 %v1774
        %v1790 = vpop.xlane.xlu0 %1789
        %v1791 = vrcp.pop %v1776
        %v1792 = vrcp.pop %v1778
        %v1793 = vrcp.pop %v1780
        %v1794 = vrcp.pop %v1782
        %v1795 = vrcp.pop %v1784
        %v1796 = vrcp.pop %v1786
        %v1797 = vrcp.pop %v1788
        %v1798 = vrcp.pop %v1790
        %v1799 = vmul.f32 %v1760, %v1791
        %v1800 = vmul.f32 %v1762, %v1792
        %v1801 = vmul.f32 %v1764, %v1793
        %v1802 = vmul.f32 %v1766, %v1794
        %v1803 = vmul.f32 %v1768, %v1795
        %v1804 = vmul.f32 %v1770, %v1796
        %v1805 = vmul.f32 %v1772, %v1797
        %v1806 = vmul.f32 %v1774, %v1798
        %v1807 = vpack.c.bf16 %v1800, %v1799
        %v1808 = vpack.c.bf16 %v1802, %v1801
        %v1809 = vpack.c.bf16 %v1804, %v1803
        %v1810 = vpack.c.bf16 %v1806, %v1805
        %1811 = vmatprep.subr.bf16.mxu0 0
        %1812 = vmatpush1.bf16.msra.mxu0 %v1625
        %1813 = vmatprep.subr.bf16.mxu0 0
        %1814 = vmatpush1.bf16.msra.mxu0 %v1626
        %1815 = vmatprep.subr.bf16.mxu0 0
        %1816 = vmatpush1.bf16.msra.mxu0 %v1627
        %1817 = vmatprep.subr.bf16.mxu0 0
        %1818 = vmatpush1.bf16.msra.mxu0 %v1628
        %1819 = vmatprep.subr.bf16.mxu0 0
        %1820 = vmatpush1.bf16.msra.mxu0 %v1629
        %1821 = vmatprep.subr.bf16.mxu0 0
        %1822 = vmatpush1.bf16.msra.mxu0 %v1630
        %1823 = vmatprep.subr.bf16.mxu0 0
        %1824 = vmatpush1.bf16.msra.mxu0 %v1631
        %1825 = vmatprep.subr.bf16.mxu0 0
        %1826 = vmatpush1.bf16.msra.mxu0 %v1632
        %1827 = vmatprep.subr.bf16.mxu0 0
        %1828 = vmatpush1.bf16.msra.mxu0 0
        %1829 = vmatprep.subr.bf16.mxu0 0
        %1830 = vmatpush1.bf16.msra.mxu0 0
        %1831 = vmatprep.subr.bf16.mxu0 0
        %1832 = vmatpush1.bf16.msra.mxu0 0
        %1833 = vmatprep.subr.bf16.mxu0 0
        %1834 = vmatpush1.bf16.msra.mxu0 0
        %1835 = vmatprep.subr.bf16.mxu0 0
        %1836 = vmatpush1.bf16.msra.mxu0 0
        %1837 = vmatprep.subr.bf16.mxu0 0
        %1838 = vmatpush1.bf16.msra.mxu0 0
        %1839 = vmatprep.subr.bf16.mxu0 0
        %1840 = vmatpush1.bf16.msra.mxu0 0
        %1841 = vmatprep.subr.bf16.mxu0 0
        %1842 = vmatpush1.bf16.msra.mxu0 0
        %1843 = vmatprep.mubr.bf16.mxu0 0
        %1844 = vmatmul.mubr.bf16.gmra.mrb[0].mxu0 %v1807
        %v1845 = vpop.f32.mrb[0].mxu0
        %v1846 = vadd.f32 0.0, %v1845
        %v1847 = vpop.f32.mrb[0].mxu0
        %v1848 = vpop.f32.mrb[0].mxu0
        %v1849 = vadd.f32 0.0, %v1848
        %v1850 = vpop.f32.mrb[0].mxu0
        %1851 = vmatprep.mubr.bf16.mxu0 0
        %1852 = vmatmul.mubr.bf16.gmra.mrb[0].mxu0 %v1808
        %v1853 = vpop.f32.mrb[0].mxu0
        %v1854 = vadd.f32 0.0, %v1853
        %v1855 = vpop.f32.mrb[0].mxu0
        %v1856 = vpop.f32.mrb[0].mxu0
        %v1857 = vadd.f32 0.0, %v1856
        %v1858 = vpop.f32.mrb[0].mxu0
        %1859 = vmatprep.mubr.bf16.mxu0 0
        %1860 = vmatmul.mubr.bf16.gmra.mrb[0].mxu0 %v1809
        %v1861 = vpop.f32.mrb[0].mxu0
        %v1862 = vadd.f32 0.0, %v1861
        %v1863 = vpop.f32.mrb[0].mxu0
        %v1864 = vpop.f32.mrb[0].mxu0
        %v1865 = vadd.f32 0.0, %v1864
        %v1866 = vpop.f32.mrb[0].mxu0
        %1867 = vmatprep.mubr.bf16.mxu0 0
        %1868 = vmatmul.mubr.bf16.gmra.mrb[0].mxu0 %v1810
        %v1869 = vpop.f32.mrb[0].mxu0
        %v1870 = vadd.f32 0.0, %v1869
        %v1871 = vpop.f32.mrb[0].mxu0
        %v1872 = vpop.f32.mrb[0].mxu0
        %v1873 = vadd.f32 0.0, %v1872
        %v1874 = vpop.f32.mrb[0].mxu0
        %1875 = vdwg.mxu0
        %v1876 = vpack.c.bf16 %v1849, %v1846
        %v1877 = vpack.c.bf16 %v1857, %v1854
        %v1878 = vpack.c.bf16 %v1865, %v1862
        %v1879 = vpack.c.bf16 %v1873, %v1870
        %1880 = vst.msk [vmem:[#allocation4] sm:$0xff] %vm1633, %v1876
        %1881 = vst.msk [vmem:[#allocation4 + $0x8] sm:$0xff] %vm1633, %v1877
        %1882 = vst.msk [vmem:[#allocation4 + $0x10] sm:$0xff] %vm1633, %v1878
        %1883 = vst.msk [vmem:[#allocation4 + $0x18] sm:$0xff] %vm1633, %v1879
        %v1884 = vld [vmem:[#allocation2] sm:$0xff]
        %v1885 = vld [vmem:[#allocation2 + $0x8] sm:$0xff]
        %v1886 = vld [vmem:[#allocation2 + $0x10] sm:$0xff]
        %v1887 = vld [vmem:[#allocation2 + $0x18] sm:$0xff]
        %v1888 = vld [vmem:[#allocation3] sm:$0xff]
        %v1889 = vld [vmem:[#allocation3 + $0x10] sm:$0xff]
        %v1890 = vld [vmem:[#allocation3 + $0x20] sm:$0xff]
        %v1891 = vld [vmem:[#allocation3 + $0x30] sm:$0xff]
        %v1892 = vld [vmem:[#allocation3 + $0x40] sm:$0xff]
        %v1893 = vld [vmem:[#allocation3 + $0x50] sm:$0xff]
        %v1894 = vld [vmem:[#allocation3 + $0x60] sm:$0xff]
        %v1895 = vld [vmem:[#allocation3 + $0x70] sm:$0xff]
        %v1896 = vld [vmem:[#allocation3 + $0x8] sm:$0xff]
        %v1897 = vld [vmem:[#allocation3 + $0x18] sm:$0xff]
        %v1898 = vld [vmem:[#allocation3 + $0x28] sm:$0xff]
        %v1899 = vld [vmem:[#allocation3 + $0x38] sm:$0xff]
        %v1900 = vld [vmem:[#allocation3 + $0x48] sm:$0xff]
        %v1901 = vld [vmem:[#allocation3 + $0x58] sm:$0xff]
        %v1902 = vld [vmem:[#allocation3 + $0x68] sm:$0xff]
        %v1903 = vld [vmem:[#allocation3 + $0x78] sm:$0xff]
        %1908 = vrot.lane.b32.xlu0 %v1884, 96
        %v1909 = vpop.permute.xlu0 %1908
        %1910 = vrot.lane.b32.xlu0 %v1885, 96
        %v1911 = vpop.permute.xlu0 %1910
        %1912 = vrot.lane.b32.xlu0 %v1886, 96
        %v1913 = vpop.permute.xlu0 %1912
        %1914 = vrot.lane.b32.xlu0 %v1887, 96
        %v1915 = vpop.permute.xlu0 %1914
        %1924 = vrot.lane.b32.xlu0 %v1888, 96
        %v1925 = vpop.permute.xlu0 %1924
        %1926 = vrot.lane.b32.xlu0 %v1889, 96
        %v1927 = vpop.permute.xlu0 %1926
        %1928 = vrot.lane.b32.xlu0 %v1890, 96
        %v1929 = vpop.permute.xlu0 %1928
        %1930 = vrot.lane.b32.xlu0 %v1891, 96
        %v1931 = vpop.permute.xlu0 %1930
        %1932 = vrot.lane.b32.xlu0 %v1892, 96
        %v1933 = vpop.permute.xlu0 %1932
        %1934 = vrot.lane.b32.xlu0 %v1893, 96
        %v1935 = vpop.permute.xlu0 %1934
        %1936 = vrot.lane.b32.xlu0 %v1894, 96
        %v1937 = vpop.permute.xlu0 %1936
        %1938 = vrot.lane.b32.xlu0 %v1895, 96
        %v1939 = vpop.permute.xlu0 %1938
        %v1941 = vsel %vm1633, %v1909, 0
        %v1944 = vsel %vm1633, %v1911, 0
        %v1947 = vsel %vm1633, %v1913, 0
        %v1950 = vsel %vm1633, %v1915, 0
        %v1953 = vsel %vm1633, %v1925, 0
        %v1956 = vsel %vm1633, %v1927, 0
        %v1959 = vsel %vm1633, %v1929, 0
        %v1962 = vsel %vm1633, %v1931, 0
        %v1965 = vsel %vm1633, %v1933, 0
        %v1968 = vsel %vm1633, %v1935, 0
        %v1971 = vsel %vm1633, %v1937, 0
        %v1974 = vsel %vm1633, %v1939, 0
        %1976 = vmatprep.subr.bf16.mxu0 0
        %1977 = vmatpush1.bf16.xpose.msra.mxu0 %v1953
        %1978 = vmatprep.subr.bf16.mxu0 0
        %1979 = vmatpush1.bf16.xpose.msra.mxu0 %v1956
        %1980 = vmatprep.subr.bf16.mxu0 0
        %1981 = vmatpush1.bf16.xpose.msra.mxu0 %v1959
        %1982 = vmatprep.subr.bf16.mxu0 0
        %1983 = vmatpush1.bf16.xpose.msra.mxu0 %v1962
        %1984 = vmatprep.subr.bf16.mxu0 0
        %1985 = vmatpush1.bf16.xpose.msra.mxu0 %v1965
        %1986 = vmatprep.subr.bf16.mxu0 0
        %1987 = vmatpush1.bf16.xpose.msra.mxu0 %v1968
        %1988 = vmatprep.subr.bf16.mxu0 0
        %1989 = vmatpush1.bf16.xpose.msra.mxu0 %v1971
        %1990 = vmatprep.subr.bf16.mxu0 0
        %1991 = vmatpush1.bf16.xpose.msra.mxu0 %v1974
        %1992 = vmatprep.subr.bf16.mxu0 0
        %1993 = vmatpush1.bf16.xpose.msra.mxu0 0
        %1994 = vmatprep.subr.bf16.mxu0 0
        %1995 = vmatpush1.bf16.xpose.msra.mxu0 0
        %1996 = vmatprep.subr.bf16.mxu0 0
        %1997 = vmatpush1.bf16.xpose.msra.mxu0 0
        %1998 = vmatprep.subr.bf16.mxu0 0
        %1999 = vmatpush1.bf16.xpose.msra.mxu0 0
        %2000 = vmatprep.subr.bf16.mxu0 0
        %2001 = vmatpush1.bf16.xpose.msra.mxu0 0
        %2002 = vmatprep.subr.bf16.mxu0 0
        %2003 = vmatpush1.bf16.xpose.msra.mxu0 0
        %2004 = vmatprep.subr.bf16.mxu0 0
        %2005 = vmatpush1.bf16.xpose.msra.mxu0 0
        %2006 = vmatprep.subr.bf16.mxu0 0
        %2007 = vmatpush1.bf16.xpose.msra.mxu0 0
        %2008 = vmatprep.mubr.bf16.mxu0 0
        %2009 = vmatmul.mubr.bf16.gmra.mrb[0].mxu0 %v1941
        %v2010 = vpop.f32.mrb[0].mxu0
        %v2011 = vadd.f32 %v1611, %v2010
        %v2012 = vpop.f32.mrb[0].mxu0
        %v2013 = vpop.f32.mrb[0].mxu0
        %v2014 = vadd.f32 %v1611, %v2013
        %v2015 = vpop.f32.mrb[0].mxu0
        %2016 = vmatprep.mubr.bf16.mxu0 0
        %2017 = vmatmul.mubr.bf16.gmra.mrb[0].mxu0 %v1944
        %v2018 = vpop.f32.mrb[0].mxu0
        %v2019 = vadd.f32 %v1611, %v2018
        %v2020 = vpop.f32.mrb[0].mxu0
        %v2021 = vpop.f32.mrb[0].mxu0
        %v2022 = vadd.f32 %v1611, %v2021
        %v2023 = vpop.f32.mrb[0].mxu0
        %2024 = vmatprep.mubr.bf16.mxu0 0
        %2025 = vmatmul.mubr.bf16.gmra.mrb[0].mxu0 %v1947
        %v2026 = vpop.f32.mrb[0].mxu0
        %v2027 = vadd.f32 %v1611, %v2026
        %v2028 = vpop.f32.mrb[0].mxu0
        %v2029 = vpop.f32.mrb[0].mxu0
        %v2030 = vadd.f32 %v1611, %v2029
        %v2031 = vpop.f32.mrb[0].mxu0
        %2032 = vmatprep.mubr.bf16.mxu0 0
        %2033 = vmatmul.mubr.bf16.gmra.mrb[0].mxu0 %v1950
        %v2034 = vpop.f32.mrb[0].mxu0
        %v2035 = vadd.f32 %v1611, %v2034
        %v2036 = vpop.f32.mrb[0].mxu0
        %v2037 = vpop.f32.mrb[0].mxu0
        %v2038 = vadd.f32 %v1611, %v2037
        %v2039 = vpop.f32.mrb[0].mxu0
        %2040 = vdwg.mxu0
        %2041 = vmax.xlane.f32.xlu0 %v2011
        %v2042 = vpop.xlane.xlu0 %2041
        %2043 = vmax.xlane.f32.xlu0 %v2014
        %v2044 = vpop.xlane.xlu0 %2043
        %2045 = vmax.xlane.f32.xlu0 %v2019
        %v2046 = vpop.xlane.xlu0 %2045
        %2047 = vmax.xlane.f32.xlu0 %v2022
        %v2048 = vpop.xlane.xlu0 %2047
        %2049 = vmax.xlane.f32.xlu0 %v2027
        %v2050 = vpop.xlane.xlu0 %2049
        %2051 = vmax.xlane.f32.xlu0 %v2030
        %v2052 = vpop.xlane.xlu0 %2051
        %2053 = vmax.xlane.f32.xlu0 %v2035
        %v2054 = vpop.xlane.xlu0 %2053
        %2055 = vmax.xlane.f32.xlu0 %v2038
        %v2056 = vpop.xlane.xlu0 %2055
        %v2057 = vsub.f32 %v2011, %v2042
        %v2058 = vsub.f32 %v2014, %v2044
        %v2059 = vsub.f32 %v2019, %v2046
        %v2060 = vsub.f32 %v2022, %v2048
        %v2061 = vsub.f32 %v2027, %v2050
        %v2062 = vsub.f32 %v2030, %v2052
        %v2063 = vsub.f32 %v2035, %v2054
        %v2064 = vsub.f32 %v2038, %v2056
        %v2065 = vmul.f32 %v2057, 1.442695
        %v2066 = vpow.pop %v2065
        %v2067 = vmul.f32 %v2058, 1.442695
        %v2068 = vpow.pop %v2067
        %v2069 = vmul.f32 %v2059, 1.442695
        %v2070 = vpow.pop %v2069
        %v2071 = vmul.f32 %v2060, 1.442695
        %v2072 = vpow.pop %v2071
        %v2073 = vmul.f32 %v2061, 1.442695
        %v2074 = vpow.pop %v2073
        %v2075 = vmul.f32 %v2062, 1.442695
        %v2076 = vpow.pop %v2075
        %v2077 = vmul.f32 %v2063, 1.442695
        %v2078 = vpow.pop %v2077
        %v2079 = vmul.f32 %v2064, 1.442695
        %v2080 = vpow.pop %v2079
        %2081 = vadd.xlane.f32.xlu0 %v2066
        %v2082 = vpop.xlane.xlu0 %2081
        %2083 = vadd.xlane.f32.xlu0 %v2068
        %v2084 = vpop.xlane.xlu0 %2083
        %2085 = vadd.xlane.f32.xlu0 %v2070
        %v2086 = vpop.xlane.xlu0 %2085
        %2087 = vadd.xlane.f32.xlu0 %v2072
        %v2088 = vpop.xlane.xlu0 %2087
        %2089 = vadd.xlane.f32.xlu0 %v2074
        %v2090 = vpop.xlane.xlu0 %2089
        %2091 = vadd.xlane.f32.xlu0 %v2076
        %v2092 = vpop.xlane.xlu0 %2091
        %2093 = vadd.xlane.f32.xlu0 %v2078
        %v2094 = vpop.xlane.xlu0 %2093
        %2095 = vadd.xlane.f32.xlu0 %v2080
        %v2096 = vpop.xlane.xlu0 %2095
        %v2097 = vrcp.pop %v2082
        %v2098 = vrcp.pop %v2084
        %v2099 = vrcp.pop %v2086
        %v2100 = vrcp.pop %v2088
        %v2101 = vrcp.pop %v2090
        %v2102 = vrcp.pop %v2092
        %v2103 = vrcp.pop %v2094
        %v2104 = vrcp.pop %v2096
        %v2105 = vmul.f32 %v2066, %v2097
        %v2106 = vmul.f32 %v2068, %v2098
        %v2107 = vmul.f32 %v2070, %v2099
        %v2108 = vmul.f32 %v2072, %v2100
        %v2109 = vmul.f32 %v2074, %v2101
        %v2110 = vmul.f32 %v2076, %v2102
        %v2111 = vmul.f32 %v2078, %v2103
        %v2112 = vmul.f32 %v2080, %v2104
        %v2113 = vpack.c.bf16 %v2106, %v2105
        %v2114 = vpack.c.bf16 %v2108, %v2107
        %v2115 = vpack.c.bf16 %v2110, %v2109
        %v2116 = vpack.c.bf16 %v2112, %v2111
        %2125 = vrot.lane.b32.xlu0 %v1896, 96
        %v2126 = vpop.permute.xlu0 %2125
        %2127 = vrot.lane.b32.xlu0 %v1897, 96
        %v2128 = vpop.permute.xlu0 %2127
        %2129 = vrot.lane.b32.xlu0 %v1898, 96
        %v2130 = vpop.permute.xlu0 %2129
        %2131 = vrot.lane.b32.xlu0 %v1899, 96
        %v2132 = vpop.permute.xlu0 %2131
        %2133 = vrot.lane.b32.xlu0 %v1900, 96
        %v2134 = vpop.permute.xlu0 %2133
        %2135 = vrot.lane.b32.xlu0 %v1901, 96
        %v2136 = vpop.permute.xlu0 %2135
        %2137 = vrot.lane.b32.xlu0 %v1902, 96
        %v2138 = vpop.permute.xlu0 %2137
        %2139 = vrot.lane.b32.xlu0 %v1903, 96
        %v2140 = vpop.permute.xlu0 %2139
        %2149 = vmatprep.subr.bf16.mxu0 0
        %2150 = vmatpush1.bf16.msra.mxu0 %v2126
        %2151 = vmatprep.subr.bf16.mxu0 0
        %2152 = vmatpush1.bf16.msra.mxu0 %v2128
        %2153 = vmatprep.subr.bf16.mxu0 0
        %2154 = vmatpush1.bf16.msra.mxu0 %v2130
        %2155 = vmatprep.subr.bf16.mxu0 0
        %2156 = vmatpush1.bf16.msra.mxu0 %v2132
        %2157 = vmatprep.subr.bf16.mxu0 0
        %2158 = vmatpush1.bf16.msra.mxu0 %v2134
        %2159 = vmatprep.subr.bf16.mxu0 0
        %2160 = vmatpush1.bf16.msra.mxu0 %v2136
        %2161 = vmatprep.subr.bf16.mxu0 0
        %2162 = vmatpush1.bf16.msra.mxu0 %v2138
        %2163 = vmatprep.subr.bf16.mxu0 0
        %2164 = vmatpush1.bf16.msra.mxu0 %v2140
        %2165 = vmatprep.subr.bf16.mxu0 0
        %2166 = vmatpush1.bf16.msra.mxu0 0
        %2167 = vmatprep.subr.bf16.mxu0 0
        %2168 = vmatpush1.bf16.msra.mxu0 0
        %2169 = vmatprep.subr.bf16.mxu0 0
        %2170 = vmatpush1.bf16.msra.mxu0 0
        %2171 = vmatprep.subr.bf16.mxu0 0
        %2172 = vmatpush1.bf16.msra.mxu0 0
        %2173 = vmatprep.subr.bf16.mxu0 0
        %2174 = vmatpush1.bf16.msra.mxu0 0
        %2175 = vmatprep.subr.bf16.mxu0 0
        %2176 = vmatpush1.bf16.msra.mxu0 0
        %2177 = vmatprep.subr.bf16.mxu0 0
        %2178 = vmatpush1.bf16.msra.mxu0 0
        %2179 = vmatprep.subr.bf16.mxu0 0
        %2180 = vmatpush1.bf16.msra.mxu0 0
        %2181 = vmatprep.mubr.bf16.mxu0 0
        %2182 = vmatmul.mubr.bf16.gmra.mrb[0].mxu0 %v2113
        %v2183 = vpop.f32.mrb[0].mxu0
        %v2184 = vadd.f32 0.0, %v2183
        %v2185 = vpop.f32.mrb[0].mxu0
        %v2186 = vpop.f32.mrb[0].mxu0
        %v2187 = vadd.f32 0.0, %v2186
        %v2188 = vpop.f32.mrb[0].mxu0
        %2189 = vmatprep.mubr.bf16.mxu0 0
        %2190 = vmatmul.mubr.bf16.gmra.mrb[0].mxu0 %v2114
        %v2191 = vpop.f32.mrb[0].mxu0
        %v2192 = vadd.f32 0.0, %v2191
        %v2193 = vpop.f32.mrb[0].mxu0
        %v2194 = vpop.f32.mrb[0].mxu0
        %v2195 = vadd.f32 0.0, %v2194
        %v2196 = vpop.f32.mrb[0].mxu0
        %2197 = vmatprep.mubr.bf16.mxu0 0
        %2198 = vmatmul.mubr.bf16.gmra.mrb[0].mxu0 %v2115
        %v2199 = vpop.f32.mrb[0].mxu0
        %v2200 = vadd.f32 0.0, %v2199
        %v2201 = vpop.f32.mrb[0].mxu0
        %v2202 = vpop.f32.mrb[0].mxu0
        %v2203 = vadd.f32 0.0, %v2202
        %v2204 = vpop.f32.mrb[0].mxu0
        %2205 = vmatprep.mubr.bf16.mxu0 0
        %2206 = vmatmul.mubr.bf16.gmra.mrb[0].mxu0 %v2116
        %v2207 = vpop.f32.mrb[0].mxu0
        %v2208 = vadd.f32 0.0, %v2207
        %v2209 = vpop.f32.mrb[0].mxu0
        %v2210 = vpop.f32.mrb[0].mxu0
        %v2211 = vadd.f32 0.0, %v2210
        %v2212 = vpop.f32.mrb[0].mxu0
        %2213 = vdwg.mxu0
        %v2214 = vpack.c.bf16 %v2187, %v2184
        %v2215 = vpack.c.bf16 %v2195, %v2192
        %v2216 = vpack.c.bf16 %v2203, %v2200
        %v2217 = vpack.c.bf16 %v2211, %v2208
        %2222 = vrot.lane.b32.xlu0 %v2214, 32
        %v2223 = vpop.permute.xlu0 %2222
        %2224 = vrot.lane.b32.xlu0 %v2215, 32
        %v2225 = vpop.permute.xlu0 %2224
        %2226 = vrot.lane.b32.xlu0 %v2216, 32
        %v2227 = vpop.permute.xlu0 %2226
        %2228 = vrot.lane.b32.xlu0 %v2217, 32
        %v2229 = vpop.permute.xlu0 %2228
        %vm2234 = vcmask 523520
        %2235 = vst.msk [vmem:[#allocation4] sm:$0xff] %vm2234, %v2223
        %2236 = vst.msk [vmem:[#allocation4 + $0x8] sm:$0xff] %vm2234, %v2225
        %2237 = vst.msk [vmem:[#allocation4 + $0x10] sm:$0xff] %vm2234, %v2227
        %2238 = vst.msk [vmem:[#allocation4 + $0x18] sm:$0xff] %vm2234, %v2229
        %v2239 = vld [vmem:[#allocation2] sm:$0xff]
        %v2240 = vld [vmem:[#allocation2 + $0x8] sm:$0xff]
        %v2241 = vld [vmem:[#allocation2 + $0x10] sm:$0xff]
        %v2242 = vld [vmem:[#allocation2 + $0x18] sm:$0xff]
        %v2243 = vld [vmem:[#allocation3] sm:$0xff]
        %v2244 = vld [vmem:[#allocation3 + $0x10] sm:$0xff]
        %v2245 = vld [vmem:[#allocation3 + $0x20] sm:$0xff]
        %v2246 = vld [vmem:[#allocation3 + $0x30] sm:$0xff]
        %v2247 = vld [vmem:[#allocation3 + $0x40] sm:$0xff]
        %v2248 = vld [vmem:[#allocation3 + $0x50] sm:$0xff]
        %v2249 = vld [vmem:[#allocation3 + $0x60] sm:$0xff]
        %v2250 = vld [vmem:[#allocation3 + $0x70] sm:$0xff]
        %v2251 = vld [vmem:[#allocation3 + $0x8] sm:$0xff]
        %v2252 = vld [vmem:[#allocation3 + $0x18] sm:$0xff]
        %v2253 = vld [vmem:[#allocation3 + $0x28] sm:$0xff]
        %v2254 = vld [vmem:[#allocation3 + $0x38] sm:$0xff]
        %v2255 = vld [vmem:[#allocation3 + $0x48] sm:$0xff]
        %v2256 = vld [vmem:[#allocation3 + $0x58] sm:$0xff]
        %v2257 = vld [vmem:[#allocation3 + $0x68] sm:$0xff]
        %v2258 = vld [vmem:[#allocation3 + $0x78] sm:$0xff]
        %2263 = vrot.lane.b32.xlu0 %v2239, 64
        %v2264 = vpop.permute.xlu0 %2263
        %2265 = vrot.lane.b32.xlu0 %v2240, 64
        %v2266 = vpop.permute.xlu0 %2265
        %2267 = vrot.lane.b32.xlu0 %v2241, 64
        %v2268 = vpop.permute.xlu0 %2267
        %2269 = vrot.lane.b32.xlu0 %v2242, 64
        %v2270 = vpop.permute.xlu0 %2269
        %2279 = vrot.lane.b32.xlu0 %v2243, 64
        %v2280 = vpop.permute.xlu0 %2279
        %2281 = vrot.lane.b32.xlu0 %v2244, 64
        %v2282 = vpop.permute.xlu0 %2281
        %2283 = vrot.lane.b32.xlu0 %v2245, 64
        %v2284 = vpop.permute.xlu0 %2283
        %2285 = vrot.lane.b32.xlu0 %v2246, 64
        %v2286 = vpop.permute.xlu0 %2285
        %2287 = vrot.lane.b32.xlu0 %v2247, 64
        %v2288 = vpop.permute.xlu0 %2287
        %2289 = vrot.lane.b32.xlu0 %v2248, 64
        %v2290 = vpop.permute.xlu0 %2289
        %2291 = vrot.lane.b32.xlu0 %v2249, 64
        %v2292 = vpop.permute.xlu0 %2291
        %2293 = vrot.lane.b32.xlu0 %v2250, 64
        %v2294 = vpop.permute.xlu0 %2293
        %v2296 = vsel %vm1633, %v2264, 0
        %v2299 = vsel %vm1633, %v2266, 0
        %v2302 = vsel %vm1633, %v2268, 0
        %v2305 = vsel %vm1633, %v2270, 0
        %v2308 = vsel %vm1633, %v2280, 0
        %v2311 = vsel %vm1633, %v2282, 0
        %v2314 = vsel %vm1633, %v2284, 0
        %v2317 = vsel %vm1633, %v2286, 0
        %v2320 = vsel %vm1633, %v2288, 0
        %v2323 = vsel %vm1633, %v2290, 0
        %v2326 = vsel %vm1633, %v2292, 0
        %v2329 = vsel %vm1633, %v2294, 0
        %2331 = vmatprep.subr.bf16.mxu0 0
        %2332 = vmatpush1.bf16.xpose.msra.mxu0 %v2308
        %2333 = vmatprep.subr.bf16.mxu0 0
        %2334 = vmatpush1.bf16.xpose.msra.mxu0 %v2311
        %2335 = vmatprep.subr.bf16.mxu0 0
        %2336 = vmatpush1.bf16.xpose.msra.mxu0 %v2314
        %2337 = vmatprep.subr.bf16.mxu0 0
        %2338 = vmatpush1.bf16.xpose.msra.mxu0 %v2317
        %2339 = vmatprep.subr.bf16.mxu0 0
        %2340 = vmatpush1.bf16.xpose.msra.mxu0 %v2320
        %2341 = vmatprep.subr.bf16.mxu0 0
        %2342 = vmatpush1.bf16.xpose.msra.mxu0 %v2323
        %2343 = vmatprep.subr.bf16.mxu0 0
        %2344 = vmatpush1.bf16.xpose.msra.mxu0 %v2326
        %2345 = vmatprep.subr.bf16.mxu0 0
        %2346 = vmatpush1.bf16.xpose.msra.mxu0 %v2329
        %2347 = vmatprep.subr.bf16.mxu0 0
        %2348 = vmatpush1.bf16.xpose.msra.mxu0 0
        %2349 = vmatprep.subr.bf16.mxu0 0
        %2350 = vmatpush1.bf16.xpose.msra.mxu0 0
        %2351 = vmatprep.subr.bf16.mxu0 0
        %2352 = vmatpush1.bf16.xpose.msra.mxu0 0
        %2353 = vmatprep.subr.bf16.mxu0 0
        %2354 = vmatpush1.bf16.xpose.msra.mxu0 0
        %2355 = vmatprep.subr.bf16.mxu0 0
        %2356 = vmatpush1.bf16.xpose.msra.mxu0 0
        %2357 = vmatprep.subr.bf16.mxu0 0
        %2358 = vmatpush1.bf16.xpose.msra.mxu0 0
        %2359 = vmatprep.subr.bf16.mxu0 0
        %2360 = vmatpush1.bf16.xpose.msra.mxu0 0
        %2361 = vmatprep.subr.bf16.mxu0 0
        %2362 = vmatpush1.bf16.xpose.msra.mxu0 0
        %2363 = vmatprep.mubr.bf16.mxu0 0
        %2364 = vmatmul.mubr.bf16.gmra.mrb[0].mxu0 %v2296
        %v2365 = vpop.f32.mrb[0].mxu0
        %v2366 = vadd.f32 %v1611, %v2365
        %v2367 = vpop.f32.mrb[0].mxu0
        %v2368 = vpop.f32.mrb[0].mxu0
        %v2369 = vadd.f32 %v1611, %v2368
        %v2370 = vpop.f32.mrb[0].mxu0
        %2371 = vmatprep.mubr.bf16.mxu0 0
        %2372 = vmatmul.mubr.bf16.gmra.mrb[0].mxu0 %v2299
        %v2373 = vpop.f32.mrb[0].mxu0
        %v2374 = vadd.f32 %v1611, %v2373
        %v2375 = vpop.f32.mrb[0].mxu0
        %v2376 = vpop.f32.mrb[0].mxu0
        %v2377 = vadd.f32 %v1611, %v2376
        %v2378 = vpop.f32.mrb[0].mxu0
        %2379 = vmatprep.mubr.bf16.mxu0 0
        %2380 = vmatmul.mubr.bf16.gmra.mrb[0].mxu0 %v2302
        %v2381 = vpop.f32.mrb[0].mxu0
        %v2382 = vadd.f32 %v1611, %v2381
        %v2383 = vpop.f32.mrb[0].mxu0
        %v2384 = vpop.f32.mrb[0].mxu0
        %v2385 = vadd.f32 %v1611, %v2384
        %v2386 = vpop.f32.mrb[0].mxu0
        %2387 = vmatprep.mubr.bf16.mxu0 0
        %2388 = vmatmul.mubr.bf16.gmra.mrb[0].mxu0 %v2305
        %v2389 = vpop.f32.mrb[0].mxu0
        %v2390 = vadd.f32 %v1611, %v2389
        %v2391 = vpop.f32.mrb[0].mxu0
        %v2392 = vpop.f32.mrb[0].mxu0
        %v2393 = vadd.f32 %v1611, %v2392
        %v2394 = vpop.f32.mrb[0].mxu0
        %2395 = vdwg.mxu0
        %2396 = vmax.xlane.f32.xlu0 %v2366
        %v2397 = vpop.xlane.xlu0 %2396
        %2398 = vmax.xlane.f32.xlu0 %v2369
        %v2399 = vpop.xlane.xlu0 %2398
        %2400 = vmax.xlane.f32.xlu0 %v2374
        %v2401 = vpop.xlane.xlu0 %2400
        %2402 = vmax.xlane.f32.xlu0 %v2377
        %v2403 = vpop.xlane.xlu0 %2402
        %2404 = vmax.xlane.f32.xlu0 %v2382
        %v2405 = vpop.xlane.xlu0 %2404
        %2406 = vmax.xlane.f32.xlu0 %v2385
        %v2407 = vpop.xlane.xlu0 %2406
        %2408 = vmax.xlane.f32.xlu0 %v2390
        %v2409 = vpop.xlane.xlu0 %2408
        %2410 = vmax.xlane.f32.xlu0 %v2393
        %v2411 = vpop.xlane.xlu0 %2410
        %v2412 = vsub.f32 %v2366, %v2397
        %v2413 = vsub.f32 %v2369, %v2399
        %v2414 = vsub.f32 %v2374, %v2401
        %v2415 = vsub.f32 %v2377, %v2403
        %v2416 = vsub.f32 %v2382, %v2405
        %v2417 = vsub.f32 %v2385, %v2407
        %v2418 = vsub.f32 %v2390, %v2409
        %v2419 = vsub.f32 %v2393, %v2411
        %v2420 = vmul.f32 %v2412, 1.442695
        %v2421 = vpow.pop %v2420
        %v2422 = vmul.f32 %v2413, 1.442695
        %v2423 = vpow.pop %v2422
        %v2424 = vmul.f32 %v2414, 1.442695
        %v2425 = vpow.pop %v2424
        %v2426 = vmul.f32 %v2415, 1.442695
        %v2427 = vpow.pop %v2426
        %v2428 = vmul.f32 %v2416, 1.442695
        %v2429 = vpow.pop %v2428
        %v2430 = vmul.f32 %v2417, 1.442695
        %v2431 = vpow.pop %v2430
        %v2432 = vmul.f32 %v2418, 1.442695
        %v2433 = vpow.pop %v2432
        %v2434 = vmul.f32 %v2419, 1.442695
        %v2435 = vpow.pop %v2434
        %2436 = vadd.xlane.f32.xlu0 %v2421
        %v2437 = vpop.xlane.xlu0 %2436
        %2438 = vadd.xlane.f32.xlu0 %v2423
        %v2439 = vpop.xlane.xlu0 %2438
        %2440 = vadd.xlane.f32.xlu0 %v2425
        %v2441 = vpop.xlane.xlu0 %2440
        %2442 = vadd.xlane.f32.xlu0 %v2427
        %v2443 = vpop.xlane.xlu0 %2442
        %2444 = vadd.xlane.f32.xlu0 %v2429
        %v2445 = vpop.xlane.xlu0 %2444
        %2446 = vadd.xlane.f32.xlu0 %v2431
        %v2447 = vpop.xlane.xlu0 %2446
        %2448 = vadd.xlane.f32.xlu0 %v2433
        %v2449 = vpop.xlane.xlu0 %2448
        %2450 = vadd.xlane.f32.xlu0 %v2435
        %v2451 = vpop.xlane.xlu0 %2450
        %v2452 = vrcp.pop %v2437
        %v2453 = vrcp.pop %v2439
        %v2454 = vrcp.pop %v2441
        %v2455 = vrcp.pop %v2443
        %v2456 = vrcp.pop %v2445
        %v2457 = vrcp.pop %v2447
        %v2458 = vrcp.pop %v2449
        %v2459 = vrcp.pop %v2451
        %v2460 = vmul.f32 %v2421, %v2452
        %v2461 = vmul.f32 %v2423, %v2453
        %v2462 = vmul.f32 %v2425, %v2454
        %v2463 = vmul.f32 %v2427, %v2455
        %v2464 = vmul.f32 %v2429, %v2456
        %v2465 = vmul.f32 %v2431, %v2457
        %v2466 = vmul.f32 %v2433, %v2458
        %v2467 = vmul.f32 %v2435, %v2459
        %v2468 = vpack.c.bf16 %v2461, %v2460
        %v2469 = vpack.c.bf16 %v2463, %v2462
        %v2470 = vpack.c.bf16 %v2465, %v2464
        %v2471 = vpack.c.bf16 %v2467, %v2466
        %2480 = vrot.lane.b32.xlu0 %v2251, 64
        %v2481 = vpop.permute.xlu0 %2480
        %2482 = vrot.lane.b32.xlu0 %v2252, 64
        %v2483 = vpop.permute.xlu0 %2482
        %2484 = vrot.lane.b32.xlu0 %v2253, 64
        %v2485 = vpop.permute.xlu0 %2484
        %2486 = vrot.lane.b32.xlu0 %v2254, 64
        %v2487 = vpop.permute.xlu0 %2486
        %2488 = vrot.lane.b32.xlu0 %v2255, 64
        %v2489 = vpop.permute.xlu0 %2488
        %2490 = vrot.lane.b32.xlu0 %v2256, 64
        %v2491 = vpop.permute.xlu0 %2490
        %2492 = vrot.lane.b32.xlu0 %v2257, 64
        %v2493 = vpop.permute.xlu0 %2492
        %2494 = vrot.lane.b32.xlu0 %v2258, 64
        %v2495 = vpop.permute.xlu0 %2494
        %2504 = vmatprep.subr.bf16.mxu0 0
        %2505 = vmatpush1.bf16.msra.mxu0 %v2481
        %2506 = vmatprep.subr.bf16.mxu0 0
        %2507 = vmatpush1.bf16.msra.mxu0 %v2483
        %2508 = vmatprep.subr.bf16.mxu0 0
        %2509 = vmatpush1.bf16.msra.mxu0 %v2485
        %2510 = vmatprep.subr.bf16.mxu0 0
        %2511 = vmatpush1.bf16.msra.mxu0 %v2487
        %2512 = vmatprep.subr.bf16.mxu0 0
        %2513 = vmatpush1.bf16.msra.mxu0 %v2489
        %2514 = vmatprep.subr.bf16.mxu0 0
        %2515 = vmatpush1.bf16.msra.mxu0 %v2491
        %2516 = vmatprep.subr.bf16.mxu0 0
        %2517 = vmatpush1.bf16.msra.mxu0 %v2493
        %2518 = vmatprep.subr.bf16.mxu0 0
        %2519 = vmatpush1.bf16.msra.mxu0 %v2495
        %2520 = vmatprep.subr.bf16.mxu0 0
        %2521 = vmatpush1.bf16.msra.mxu0 0
        %2522 = vmatprep.subr.bf16.mxu0 0
        %2523 = vmatpush1.bf16.msra.mxu0 0
        %2524 = vmatprep.subr.bf16.mxu0 0
        %2525 = vmatpush1.bf16.msra.mxu0 0
        %2526 = vmatprep.subr.bf16.mxu0 0
        %2527 = vmatpush1.bf16.msra.mxu0 0
        %2528 = vmatprep.subr.bf16.mxu0 0
        %2529 = vmatpush1.bf16.msra.mxu0 0
        %2530 = vmatprep.subr.bf16.mxu0 0
        %2531 = vmatpush1.bf16.msra.mxu0 0
        %2532 = vmatprep.subr.bf16.mxu0 0
        %2533 = vmatpush1.bf16.msra.mxu0 0
        %2534 = vmatprep.subr.bf16.mxu0 0
        %2535 = vmatpush1.bf16.msra.mxu0 0
        %2536 = vmatprep.mubr.bf16.mxu0 0
        %2537 = vmatmul.mubr.bf16.gmra.mrb[0].mxu0 %v2468
        %v2538 = vpop.f32.mrb[0].mxu0
        %v2539 = vadd.f32 0.0, %v2538
        %v2540 = vpop.f32.mrb[0].mxu0
        %v2541 = vpop.f32.mrb[0].mxu0
        %v2542 = vadd.f32 0.0, %v2541
        %v2543 = vpop.f32.mrb[0].mxu0
        %2544 = vmatprep.mubr.bf16.mxu0 0
        %2545 = vmatmul.mubr.bf16.gmra.mrb[0].mxu0 %v2469
        %v2546 = vpop.f32.mrb[0].mxu0
        %v2547 = vadd.f32 0.0, %v2546
        %v2548 = vpop.f32.mrb[0].mxu0
        %v2549 = vpop.f32.mrb[0].mxu0
        %v2550 = vadd.f32 0.0, %v2549
        %v2551 = vpop.f32.mrb[0].mxu0
        %2552 = vmatprep.mubr.bf16.mxu0 0
        %2553 = vmatmul.mubr.bf16.gmra.mrb[0].mxu0 %v2470
        %v2554 = vpop.f32.mrb[0].mxu0
        %v2555 = vadd.f32 0.0, %v2554
        %v2556 = vpop.f32.mrb[0].mxu0
        %v2557 = vpop.f32.mrb[0].mxu0
        %v2558 = vadd.f32 0.0, %v2557
        %v2559 = vpop.f32.mrb[0].mxu0
        %2560 = vmatprep.mubr.bf16.mxu0 0
        %2561 = vmatmul.mubr.bf16.gmra.mrb[0].mxu0 %v2471
        %v2562 = vpop.f32.mrb[0].mxu0
        %v2563 = vadd.f32 0.0, %v2562
        %v2564 = vpop.f32.mrb[0].mxu0
        %v2565 = vpop.f32.mrb[0].mxu0
        %v2566 = vadd.f32 0.0, %v2565
        %v2567 = vpop.f32.mrb[0].mxu0
        %2568 = vdwg.mxu0
        %v2569 = vpack.c.bf16 %v2542, %v2539
        %v2570 = vpack.c.bf16 %v2550, %v2547
        %v2571 = vpack.c.bf16 %v2558, %v2555
        %v2572 = vpack.c.bf16 %v2566, %v2563
        %2577 = vrot.lane.b32.xlu0 %v2569, 64
        %v2578 = vpop.permute.xlu0 %2577
        %2579 = vrot.lane.b32.xlu0 %v2570, 64
        %v2580 = vpop.permute.xlu0 %2579
        %2581 = vrot.lane.b32.xlu0 %v2571, 64
        %v2582 = vpop.permute.xlu0 %2581
        %2583 = vrot.lane.b32.xlu0 %v2572, 64
        %v2584 = vpop.permute.xlu0 %2583
        %vm2589 = vcmask 785920
        %2590 = vst.msk [vmem:[#allocation4] sm:$0xff] %vm2589, %v2578
        %2591 = vst.msk [vmem:[#allocation4 + $0x8] sm:$0xff] %vm2589, %v2580
        %2592 = vst.msk [vmem:[#allocation4 + $0x10] sm:$0xff] %vm2589, %v2582
        %2593 = vst.msk [vmem:[#allocation4 + $0x18] sm:$0xff] %vm2589, %v2584
        %v2594 = vld [vmem:[#allocation2] sm:$0xff]
        %v2595 = vld [vmem:[#allocation2 + $0x8] sm:$0xff]
        %v2596 = vld [vmem:[#allocation2 + $0x10] sm:$0xff]
        %v2597 = vld [vmem:[#allocation2 + $0x18] sm:$0xff]
        %v2598 = vld [vmem:[#allocation3] sm:$0xff]
        %v2599 = vld [vmem:[#allocation3 + $0x10] sm:$0xff]
        %v2600 = vld [vmem:[#allocation3 + $0x20] sm:$0xff]
        %v2601 = vld [vmem:[#allocation3 + $0x30] sm:$0xff]
        %v2602 = vld [vmem:[#allocation3 + $0x40] sm:$0xff]
        %v2603 = vld [vmem:[#allocation3 + $0x50] sm:$0xff]
        %v2604 = vld [vmem:[#allocation3 + $0x60] sm:$0xff]
        %v2605 = vld [vmem:[#allocation3 + $0x70] sm:$0xff]
        %v2606 = vld [vmem:[#allocation3 + $0x8] sm:$0xff]
        %v2607 = vld [vmem:[#allocation3 + $0x18] sm:$0xff]
        %v2608 = vld [vmem:[#allocation3 + $0x28] sm:$0xff]
        %v2609 = vld [vmem:[#allocation3 + $0x38] sm:$0xff]
        %v2610 = vld [vmem:[#allocation3 + $0x48] sm:$0xff]
        %v2611 = vld [vmem:[#allocation3 + $0x58] sm:$0xff]
        %v2612 = vld [vmem:[#allocation3 + $0x68] sm:$0xff]
        %v2613 = vld [vmem:[#allocation3 + $0x78] sm:$0xff]
        %2618 = vrot.lane.b32.xlu0 %v2594, 32
        %v2619 = vpop.permute.xlu0 %2618
        %2620 = vrot.lane.b32.xlu0 %v2595, 32
        %v2621 = vpop.permute.xlu0 %2620
        %2622 = vrot.lane.b32.xlu0 %v2596, 32
        %v2623 = vpop.permute.xlu0 %2622
        %2624 = vrot.lane.b32.xlu0 %v2597, 32
        %v2625 = vpop.permute.xlu0 %2624
        %2634 = vrot.lane.b32.xlu0 %v2598, 32
        %v2635 = vpop.permute.xlu0 %2634
        %2636 = vrot.lane.b32.xlu0 %v2599, 32
        %v2637 = vpop.permute.xlu0 %2636
        %2638 = vrot.lane.b32.xlu0 %v2600, 32
        %v2639 = vpop.permute.xlu0 %2638
        %2640 = vrot.lane.b32.xlu0 %v2601, 32
        %v2641 = vpop.permute.xlu0 %2640
        %2642 = vrot.lane.b32.xlu0 %v2602, 32
        %v2643 = vpop.permute.xlu0 %2642
        %2644 = vrot.lane.b32.xlu0 %v2603, 32
        %v2645 = vpop.permute.xlu0 %2644
        %2646 = vrot.lane.b32.xlu0 %v2604, 32
        %v2647 = vpop.permute.xlu0 %2646
        %2648 = vrot.lane.b32.xlu0 %v2605, 32
        %v2649 = vpop.permute.xlu0 %2648
        %v2651 = vsel %vm1633, %v2619, 0
        %v2654 = vsel %vm1633, %v2621, 0
        %v2657 = vsel %vm1633, %v2623, 0
        %v2660 = vsel %vm1633, %v2625, 0
        %v2663 = vsel %vm1633, %v2635, 0
        %v2666 = vsel %vm1633, %v2637, 0
        %v2669 = vsel %vm1633, %v2639, 0
        %v2672 = vsel %vm1633, %v2641, 0
        %v2675 = vsel %vm1633, %v2643, 0
        %v2678 = vsel %vm1633, %v2645, 0
        %v2681 = vsel %vm1633, %v2647, 0
        %v2684 = vsel %vm1633, %v2649, 0
        %2686 = vmatprep.subr.bf16.mxu0 0
        %2687 = vmatpush1.bf16.xpose.msra.mxu0 %v2663
        %2688 = vmatprep.subr.bf16.mxu0 0
        %2689 = vmatpush1.bf16.xpose.msra.mxu0 %v2666
        %2690 = vmatprep.subr.bf16.mxu0 0
        %2691 = vmatpush1.bf16.xpose.msra.mxu0 %v2669
        %2692 = vmatprep.subr.bf16.mxu0 0
        %2693 = vmatpush1.bf16.xpose.msra.mxu0 %v2672
        %2694 = vmatprep.subr.bf16.mxu0 0
        %2695 = vmatpush1.bf16.xpose.msra.mxu0 %v2675
        %2696 = vmatprep.subr.bf16.mxu0 0
        %2697 = vmatpush1.bf16.xpose.msra.mxu0 %v2678
        %2698 = vmatprep.subr.bf16.mxu0 0
        %2699 = vmatpush1.bf16.xpose.msra.mxu0 %v2681
        %2700 = vmatprep.subr.bf16.mxu0 0
        %2701 = vmatpush1.bf16.xpose.msra.mxu0 %v2684
        %2702 = vmatprep.subr.bf16.mxu0 0
        %2703 = vmatpush1.bf16.xpose.msra.mxu0 0
        %2704 = vmatprep.subr.bf16.mxu0 0
        %2705 = vmatpush1.bf16.xpose.msra.mxu0 0
        %2706 = vmatprep.subr.bf16.mxu0 0
        %2707 = vmatpush1.bf16.xpose.msra.mxu0 0
        %2708 = vmatprep.subr.bf16.mxu0 0
        %2709 = vmatpush1.bf16.xpose.msra.mxu0 0
        %2710 = vmatprep.subr.bf16.mxu0 0
        %2711 = vmatpush1.bf16.xpose.msra.mxu0 0
        %2712 = vmatprep.subr.bf16.mxu0 0
        %2713 = vmatpush1.bf16.xpose.msra.mxu0 0
        %2714 = vmatprep.subr.bf16.mxu0 0
        %2715 = vmatpush1.bf16.xpose.msra.mxu0 0
        %2716 = vmatprep.subr.bf16.mxu0 0
        %2717 = vmatpush1.bf16.xpose.msra.mxu0 0
        %2718 = vmatprep.mubr.bf16.mxu0 0
        %2719 = vmatmul.mubr.bf16.gmra.mrb[0].mxu0 %v2651
        %v2720 = vpop.f32.mrb[0].mxu0
        %v2721 = vadd.f32 %v1611, %v2720
        %v2722 = vpop.f32.mrb[0].mxu0
        %v2723 = vpop.f32.mrb[0].mxu0
        %v2724 = vadd.f32 %v1611, %v2723
        %v2725 = vpop.f32.mrb[0].mxu0
        %2726 = vmatprep.mubr.bf16.mxu0 0
        %2727 = vmatmul.mubr.bf16.gmra.mrb[0].mxu0 %v2654
        %v2728 = vpop.f32.mrb[0].mxu0
        %v2729 = vadd.f32 %v1611, %v2728
        %v2730 = vpop.f32.mrb[0].mxu0
        %v2731 = vpop.f32.mrb[0].mxu0
        %v2732 = vadd.f32 %v1611, %v2731
        %v2733 = vpop.f32.mrb[0].mxu0
        %2734 = vmatprep.mubr.bf16.mxu0 0
        %2735 = vmatmul.mubr.bf16.gmra.mrb[0].mxu0 %v2657
        %v2736 = vpop.f32.mrb[0].mxu0
        %v2737 = vadd.f32 %v1611, %v2736
        %v2738 = vpop.f32.mrb[0].mxu0
        %v2739 = vpop.f32.mrb[0].mxu0
        %v2740 = vadd.f32 %v1611, %v2739
        %v2741 = vpop.f32.mrb[0].mxu0
        %2742 = vmatprep.mubr.bf16.mxu0 0
        %2743 = vmatmul.mubr.bf16.gmra.mrb[0].mxu0 %v2660
        %v2744 = vpop.f32.mrb[0].mxu0
        %v2745 = vadd.f32 %v1611, %v2744
        %v2746 = vpop.f32.mrb[0].mxu0
        %v2747 = vpop.f32.mrb[0].mxu0
        %v2748 = vadd.f32 %v1611, %v2747
        %v2749 = vpop.f32.mrb[0].mxu0
        %2750 = vdwg.mxu0
        %2751 = vmax.xlane.f32.xlu0 %v2721
        %v2752 = vpop.xlane.xlu0 %2751
        %2753 = vmax.xlane.f32.xlu0 %v2724
        %v2754 = vpop.xlane.xlu0 %2753
        %2755 = vmax.xlane.f32.xlu0 %v2729
        %v2756 = vpop.xlane.xlu0 %2755
        %2757 = vmax.xlane.f32.xlu0 %v2732
        %v2758 = vpop.xlane.xlu0 %2757
        %2759 = vmax.xlane.f32.xlu0 %v2737
        %v2760 = vpop.xlane.xlu0 %2759
        %2761 = vmax.xlane.f32.xlu0 %v2740
        %v2762 = vpop.xlane.xlu0 %2761
        %2763 = vmax.xlane.f32.xlu0 %v2745
        %v2764 = vpop.xlane.xlu0 %2763
        %2765 = vmax.xlane.f32.xlu0 %v2748
        %v2766 = vpop.xlane.xlu0 %2765
        %v2767 = vsub.f32 %v2721, %v2752
        %v2768 = vsub.f32 %v2724, %v2754
        %v2769 = vsub.f32 %v2729, %v2756
        %v2770 = vsub.f32 %v2732, %v2758
        %v2771 = vsub.f32 %v2737, %v2760
        %v2772 = vsub.f32 %v2740, %v2762
        %v2773 = vsub.f32 %v2745, %v2764
        %v2774 = vsub.f32 %v2748, %v2766
        %v2775 = vmul.f32 %v2767, 1.442695
        %v2776 = vpow.pop %v2775
        %v2777 = vmul.f32 %v2768, 1.442695
        %v2778 = vpow.pop %v2777
        %v2779 = vmul.f32 %v2769, 1.442695
        %v2780 = vpow.pop %v2779
        %v2781 = vmul.f32 %v2770, 1.442695
        %v2782 = vpow.pop %v2781
        %v2783 = vmul.f32 %v2771, 1.442695
        %v2784 = vpow.pop %v2783
        %v2785 = vmul.f32 %v2772, 1.442695
        %v2786 = vpow.pop %v2785
        %v2787 = vmul.f32 %v2773, 1.442695
        %v2788 = vpow.pop %v2787
        %v2789 = vmul.f32 %v2774, 1.442695
        %v2790 = vpow.pop %v2789
        %2791 = vadd.xlane.f32.xlu0 %v2776
        %v2792 = vpop.xlane.xlu0 %2791
        %2793 = vadd.xlane.f32.xlu0 %v2778
        %v2794 = vpop.xlane.xlu0 %2793
        %2795 = vadd.xlane.f32.xlu0 %v2780
        %v2796 = vpop.xlane.xlu0 %2795
        %2797 = vadd.xlane.f32.xlu0 %v2782
        %v2798 = vpop.xlane.xlu0 %2797
        %2799 = vadd.xlane.f32.xlu0 %v2784
        %v2800 = vpop.xlane.xlu0 %2799
        %2801 = vadd.xlane.f32.xlu0 %v2786
        %v2802 = vpop.xlane.xlu0 %2801
        %2803 = vadd.xlane.f32.xlu0 %v2788
        %v2804 = vpop.xlane.xlu0 %2803
        %2805 = vadd.xlane.f32.xlu0 %v2790
        %v2806 = vpop.xlane.xlu0 %2805
        %v2807 = vrcp.pop %v2792
        %v2808 = vrcp.pop %v2794
        %v2809 = vrcp.pop %v2796
        %v2810 = vrcp.pop %v2798
        %v2811 = vrcp.pop %v2800
        %v2812 = vrcp.pop %v2802
        %v2813 = vrcp.pop %v2804
        %v2814 = vrcp.pop %v2806
        %v2815 = vmul.f32 %v2776, %v2807
        %v2816 = vmul.f32 %v2778, %v2808
        %v2817 = vmul.f32 %v2780, %v2809
        %v2818 = vmul.f32 %v2782, %v2810
        %v2819 = vmul.f32 %v2784, %v2811
        %v2820 = vmul.f32 %v2786, %v2812
        %v2821 = vmul.f32 %v2788, %v2813
        %v2822 = vmul.f32 %v2790, %v2814
        %v2823 = vpack.c.bf16 %v2816, %v2815
        %v2824 = vpack.c.bf16 %v2818, %v2817
        %v2825 = vpack.c.bf16 %v2820, %v2819
        %v2826 = vpack.c.bf16 %v2822, %v2821
        %2835 = vrot.lane.b32.xlu0 %v2606, 32
        %v2836 = vpop.permute.xlu0 %2835
        %2837 = vrot.lane.b32.xlu0 %v2607, 32
        %v2838 = vpop.permute.xlu0 %2837
        %2839 = vrot.lane.b32.xlu0 %v2608, 32
        %v2840 = vpop.permute.xlu0 %2839
        %2841 = vrot.lane.b32.xlu0 %v2609, 32
        %v2842 = vpop.permute.xlu0 %2841
        %2843 = vrot.lane.b32.xlu0 %v2610, 32
        %v2844 = vpop.permute.xlu0 %2843
        %2845 = vrot.lane.b32.xlu0 %v2611, 32
        %v2846 = vpop.permute.xlu0 %2845
        %2847 = vrot.lane.b32.xlu0 %v2612, 32
        %v2848 = vpop.permute.xlu0 %2847
        %2849 = vrot.lane.b32.xlu0 %v2613, 32
        %v2850 = vpop.permute.xlu0 %2849
        %2859 = vmatprep.subr.bf16.mxu0 0
        %2860 = vmatpush1.bf16.msra.mxu0 %v2836
        %2861 = vmatprep.subr.bf16.mxu0 0
        %2862 = vmatpush1.bf16.msra.mxu0 %v2838
        %2863 = vmatprep.subr.bf16.mxu0 0
        %2864 = vmatpush1.bf16.msra.mxu0 %v2840
        %2865 = vmatprep.subr.bf16.mxu0 0
        %2866 = vmatpush1.bf16.msra.mxu0 %v2842
        %2867 = vmatprep.subr.bf16.mxu0 0
        %2868 = vmatpush1.bf16.msra.mxu0 %v2844
        %2869 = vmatprep.subr.bf16.mxu0 0
        %2870 = vmatpush1.bf16.msra.mxu0 %v2846
        %2871 = vmatprep.subr.bf16.mxu0 0
        %2872 = vmatpush1.bf16.msra.mxu0 %v2848
        %2873 = vmatprep.subr.bf16.mxu0 0
        %2874 = vmatpush1.bf16.msra.mxu0 %v2850
        %2875 = vmatprep.subr.bf16.mxu0 0
        %2876 = vmatpush1.bf16.msra.mxu0 0
        %2877 = vmatprep.subr.bf16.mxu0 0
        %2878 = vmatpush1.bf16.msra.mxu0 0
        %2879 = vmatprep.subr.bf16.mxu0 0
        %2880 = vmatpush1.bf16.msra.mxu0 0
        %2881 = vmatprep.subr.bf16.mxu0 0
        %2882 = vmatpush1.bf16.msra.mxu0 0
        %2883 = vmatprep.subr.bf16.mxu0 0
        %2884 = vmatpush1.bf16.msra.mxu0 0
        %2885 = vmatprep.subr.bf16.mxu0 0
        %2886 = vmatpush1.bf16.msra.mxu0 0
        %2887 = vmatprep.subr.bf16.mxu0 0
        %2888 = vmatpush1.bf16.msra.mxu0 0
        %2889 = vmatprep.subr.bf16.mxu0 0
        %2890 = vmatpush1.bf16.msra.mxu0 0
        %2891 = vmatprep.mubr.bf16.mxu0 0
        %2892 = vmatmul.mubr.bf16.gmra.mrb[0].mxu0 %v2823
        %v2893 = vpop.f32.mrb[0].mxu0
        %v2894 = vadd.f32 0.0, %v2893
        %v2895 = vpop.f32.mrb[0].mxu0
        %v2896 = vpop.f32.mrb[0].mxu0
        %v2897 = vadd.f32 0.0, %v2896
        %v2898 = vpop.f32.mrb[0].mxu0
        %2899 = vmatprep.mubr.bf16.mxu0 0
        %2900 = vmatmul.mubr.bf16.gmra.mrb[0].mxu0 %v2824
        %v2901 = vpop.f32.mrb[0].mxu0
        %v2902 = vadd.f32 0.0, %v2901
        %v2903 = vpop.f32.mrb[0].mxu0
        %v2904 = vpop.f32.mrb[0].mxu0
        %v2905 = vadd.f32 0.0, %v2904
        %v2906 = vpop.f32.mrb[0].mxu0
        %2907 = vmatprep.mubr.bf16.mxu0 0
        %2908 = vmatmul.mubr.bf16.gmra.mrb[0].mxu0 %v2825
        %v2909 = vpop.f32.mrb[0].mxu0
        %v2910 = vadd.f32 0.0, %v2909
        %v2911 = vpop.f32.mrb[0].mxu0
        %v2912 = vpop.f32.mrb[0].mxu0
        %v2913 = vadd.f32 0.0, %v2912
        %v2914 = vpop.f32.mrb[0].mxu0
        %2915 = vmatprep.mubr.bf16.mxu0 0
        %2916 = vmatmul.mubr.bf16.gmra.mrb[0].mxu0 %v2826
        %v2917 = vpop.f32.mrb[0].mxu0
        %v2918 = vadd.f32 0.0, %v2917
        %v2919 = vpop.f32.mrb[0].mxu0
        %v2920 = vpop.f32.mrb[0].mxu0
        %v2921 = vadd.f32 0.0, %v2920
        %v2922 = vpop.f32.mrb[0].mxu0
        %2923 = vdwg.mxu0
        %v2924 = vpack.c.bf16 %v2897, %v2894
        %v2925 = vpack.c.bf16 %v2905, %v2902
        %v2926 = vpack.c.bf16 %v2913, %v2910
        %v2927 = vpack.c.bf16 %v2921, %v2918
        %2932 = vrot.lane.b32.xlu0 %v2924, 96
        %v2933 = vpop.permute.xlu0 %2932
        %2934 = vrot.lane.b32.xlu0 %v2925, 96
        %v2935 = vpop.permute.xlu0 %2934
        %2936 = vrot.lane.b32.xlu0 %v2926, 96
        %v2937 = vpop.permute.xlu0 %2936
        %2938 = vrot.lane.b32.xlu0 %v2927, 96
        %v2939 = vpop.permute.xlu0 %2938
        %vm2944 = vcmask 1048320
        %2945 = vst.msk [vmem:[#allocation4] sm:$0xff] %vm2944, %v2933
        %2946 = vst.msk [vmem:[#allocation4 + $0x8] sm:$0xff] %vm2944, %v2935
        %2947 = vst.msk [vmem:[#allocation4 + $0x10] sm:$0xff] %vm2944, %v2937
        %2948 = vst.msk [vmem:[#allocation4 + $0x18] sm:$0xff] %vm2944, %v2939
        %v2949 = vld [vmem:[#allocation4] sm:$0xff]
        %v2950 = vld [vmem:[#allocation4 + $0x8] sm:$0xff]
        %v2951 = vld [vmem:[#allocation4 + $0x10] sm:$0xff]
        %v2952 = vld [vmem:[#allocation4 + $0x18] sm:$0xff]
        %v2953 = vld [vmem:[#allocation17] sm:$0xf]
        %v2954 = vld [vmem:[#allocation17 + $0x4] sm:$0xf]
        %v2955 = vld [vmem:[#allocation17 + $0x8] sm:$0xf]
        %v2956 = vld [vmem:[#allocation17 + $0xc] sm:$0xf]
        %v2957 = vld [vmem:[#allocation17 + $0x10] sm:$0xf]
        %v2958 = vld [vmem:[#allocation17 + $0x14] sm:$0xf]
        %v2959 = vld [vmem:[#allocation17 + $0x18] sm:$0xf]
        %v2960 = vld [vmem:[#allocation17 + $0x1c] sm:$0xf]
        %v2961 = vld [vmem:[#allocation17 + $0x20] sm:$0xf]
        %v2962 = vld [vmem:[#allocation17 + $0x24] sm:$0xf]
        %v2963 = vld [vmem:[#allocation17 + $0x28] sm:$0xf]
        %v2964 = vld [vmem:[#allocation17 + $0x2c] sm:$0xf]
        %v2965 = vld [vmem:[#allocation17 + $0x30] sm:$0xf]
        %v2966 = vld [vmem:[#allocation17 + $0x34] sm:$0xf]
        %v2967 = vld [vmem:[#allocation17 + $0x38] sm:$0xf]
        %v2968 = vld [vmem:[#allocation17 + $0x3c] sm:$0xf]
        %v2969 = vld [vmem:[#allocation19] sm:$0x1]
        %v2971 = vlaneseq
        %v2972 = vshrl.u32 %v2971, 7
        %v2973 = vsub.s32 0, %v2972
        %v2974 = vrot.slane %v2969, %v2973
        %v2992 = vunpack.c.l.b16 %v2953
        %v2993 = vunpack.c.l.b16 %v2954
        %v2994 = vunpack.c.l.b16 %v2955
        %v2995 = vunpack.c.l.b16 %v2956
        %v2996 = vunpack.c.l.b16 %v2957
        %v2997 = vunpack.c.l.b16 %v2958
        %v2998 = vunpack.c.l.b16 %v2959
        %v2999 = vunpack.c.l.b16 %v2960
        %v3000 = vunpack.c.l.b16 %v2961
        %v3001 = vunpack.c.l.b16 %v2962
        %v3002 = vunpack.c.l.b16 %v2963
        %v3003 = vunpack.c.l.b16 %v2964
        %v3004 = vunpack.c.l.b16 %v2965
        %v3005 = vunpack.c.l.b16 %v2966
        %v3006 = vunpack.c.l.b16 %v2967
        %v3007 = vunpack.c.l.b16 %v2968
        %v3008 = vpack.c.b16 %v2993, %v2992
        %v3009 = vpack.c.b16 %v2995, %v2994
        %v3010 = vpack.c.b16 %v2997, %v2996
        %v3011 = vpack.c.b16 %v2999, %v2998
        %v3012 = vpack.c.b16 %v3001, %v3000
        %v3013 = vpack.c.b16 %v3003, %v3002
        %v3014 = vpack.c.b16 %v3005, %v3004
        %v3015 = vpack.c.b16 %v3007, %v3006
        %3024 = vmatprep.subr.bf16.mxu0 0
        %3025 = vmatpush1.bf16.msra.mxu0 %v3008
        %3026 = vmatprep.subr.bf16.mxu0 0
        %3027 = vmatpush1.bf16.msra.mxu0 %v3009
        %3028 = vmatprep.subr.bf16.mxu0 0
        %3029 = vmatpush1.bf16.msra.mxu0 %v3010
        %3030 = vmatprep.subr.bf16.mxu0 0
        %3031 = vmatpush1.bf16.msra.mxu0 %v3011
        %3032 = vmatprep.subr.bf16.mxu0 0
        %3033 = vmatpush1.bf16.msra.mxu0 %v3012
        %3034 = vmatprep.subr.bf16.mxu0 0
        %3035 = vmatpush1.bf16.msra.mxu0 %v3013
        %3036 = vmatprep.subr.bf16.mxu0 0
        %3037 = vmatpush1.bf16.msra.mxu0 %v3014
        %3038 = vmatprep.subr.bf16.mxu0 0
        %3039 = vmatpush1.bf16.msra.mxu0 %v3015
        %3040 = vmatprep.subr.bf16.mxu0 0
        %3041 = vmatpush1.bf16.msra.mxu0 0
        %3042 = vmatprep.subr.bf16.mxu0 0
        %3043 = vmatpush1.bf16.msra.mxu0 0
        %3044 = vmatprep.subr.bf16.mxu0 0
        %3045 = vmatpush1.bf16.msra.mxu0 0
        %3046 = vmatprep.subr.bf16.mxu0 0
        %3047 = vmatpush1.bf16.msra.mxu0 0
        %3048 = vmatprep.subr.bf16.mxu0 0
        %3049 = vmatpush1.bf16.msra.mxu0 0
        %3050 = vmatprep.subr.bf16.mxu0 0
        %3051 = vmatpush1.bf16.msra.mxu0 0
        %3052 = vmatprep.subr.bf16.mxu0 0
        %3053 = vmatpush1.bf16.msra.mxu0 0
        %3054 = vmatprep.subr.bf16.mxu0 0
        %3055 = vmatpush1.bf16.msra.mxu0 0
        %3056 = vmatprep.mubr.bf16.mxu0 0
        %3057 = vmatmul.mubr.bf16.gmra.mrb[0].mxu0 %v2949
        %v3058 = vpop.f32.mrb[0].mxu0
        %v3059 = vadd.f32 %v2974, %v3058
        %v3060 = vpop.f32.mrb[0].mxu0
        %v3061 = vpop.f32.mrb[0].mxu0
        %v3062 = vadd.f32 %v2974, %v3061
        %v3063 = vpop.f32.mrb[0].mxu0
        %3064 = vmatprep.mubr.bf16.mxu0 0
        %3065 = vmatmul.mubr.bf16.gmra.mrb[0].mxu0 %v2950
        %v3066 = vpop.f32.mrb[0].mxu0
        %v3067 = vadd.f32 %v2974, %v3066
        %v3068 = vpop.f32.mrb[0].mxu0
        %v3069 = vpop.f32.mrb[0].mxu0
        %v3070 = vadd.f32 %v2974, %v3069
        %v3071 = vpop.f32.mrb[0].mxu0
        %3072 = vmatprep.mubr.bf16.mxu0 0
        %3073 = vmatmul.mubr.bf16.gmra.mrb[0].mxu0 %v2951
        %v3074 = vpop.f32.mrb[0].mxu0
        %v3075 = vadd.f32 %v2974, %v3074
        %v3076 = vpop.f32.mrb[0].mxu0
        %v3077 = vpop.f32.mrb[0].mxu0
        %v3078 = vadd.f32 %v2974, %v3077
        %v3079 = vpop.f32.mrb[0].mxu0
        %3080 = vmatprep.mubr.bf16.mxu0 0
        %3081 = vmatmul.mubr.bf16.gmra.mrb[0].mxu0 %v2952
        %v3082 = vpop.f32.mrb[0].mxu0
        %v3083 = vadd.f32 %v2974, %v3082
        %v3084 = vpop.f32.mrb[0].mxu0
        %v3085 = vpop.f32.mrb[0].mxu0
        %v3086 = vadd.f32 %v2974, %v3085
        %v3087 = vpop.f32.mrb[0].mxu0
        %3088 = vdwg.mxu0
        %v3089 = vadd.f32 %v3059, %v844
        %v3090 = vadd.f32 %v3062, %v845
        %v3091 = vadd.f32 %v3067, %v846
        %v3092 = vadd.f32 %v3070, %v847
        %v3093 = vadd.f32 %v3075, %v848
        %v3094 = vadd.f32 %v3078, %v849
        %v3095 = vadd.f32 %v3083, %v850
        %v3096 = vadd.f32 %v3086, %v851
        %v3097 = vld [vmem:[#allocation29] sm:$0x1]
        %v3098 = vld [vmem:[#allocation31] sm:$0x1]
        %3099 = vadd.xlane.f32.xlu0 %v3089
        %v3100 = vpop.xlane.xlu0 %3099
        %3101 = vadd.xlane.f32.xlu0 %v3090
        %v3102 = vpop.xlane.xlu0 %3101
        %3103 = vadd.xlane.f32.xlu0 %v3091
        %v3104 = vpop.xlane.xlu0 %3103
        %3105 = vadd.xlane.f32.xlu0 %v3092
        %v3106 = vpop.xlane.xlu0 %3105
        %3107 = vadd.xlane.f32.xlu0 %v3093
        %v3108 = vpop.xlane.xlu0 %3107
        %3109 = vadd.xlane.f32.xlu0 %v3094
        %v3110 = vpop.xlane.xlu0 %3109
        %3111 = vadd.xlane.f32.xlu0 %v3095
        %v3112 = vpop.xlane.xlu0 %3111
        %3113 = vadd.xlane.f32.xlu0 %v3096
        %v3114 = vpop.xlane.xlu0 %3113
        %v3115 = vmul.f32 %v3100, %v886
        %v3116 = vmul.f32 %v3102, %v886
        %v3117 = vmul.f32 %v3104, %v886
        %v3118 = vmul.f32 %v3106, %v886
        %v3119 = vmul.f32 %v3108, %v886
        %v3120 = vmul.f32 %v3110, %v886
        %v3121 = vmul.f32 %v3112, %v886
        %v3122 = vmul.f32 %v3114, %v886
        %v3123 = vsub.f32 %v3089, %v3115
        %v3124 = vsub.f32 %v3090, %v3116
        %v3125 = vsub.f32 %v3091, %v3117
        %v3126 = vsub.f32 %v3092, %v3118
        %v3127 = vsub.f32 %v3093, %v3119
        %v3128 = vsub.f32 %v3094, %v3120
        %v3129 = vsub.f32 %v3095, %v3121
        %v3130 = vsub.f32 %v3096, %v3122
        %v3131 = vmul.f32 %v3123, %v3123
        %v3132 = vmul.f32 %v3124, %v3124
        %v3133 = vmul.f32 %v3125, %v3125
        %v3134 = vmul.f32 %v3126, %v3126
        %v3135 = vmul.f32 %v3127, %v3127
        %v3136 = vmul.f32 %v3128, %v3128
        %v3137 = vmul.f32 %v3129, %v3129
        %v3138 = vmul.f32 %v3130, %v3130
        %3139 = vadd.xlane.f32.xlu0 %v3131
        %v3140 = vpop.xlane.xlu0 %3139
        %3141 = vadd.xlane.f32.xlu0 %v3132
        %v3142 = vpop.xlane.xlu0 %3141
        %3143 = vadd.xlane.f32.xlu0 %v3133
        %v3144 = vpop.xlane.xlu0 %3143
        %3145 = vadd.xlane.f32.xlu0 %v3134
        %v3146 = vpop.xlane.xlu0 %3145
        %3147 = vadd.xlane.f32.xlu0 %v3135
        %v3148 = vpop.xlane.xlu0 %3147
        %3149 = vadd.xlane.f32.xlu0 %v3136
        %v3150 = vpop.xlane.xlu0 %3149
        %3151 = vadd.xlane.f32.xlu0 %v3137
        %v3152 = vpop.xlane.xlu0 %3151
        %3153 = vadd.xlane.f32.xlu0 %v3138
        %v3154 = vpop.xlane.xlu0 %3153
        %v3155 = vmul.f32 %v3140, %v886
        %v3156 = vmul.f32 %v3142, %v886
        %v3157 = vmul.f32 %v3144, %v886
        %v3158 = vmul.f32 %v3146, %v886
        %v3159 = vmul.f32 %v3148, %v886
        %v3160 = vmul.f32 %v3150, %v886
        %v3161 = vmul.f32 %v3152, %v886
        %v3162 = vmul.f32 %v3154, %v886
        %v3163 = vadd.f32 %v3155, 1e-06
        %v3164 = vadd.f32 %v3156, 1e-06
        %v3165 = vadd.f32 %v3157, 1e-06
        %v3166 = vadd.f32 %v3158, 1e-06
        %v3167 = vadd.f32 %v3159, 1e-06
        %v3168 = vadd.f32 %v3160, 1e-06
        %v3169 = vadd.f32 %v3161, 1e-06
        %v3170 = vadd.f32 %v3162, 1e-06
        %v3171 = vrsqrt.pop %v3163
        %v3172 = vrsqrt.pop %v3164
        %v3173 = vrsqrt.pop %v3165
        %v3174 = vrsqrt.pop %v3166
        %v3175 = vrsqrt.pop %v3167
        %v3176 = vrsqrt.pop %v3168
        %v3177 = vrsqrt.pop %v3169
        %v3178 = vrsqrt.pop %v3170
        %v3179 = vmul.f32 %v3123, %v3171
        %v3180 = vmul.f32 %v3124, %v3172
        %v3181 = vmul.f32 %v3125, %v3173
        %v3182 = vmul.f32 %v3126, %v3174
        %v3183 = vmul.f32 %v3127, %v3175
        %v3184 = vmul.f32 %v3128, %v3176
        %v3185 = vmul.f32 %v3129, %v3177
        %v3186 = vmul.f32 %v3130, %v3178
        %v3188 = vlaneseq
        %v3189 = vshrl.u32 %v3188, 7
        %v3190 = vsub.s32 0, %v3189
        %v3191 = vrot.slane %v3097, %v3190
        %v3193 = vmul.f32 %v3179, %v3191
        %v3194 = vmul.f32 %v3180, %v3191
        %v3195 = vmul.f32 %v3181, %v3191
        %v3196 = vmul.f32 %v3182, %v3191
        %v3197 = vmul.f32 %v3183, %v3191
        %v3198 = vmul.f32 %v3184, %v3191
        %v3199 = vmul.f32 %v3185, %v3191
        %v3200 = vmul.f32 %v3186, %v3191
        %v3202 = vlaneseq
        %v3203 = vshrl.u32 %v3202, 7
        %v3204 = vsub.s32 0, %v3203
        %v3205 = vrot.slane %v3098, %v3204
        %v3207 = vadd.f32 %v3193, %v3205
        %v3208 = vadd.f32 %v3194, %v3205
        %v3209 = vadd.f32 %v3195, %v3205
        %v3210 = vadd.f32 %v3196, %v3205
        %v3211 = vadd.f32 %v3197, %v3205
        %v3212 = vadd.f32 %v3198, %v3205
        %v3213 = vadd.f32 %v3199, %v3205
        %v3214 = vadd.f32 %v3200, %v3205
        %v3215 = vpack.c.bf16 %v3208, %v3207
        %v3216 = vpack.c.bf16 %v3210, %v3209
        %v3217 = vpack.c.bf16 %v3212, %v3211
        %v3218 = vpack.c.bf16 %v3214, %v3213
        %v3219 = vld [vmem:[#allocation23] sm:$0xff]
        %v3220 = vld [vmem:[#allocation23 + $0x8] sm:$0xff]
        %v3221 = vld [vmem:[#allocation23 + $0x10] sm:$0xff]
        %v3222 = vld [vmem:[#allocation23 + $0x18] sm:$0xff]
        %v3223 = vld [vmem:[#allocation23 + $0x20] sm:$0xff]
        %v3224 = vld [vmem:[#allocation23 + $0x28] sm:$0xff]
        %v3225 = vld [vmem:[#allocation23 + $0x30] sm:$0xff]
        %v3226 = vld [vmem:[#allocation23 + $0x38] sm:$0xff]
        %v3227 = vld [vmem:[#allocation23 + $0x40] sm:$0xff]
        %v3228 = vld [vmem:[#allocation23 + $0x48] sm:$0xff]
        %v3229 = vld [vmem:[#allocation23 + $0x50] sm:$0xff]
        %v3230 = vld [vmem:[#allocation23 + $0x58] sm:$0xff]
        %v3231 = vld [vmem:[#allocation23 + $0x60] sm:$0xff]
        %v3232 = vld [vmem:[#allocation23 + $0x68] sm:$0xff]
        %v3233 = vld [vmem:[#allocation23 + $0x70] sm:$0xff]
        %v3234 = vld [vmem:[#allocation23 + $0x78] sm:$0xff]
        %v3235 = vld [vmem:[#allocation25] sm:$0x3]
        %v3237 = vlaneseq
        %v3238 = vshrl.u32 %v3237, 7
        %v3239 = vsub.s32 0, %v3238
        %v3240 = vrot.slane %v3235, %v3239
        %v3241 = vlaneseq
        %v3242 = vshrl.u32 %v3241, 7
        %v3243 = vsub.s32 1, %v3242
        %v3244 = vrot.slane %v3235, %v3243
        %v3263 = vunpack.c.l.b16 %v3219
        %v3264 = vunpack.c.h.b16 %v3219
        %v3265 = vunpack.c.l.b16 %v3220
        %v3266 = vunpack.c.h.b16 %v3220
        %v3267 = vunpack.c.l.b16 %v3221
        %v3268 = vunpack.c.h.b16 %v3221
        %v3269 = vunpack.c.l.b16 %v3222
        %v3270 = vunpack.c.h.b16 %v3222
        %v3271 = vunpack.c.l.b16 %v3223
        %v3272 = vunpack.c.h.b16 %v3223
        %v3273 = vunpack.c.l.b16 %v3224
        %v3274 = vunpack.c.h.b16 %v3224
        %v3275 = vunpack.c.l.b16 %v3225
        %v3276 = vunpack.c.h.b16 %v3225
        %v3277 = vunpack.c.l.b16 %v3226
        %v3278 = vunpack.c.h.b16 %v3226
        %v3279 = vunpack.c.l.b16 %v3227
        %v3280 = vunpack.c.h.b16 %v3227
        %v3281 = vunpack.c.l.b16 %v3228
        %v3282 = vunpack.c.h.b16 %v3228
        %v3283 = vunpack.c.l.b16 %v3229
        %v3284 = vunpack.c.h.b16 %v3229
        %v3285 = vunpack.c.l.b16 %v3230
        %v3286 = vunpack.c.h.b16 %v3230
        %v3287 = vunpack.c.l.b16 %v3231
        %v3288 = vunpack.c.h.b16 %v3231
        %v3289 = vunpack.c.l.b16 %v3232
        %v3290 = vunpack.c.h.b16 %v3232
        %v3291 = vunpack.c.l.b16 %v3233
        %v3292 = vunpack.c.h.b16 %v3233
        %v3293 = vunpack.c.l.b16 %v3234
        %v3294 = vunpack.c.h.b16 %v3234
        %v3295 = vpack.c.b16 %v3265, %v3263
        %v3296 = vpack.c.b16 %v3266, %v3264
        %v3297 = vpack.c.b16 %v3269, %v3267
        %v3298 = vpack.c.b16 %v3270, %v3268
        %v3299 = vpack.c.b16 %v3273, %v3271
        %v3300 = vpack.c.b16 %v3274, %v3272
        %v3301 = vpack.c.b16 %v3277, %v3275
        %v3302 = vpack.c.b16 %v3278, %v3276
        %v3303 = vpack.c.b16 %v3281, %v3279
        %v3304 = vpack.c.b16 %v3282, %v3280
        %v3305 = vpack.c.b16 %v3285, %v3283
        %v3306 = vpack.c.b16 %v3286, %v3284
        %v3307 = vpack.c.b16 %v3289, %v3287
        %v3308 = vpack.c.b16 %v3290, %v3288
        %v3309 = vpack.c.b16 %v3293, %v3291
        %v3310 = vpack.c.b16 %v3294, %v3292
        %3327 = vmatprep.subr.bf16.mxu0 %v3296
        %3328 = vmatpush1.bf16.msra.mxu0 %v3295
        %3329 = vmatprep.subr.bf16.mxu0 %v3298
        %3330 = vmatpush1.bf16.msra.mxu0 %v3297
        %3331 = vmatprep.subr.bf16.mxu0 %v3300
        %3332 = vmatpush1.bf16.msra.mxu0 %v3299
        %3333 = vmatprep.subr.bf16.mxu0 %v3302
        %3334 = vmatpush1.bf16.msra.mxu0 %v3301
        %3335 = vmatprep.subr.bf16.mxu0 %v3304
        %3336 = vmatpush1.bf16.msra.mxu0 %v3303
        %3337 = vmatprep.subr.bf16.mxu0 %v3306
        %3338 = vmatpush1.bf16.msra.mxu0 %v3305
        %3339 = vmatprep.subr.bf16.mxu0 %v3308
        %3340 = vmatpush1.bf16.msra.mxu0 %v3307
        %3341 = vmatprep.subr.bf16.mxu0 %v3310
        %3342 = vmatpush1.bf16.msra.mxu0 %v3309
        %3343 = vmatprep.subr.bf16.mxu0 0
        %3344 = vmatpush1.bf16.msra.mxu0 0
        %3345 = vmatprep.subr.bf16.mxu0 0
        %3346 = vmatpush1.bf16.msra.mxu0 0
        %3347 = vmatprep.subr.bf16.mxu0 0
        %3348 = vmatpush1.bf16.msra.mxu0 0
        %3349 = vmatprep.subr.bf16.mxu0 0
        %3350 = vmatpush1.bf16.msra.mxu0 0
        %3351 = vmatprep.subr.bf16.mxu0 0
        %3352 = vmatpush1.bf16.msra.mxu0 0
        %3353 = vmatprep.subr.bf16.mxu0 0
        %3354 = vmatpush1.bf16.msra.mxu0 0
        %3355 = vmatprep.subr.bf16.mxu0 0
        %3356 = vmatpush1.bf16.msra.mxu0 0
        %3357 = vmatprep.subr.bf16.mxu0 0
        %3358 = vmatpush1.bf16.msra.mxu0 0
        %3359 = vmatprep.mubr.bf16.mxu0 0
        %3360 = vmatmul.mubr.bf16.gmra.mrb[0].mxu0 %v3215
        %v3361 = vpop.f32.mrb[0].mxu0
        %v3362 = vadd.f32 %v3240, %v3361
        %v3363 = vpop.f32.mrb[0].mxu0
        %v3364 = vadd.f32 %v3244, %v3363
        %v3365 = vpop.f32.mrb[0].mxu0
        %v3366 = vadd.f32 %v3240, %v3365
        %v3367 = vpop.f32.mrb[0].mxu0
        %v3368 = vadd.f32 %v3244, %v3367
        %3369 = vmatprep.mubr.bf16.mxu0 0
        %3370 = vmatmul.mubr.bf16.gmra.mrb[0].mxu0 %v3216
        %v3371 = vpop.f32.mrb[0].mxu0
        %v3372 = vadd.f32 %v3240, %v3371
        %v3373 = vpop.f32.mrb[0].mxu0
        %v3374 = vadd.f32 %v3244, %v3373
        %v3375 = vpop.f32.mrb[0].mxu0
        %v3376 = vadd.f32 %v3240, %v3375
        %v3377 = vpop.f32.mrb[0].mxu0
        %v3378 = vadd.f32 %v3244, %v3377
        %3379 = vmatprep.mubr.bf16.mxu0 0
        %3380 = vmatmul.mubr.bf16.gmra.mrb[0].mxu0 %v3217
        %v3381 = vpop.f32.mrb[0].mxu0
        %v3382 = vadd.f32 %v3240, %v3381
        %v3383 = vpop.f32.mrb[0].mxu0
        %v3384 = vadd.f32 %v3244, %v3383
        %v3385 = vpop.f32.mrb[0].mxu0
        %v3386 = vadd.f32 %v3240, %v3385
        %v3387 = vpop.f32.mrb[0].mxu0
        %v3388 = vadd.f32 %v3244, %v3387
        %3389 = vmatprep.mubr.bf16.mxu0 0
        %3390 = vmatmul.mubr.bf16.gmra.mrb[0].mxu0 %v3218
        %v3391 = vpop.f32.mrb[0].mxu0
        %v3392 = vadd.f32 %v3240, %v3391
        %v3393 = vpop.f32.mrb[0].mxu0
        %v3394 = vadd.f32 %v3244, %v3393
        %v3395 = vpop.f32.mrb[0].mxu0
        %v3396 = vadd.f32 %v3240, %v3395
        %v3397 = vpop.f32.mrb[0].mxu0
        %v3398 = vadd.f32 %v3244, %v3397
        %3399 = vdwg.mxu0
        %v3400 = vmul.f32 %v3362, 0.5
        %v3401 = vmul.f32 %v3364, 0.5
        %v3402 = vmul.f32 %v3366, 0.5
        %v3403 = vmul.f32 %v3368, 0.5
        %v3404 = vmul.f32 %v3372, 0.5
        %v3405 = vmul.f32 %v3374, 0.5
        %v3406 = vmul.f32 %v3376, 0.5
        %v3407 = vmul.f32 %v3378, 0.5
        %v3408 = vmul.f32 %v3382, 0.5
        %v3409 = vmul.f32 %v3384, 0.5
        %v3410 = vmul.f32 %v3386, 0.5
        %v3411 = vmul.f32 %v3388, 0.5
        %v3412 = vmul.f32 %v3392, 0.5
        %v3413 = vmul.f32 %v3394, 0.5
        %v3414 = vmul.f32 %v3396, 0.5
        %v3415 = vmul.f32 %v3398, 0.5
        %v3416 = vmul.f32 %v3362, 0.044715
        %v3417 = vmul.f32 %v3364, 0.044715
        %v3418 = vmul.f32 %v3366, 0.044715
        %v3419 = vmul.f32 %v3368, 0.044715
        %v3420 = vmul.f32 %v3372, 0.044715
        %v3421 = vmul.f32 %v3374, 0.044715
        %v3422 = vmul.f32 %v3376, 0.044715
        %v3423 = vmul.f32 %v3378, 0.044715
        %v3424 = vmul.f32 %v3382, 0.044715
        %v3425 = vmul.f32 %v3384, 0.044715
        %v3426 = vmul.f32 %v3386, 0.044715
        %v3427 = vmul.f32 %v3388, 0.044715
        %v3428 = vmul.f32 %v3392, 0.044715
        %v3429 = vmul.f32 %v3394, 0.044715
        %v3430 = vmul.f32 %v3396, 0.044715
        %v3431 = vmul.f32 %v3398, 0.044715
        %v3432 = vmul.f32 %v3416, %v3362
        %v3433 = vmul.f32 %v3417, %v3364
        %v3434 = vmul.f32 %v3418, %v3366
        %v3435 = vmul.f32 %v3419, %v3368
        %v3436 = vmul.f32 %v3420, %v3372
        %v3437 = vmul.f32 %v3421, %v3374
        %v3438 = vmul.f32 %v3422, %v3376
        %v3439 = vmul.f32 %v3423, %v3378
        %v3440 = vmul.f32 %v3424, %v3382
        %v3441 = vmul.f32 %v3425, %v3384
        %v3442 = vmul.f32 %v3426, %v3386
        %v3443 = vmul.f32 %v3427, %v3388
        %v3444 = vmul.f32 %v3428, %v3392
        %v3445 = vmul.f32 %v3429, %v3394
        %v3446 = vmul.f32 %v3430, %v3396
        %v3447 = vmul.f32 %v3431, %v3398
        %v3448 = vmul.f32 %v3432, %v3362
        %v3449 = vmul.f32 %v3433, %v3364
        %v3450 = vmul.f32 %v3434, %v3366
        %v3451 = vmul.f32 %v3435, %v3368
        %v3452 = vmul.f32 %v3436, %v3372
        %v3453 = vmul.f32 %v3437, %v3374
        %v3454 = vmul.f32 %v3438, %v3376
        %v3455 = vmul.f32 %v3439, %v3378
        %v3456 = vmul.f32 %v3440, %v3382
        %v3457 = vmul.f32 %v3441, %v3384
        %v3458 = vmul.f32 %v3442, %v3386
        %v3459 = vmul.f32 %v3443, %v3388
        %v3460 = vmul.f32 %v3444, %v3392
        %v3461 = vmul.f32 %v3445, %v3394
        %v3462 = vmul.f32 %v3446, %v3396
        %v3463 = vmul.f32 %v3447, %v3398
        %v3464 = vadd.f32 %v3362, %v3448
        %v3465 = vadd.f32 %v3364, %v3449
        %v3466 = vadd.f32 %v3366, %v3450
        %v3467 = vadd.f32 %v3368, %v3451
        %v3468 = vadd.f32 %v3372, %v3452
        %v3469 = vadd.f32 %v3374, %v3453
        %v3470 = vadd.f32 %v3376, %v3454
        %v3471 = vadd.f32 %v3378, %v3455
        %v3472 = vadd.f32 %v3382, %v3456
        %v3473 = vadd.f32 %v3384, %v3457
        %v3474 = vadd.f32 %v3386, %v3458
        %v3475 = vadd.f32 %v3388, %v3459
        %v3476 = vadd.f32 %v3392, %v3460
        %v3477 = vadd.f32 %v3394, %v3461
        %v3478 = vadd.f32 %v3396, %v3462
        %v3479 = vadd.f32 %v3398, %v3463
        %v3480 = vmul.f32 %v3464, 0.7978846
        %v3481 = vmul.f32 %v3465, 0.7978846
        %v3482 = vmul.f32 %v3466, 0.7978846
        %v3483 = vmul.f32 %v3467, 0.7978846
        %v3484 = vmul.f32 %v3468, 0.7978846
        %v3485 = vmul.f32 %v3469, 0.7978846
        %v3486 = vmul.f32 %v3470, 0.7978846
        %v3487 = vmul.f32 %v3471, 0.7978846
        %v3488 = vmul.f32 %v3472, 0.7978846
        %v3489 = vmul.f32 %v3473, 0.7978846
        %v3490 = vmul.f32 %v3474, 0.7978846
        %v3491 = vmul.f32 %v3475, 0.7978846
        %v3492 = vmul.f32 %v3476, 0.7978846
        %v3493 = vmul.f32 %v3477, 0.7978846
        %v3494 = vmul.f32 %v3478, 0.7978846
        %v3495 = vmul.f32 %v3479, 0.7978846
        %v3496 = vtanh.pop %v3480
        %v3497 = vtanh.pop %v3481
        %v3498 = vtanh.pop %v3482
        %v3499 = vtanh.pop %v3483
        %v3500 = vtanh.pop %v3484
        %v3501 = vtanh.pop %v3485
        %v3502 = vtanh.pop %v3486
        %v3503 = vtanh.pop %v3487
        %v3504 = vtanh.pop %v3488
        %v3505 = vtanh.pop %v3489
        %v3506 = vtanh.pop %v3490
        %v3507 = vtanh.pop %v3491
        %v3508 = vtanh.pop %v3492
        %v3509 = vtanh.pop %v3493
        %v3510 = vtanh.pop %v3494
        %v3511 = vtanh.pop %v3495
        %v3512 = vadd.f32 %v3496, 1.0
        %v3513 = vadd.f32 %v3497, 1.0
        %v3514 = vadd.f32 %v3498, 1.0
        %v3515 = vadd.f32 %v3499, 1.0
        %v3516 = vadd.f32 %v3500, 1.0
        %v3517 = vadd.f32 %v3501, 1.0
        %v3518 = vadd.f32 %v3502, 1.0
        %v3519 = vadd.f32 %v3503, 1.0
        %v3520 = vadd.f32 %v3504, 1.0
        %v3521 = vadd.f32 %v3505, 1.0
        %v3522 = vadd.f32 %v3506, 1.0
        %v3523 = vadd.f32 %v3507, 1.0
        %v3524 = vadd.f32 %v3508, 1.0
        %v3525 = vadd.f32 %v3509, 1.0
        %v3526 = vadd.f32 %v3510, 1.0
        %v3527 = vadd.f32 %v3511, 1.0
        %v3528 = vmul.f32 %v3400, %v3512
        %v3529 = vmul.f32 %v3401, %v3513
        %v3530 = vmul.f32 %v3402, %v3514
        %v3531 = vmul.f32 %v3403, %v3515
        %v3532 = vmul.f32 %v3404, %v3516
        %v3533 = vmul.f32 %v3405, %v3517
        %v3534 = vmul.f32 %v3406, %v3518
        %v3535 = vmul.f32 %v3407, %v3519
        %v3536 = vmul.f32 %v3408, %v3520
        %v3537 = vmul.f32 %v3409, %v3521
        %v3538 = vmul.f32 %v3410, %v3522
        %v3539 = vmul.f32 %v3411, %v3523
        %v3540 = vmul.f32 %v3412, %v3524
        %v3541 = vmul.f32 %v3413, %v3525
        %v3542 = vmul.f32 %v3414, %v3526
        %v3543 = vmul.f32 %v3415, %v3527
        %v3544 = vpack.c.bf16 %v3530, %v3528
        %v3545 = vpack.c.bf16 %v3531, %v3529
        %v3546 = vpack.c.bf16 %v3534, %v3532
        %v3547 = vpack.c.bf16 %v3535, %v3533
        %v3548 = vpack.c.bf16 %v3538, %v3536
        %v3549 = vpack.c.bf16 %v3539, %v3537
        %v3550 = vpack.c.bf16 %v3542, %v3540
        %v3551 = vpack.c.bf16 %v3543, %v3541
        %v3552 = vld [vmem:[#allocation26] sm:$0xf]
        %v3553 = vld [vmem:[#allocation26 + $0x4] sm:$0xf]
        %v3554 = vld [vmem:[#allocation26 + $0x8] sm:$0xf]
        %v3555 = vld [vmem:[#allocation26 + $0xc] sm:$0xf]
        %v3556 = vld [vmem:[#allocation26 + $0x10] sm:$0xf]
        %v3557 = vld [vmem:[#allocation26 + $0x14] sm:$0xf]
        %v3558 = vld [vmem:[#allocation26 + $0x18] sm:$0xf]
        %v3559 = vld [vmem:[#allocation26 + $0x1c] sm:$0xf]
        %v3560 = vld [vmem:[#allocation26 + $0x20] sm:$0xf]
        %v3561 = vld [vmem:[#allocation26 + $0x24] sm:$0xf]
        %v3562 = vld [vmem:[#allocation26 + $0x28] sm:$0xf]
        %v3563 = vld [vmem:[#allocation26 + $0x2c] sm:$0xf]
        %v3564 = vld [vmem:[#allocation26 + $0x30] sm:$0xf]
        %v3565 = vld [vmem:[#allocation26 + $0x34] sm:$0xf]
        %v3566 = vld [vmem:[#allocation26 + $0x38] sm:$0xf]
        %v3567 = vld [vmem:[#allocation26 + $0x3c] sm:$0xf]
        %v3568 = vld [vmem:[#allocation26 + $0x40] sm:$0xf]
        %v3569 = vld [vmem:[#allocation26 + $0x44] sm:$0xf]
        %v3570 = vld [vmem:[#allocation26 + $0x48] sm:$0xf]
        %v3571 = vld [vmem:[#allocation26 + $0x4c] sm:$0xf]
        %v3572 = vld [vmem:[#allocation26 + $0x50] sm:$0xf]
        %v3573 = vld [vmem:[#allocation26 + $0x54] sm:$0xf]
        %v3574 = vld [vmem:[#allocation26 + $0x58] sm:$0xf]
        %v3575 = vld [vmem:[#allocation26 + $0x5c] sm:$0xf]
        %v3576 = vld [vmem:[#allocation26 + $0x60] sm:$0xf]
        %v3577 = vld [vmem:[#allocation26 + $0x64] sm:$0xf]
        %v3578 = vld [vmem:[#allocation26 + $0x68] sm:$0xf]
        %v3579 = vld [vmem:[#allocation26 + $0x6c] sm:$0xf]
        %v3580 = vld [vmem:[#allocation26 + $0x70] sm:$0xf]
        %v3581 = vld [vmem:[#allocation26 + $0x74] sm:$0xf]
        %v3582 = vld [vmem:[#allocation26 + $0x78] sm:$0xf]
        %v3583 = vld [vmem:[#allocation26 + $0x7c] sm:$0xf]
        %v3584 = vld [vmem:[#allocation28] sm:$0x1]
        %v3586 = vlaneseq
        %v3587 = vshrl.u32 %v3586, 7
        %v3588 = vsub.s32 0, %v3587
        %v3589 = vrot.slane %v3584, %v3588
        %v3623 = vunpack.c.l.b16 %v3552
        %v3624 = vunpack.c.l.b16 %v3553
        %v3625 = vunpack.c.l.b16 %v3554
        %v3626 = vunpack.c.l.b16 %v3555
        %v3627 = vunpack.c.l.b16 %v3556
        %v3628 = vunpack.c.l.b16 %v3557
        %v3629 = vunpack.c.l.b16 %v3558
        %v3630 = vunpack.c.l.b16 %v3559
        %v3631 = vunpack.c.l.b16 %v3560
        %v3632 = vunpack.c.l.b16 %v3561
        %v3633 = vunpack.c.l.b16 %v3562
        %v3634 = vunpack.c.l.b16 %v3563
        %v3635 = vunpack.c.l.b16 %v3564
        %v3636 = vunpack.c.l.b16 %v3565
        %v3637 = vunpack.c.l.b16 %v3566
        %v3638 = vunpack.c.l.b16 %v3567
        %v3639 = vunpack.c.l.b16 %v3568
        %v3640 = vunpack.c.l.b16 %v3569
        %v3641 = vunpack.c.l.b16 %v3570
        %v3642 = vunpack.c.l.b16 %v3571
        %v3643 = vunpack.c.l.b16 %v3572
        %v3644 = vunpack.c.l.b16 %v3573
        %v3645 = vunpack.c.l.b16 %v3574
        %v3646 = vunpack.c.l.b16 %v3575
        %v3647 = vunpack.c.l.b16 %v3576
        %v3648 = vunpack.c.l.b16 %v3577
        %v3649 = vunpack.c.l.b16 %v3578
        %v3650 = vunpack.c.l.b16 %v3579
        %v3651 = vunpack.c.l.b16 %v3580
        %v3652 = vunpack.c.l.b16 %v3581
        %v3653 = vunpack.c.l.b16 %v3582
        %v3654 = vunpack.c.l.b16 %v3583
        %v3655 = vpack.c.b16 %v3624, %v3623
        %v3656 = vpack.c.b16 %v3626, %v3625
        %v3657 = vpack.c.b16 %v3628, %v3627
        %v3658 = vpack.c.b16 %v3630, %v3629
        %v3659 = vpack.c.b16 %v3632, %v3631
        %v3660 = vpack.c.b16 %v3634, %v3633
        %v3661 = vpack.c.b16 %v3636, %v3635
        %v3662 = vpack.c.b16 %v3638, %v3637
        %v3663 = vpack.c.b16 %v3640, %v3639
        %v3664 = vpack.c.b16 %v3642, %v3641
        %v3665 = vpack.c.b16 %v3644, %v3643
        %v3666 = vpack.c.b16 %v3646, %v3645
        %v3667 = vpack.c.b16 %v3648, %v3647
        %v3668 = vpack.c.b16 %v3650, %v3649
        %v3669 = vpack.c.b16 %v3652, %v3651
        %v3670 = vpack.c.b16 %v3654, %v3653
        %3687 = vmatprep.subr.bf16.mxu0 0
        %3688 = vmatpush1.bf16.msra.mxu0 %v3655
        %3689 = vmatprep.subr.bf16.mxu0 0
        %3690 = vmatpush1.bf16.msra.mxu0 %v3656
        %3691 = vmatprep.subr.bf16.mxu0 0
        %3692 = vmatpush1.bf16.msra.mxu0 %v3657
        %3693 = vmatprep.subr.bf16.mxu0 0
        %3694 = vmatpush1.bf16.msra.mxu0 %v3658
        %3695 = vmatprep.subr.bf16.mxu0 0
        %3696 = vmatpush1.bf16.msra.mxu0 %v3659
        %3697 = vmatprep.subr.bf16.mxu0 0
        %3698 = vmatpush1.bf16.msra.mxu0 %v3660
        %3699 = vmatprep.subr.bf16.mxu0 0
        %3700 = vmatpush1.bf16.msra.mxu0 %v3661
        %3701 = vmatprep.subr.bf16.mxu0 0
        %3702 = vmatpush1.bf16.msra.mxu0 %v3662
        %3703 = vmatprep.subr.bf16.mxu0 0
        %3704 = vmatpush1.bf16.msra.mxu0 %v3663
        %3705 = vmatprep.subr.bf16.mxu0 0
        %3706 = vmatpush1.bf16.msra.mxu0 %v3664
        %3707 = vmatprep.subr.bf16.mxu0 0
        %3708 = vmatpush1.bf16.msra.mxu0 %v3665
        %3709 = vmatprep.subr.bf16.mxu0 0
        %3710 = vmatpush1.bf16.msra.mxu0 %v3666
        %3711 = vmatprep.subr.bf16.mxu0 0
        %3712 = vmatpush1.bf16.msra.mxu0 %v3667
        %3713 = vmatprep.subr.bf16.mxu0 0
        %3714 = vmatpush1.bf16.msra.mxu0 %v3668
        %3715 = vmatprep.subr.bf16.mxu0 0
        %3716 = vmatpush1.bf16.msra.mxu0 %v3669
        %3717 = vmatprep.subr.bf16.mxu0 0
        %3718 = vmatpush1.bf16.msra.mxu0 %v3670
        %3719 = vmatprep.mubr.bf16.mxu0 %v3545
        %3720 = vmatmul.mubr.bf16.gmra.mrb[0].mxu0 %v3544
        %v3721 = vpop.f32.mrb[0].mxu0
        %v3722 = vadd.f32 %v3589, %v3721
        %v3723 = vpop.f32.mrb[0].mxu0
        %v3724 = vpop.f32.mrb[0].mxu0
        %v3725 = vadd.f32 %v3589, %v3724
        %v3726 = vpop.f32.mrb[0].mxu0
        %3727 = vmatprep.mubr.bf16.mxu0 %v3547
        %3728 = vmatmul.mubr.bf16.gmra.mrb[0].mxu0 %v3546
        %v3729 = vpop.f32.mrb[0].mxu0
        %v3730 = vadd.f32 %v3589, %v3729
        %v3731 = vpop.f32.mrb[0].mxu0
        %v3732 = vpop.f32.mrb[0].mxu0
        %v3733 = vadd.f32 %v3589, %v3732
        %v3734 = vpop.f32.mrb[0].mxu0
        %3735 = vmatprep.mubr.bf16.mxu0 %v3549
        %3736 = vmatmul.mubr.bf16.gmra.mrb[0].mxu0 %v3548
        %v3737 = vpop.f32.mrb[0].mxu0
        %v3738 = vadd.f32 %v3589, %v3737
        %v3739 = vpop.f32.mrb[0].mxu0
        %v3740 = vpop.f32.mrb[0].mxu0
        %v3741 = vadd.f32 %v3589, %v3740
        %v3742 = vpop.f32.mrb[0].mxu0
        %3743 = vmatprep.mubr.bf16.mxu0 %v3551
        %3744 = vmatmul.mubr.bf16.gmra.mrb[0].mxu0 %v3550
        %v3745 = vpop.f32.mrb[0].mxu0
        %v3746 = vadd.f32 %v3589, %v3745
        %v3747 = vpop.f32.mrb[0].mxu0
        %v3748 = vpop.f32.mrb[0].mxu0
        %v3749 = vadd.f32 %v3589, %v3748
        %v3750 = vpop.f32.mrb[0].mxu0
        %3751 = vdwg.mxu0
        %v3752 = vadd.f32 %v3722, %v3089
        %v3753 = vadd.f32 %v3725, %v3090
        %v3754 = vadd.f32 %v3730, %v3091
        %v3755 = vadd.f32 %v3733, %v3092
        %v3756 = vadd.f32 %v3738, %v3093
        %v3757 = vadd.f32 %v3741, %v3094
        %v3758 = vadd.f32 %v3746, %v3095
        %v3759 = vadd.f32 %v3749, %v3096
        %3760 = vst [vmem:[%s840] sm:$0xff] %v3752
        %3761 = vst [vmem:[%s840 + $0x8] sm:$0xff] %v3753
        %3762 = vst [vmem:[%s840 + $0x10] sm:$0xff] %v3754
        %3763 = vst [vmem:[%s840 + $0x18] sm:$0xff] %v3755
        %3764 = vst [vmem:[%s840 + $0x20] sm:$0xff] %v3756
        %3765 = vst [vmem:[%s840 + $0x28] sm:$0xff] %v3757
        %3766 = vst [vmem:[%s840 + $0x30] sm:$0xff] %v3758
        %3767 = vst [vmem:[%s840 + $0x38] sm:$0xff] %v3759
        %s3768 = sand.u32 %s440, 1
        %s3769 = scalar_lea.sflag [#allocation7], %s3768
        %s3770 = sand.u32 %s440, 1
        %s3771 = smul.addr %s3770, 64
        %s3772 = scalar_lea.vmem [#allocation32], %s3771
        // Predicated region
        $region157: #{tpu_custom_call.1} parent=87 // pred_check
          %p3773 = pneg %p450
        $region158: #{tpu_custom_call.1} parent=87 // pred_check_branch
          %3775 = sbr.rel (%p3773) target = $region160
        $region159: #{tpu_custom_call.1} parent=87 // pred_region
          %s3776 = smul.u32 8, %s49
          %s3778 = ssub.s32 1024, 1024
          %3779 = vsyncadd %s3769, %s3778
          %s3780 = smul.addr %s48, 16
          %s3781 = sadd.s32 %s3776, %s3780
          %s3782 = smul.addr %s3781, 128
          %s3783 = scalar_lea.hbm %s17, %s3782
          %s3784 = sshll.u32 %s3772, 4
          %s3785 = int_to_ptr.vmem [resolvable:$true] %s3784
          %3790 = dma.vmem_to_hbm [thread:$0]  %s3785, 1024, %s3783, %s3769, 128, 128, 8
        $region160: #{tpu_custom_call.1} parent=87 // pred_fallthru
          _
      $region88: #{tpu_custom_call.1} parent=5 // pred_fallthru
        _
      %p3791 = scmp.le.s32.totalorder 2, %s39
      // Predicated region
      $region161: #{tpu_custom_call.1} parent=5 // pred_check
        %p3792 = pneg %p3791
      $region162: #{tpu_custom_call.1} parent=5 // pred_check_branch
        %3794 = sbr.rel (%p3792) target = $region164
      $region163: #{tpu_custom_call.1} parent=5 // pred_region
        %s3795 = ssub.s32 %s39, 2
        // Predicated region
        $region165: #{tpu_custom_call.1} parent=163 // pred_check
          %p3796 = pneg %p456
        $region166: #{tpu_custom_call.1} parent=163 // pred_check_branch
          %3798 = sbr.rel (%p3796) target = $region168
        $region167: #{tpu_custom_call.1} parent=163 // pred_region
          %s3799 = sand.u32 %s441, 1
          %s3800 = scalar_lea.sflag [#allocation7], %s3799
          %s3801 = sand.u32 %s441, 1
          %s3802 = smul.addr %s3801, 64
          %s3803 = scalar_lea.vmem [#allocation32], %s3802
          %3804 = dma.done %s3800, 1024
        $region168: #{tpu_custom_call.1} parent=163 // pred_fallthru
          _
      $region164: #{tpu_custom_call.1} parent=5 // pred_fallthru
        _
    $region6: #{tpu_custom_call.1} parent=1 // loop_footer
      %s43 = sadd.s32 1, %s39
    $region7: #{tpu_custom_call.1} parent=1 // loop_footer_branch
      %38 = sbr.rel target = $region3
    $region8: #{tpu_custom_call.1} parent=1 // loop_exit
      _
    %3805 = vsyncpa [#allocation6], 1
    %s3806 = scalar_lea.sflag [#allocation6], 1
    %3807 = vsyncpa %s3806, 1
    %3808 = vsyncpa [#allocation9], 1
    %s3809 = scalar_lea.sflag [#allocation9], 1
    %3810 = vsyncpa %s3809, 1
    %3811 = vsyncpa [#allocation12], 1
    %3812 = vsyncpa [#allocation15], 1
    %3813 = vsyncpa [#allocation18], 1
    %3814 = vsyncpa [#allocation21], 1
    %3815 = vsyncpa [#allocation24], 1
    %3816 = vsyncpa [#allocation27], 1
    %3817 = vsyncpa [#allocation30], 1
    %3818 = vsyncpa [#allocation7], 1
    %s3819 = scalar_lea.sflag [#allocation7], 1
    %3820 = vsyncpa %s3819, 1

</llo_original>
